<compile_context>
chip_gen: v5e
topology: v5e:2x2
jax: 0.10.0
libtpu: 0.0.40
codegen_flags: <defaults>
</compile_context>

<pallas_src>
import functools

import jax
import jax.numpy as jnp
import numpy as np
from jax import lax
from jax.experimental import pallas as pl
from jax.experimental.pallas import tpu as pltpu

V_TH = 1.0
BN_EPS = 1e-5


# ------------------------------ fused kernel --------------------------------

def _sew_bottleneck_kernel(x_ref, w1_ref, b1_ref, w2_ref, b2_ref,
                           w3_ref, b3_ref, *rest,
                           cnf, has_down, H, W, Wp, dil, base, cin):
    """Whole SEW Bottleneck for one image, all stages fused.

    x_ref  : (1, P, cin_p) bf16  zero-padded input pixels, flattened; channel
                                 `cin` carries the real-pixel mask.
    w*_ref : bf16 BN-folded conv weights; b*_ref: (1, C) f32 BN biases.
    o_ref  : (1, H*Wp, outc_p) f32 padded-width output rows (wrapper crops).
    """
    if has_down:
        wd_ref, bd_ref, o_ref = rest
    else:
        (o_ref,) = rest

    L = H * Wp                      # output rows (padded-width layout)
    R = (H + 2 * dil) * Wp          # rows spanned by the kh windows

    xe = x_ref[0]                                    # (P, cin_p) bf16
    mcol = xe[:, cin:cin + 1].astype(jnp.float32)    # (P, 1) real-pixel mask

    # ---- conv1 (1x1) + bn1 + sn1 over every padded pixel; the mask keeps the
    # conv2 zero-padding ring (and the extra alignment pad) at exactly 0.
    pre1 = (jnp.dot(xe, w1_ref[...], preferred_element_type=jnp.float32)
            + b1_ref[...])
    s1 = (pre1 >= V_TH).astype(jnp.float32) * mcol   # (P, width_p) 0/1

    # ---- conv2 (3x3, padding=dil, dilation=dil) + bn2 + sn2.
    # im2col the 3 kw taps into the lane axis; the two kw != 1 shifts are the
    # only sublane-misaligned copies in the kernel (done once, on f32).
    shifts = [lax.slice_in_dim(s1, base + (kw - 1) * dil,
                               base + (kw - 1) * dil + R, axis=0)
              for kw in range(3)]                    # 3 x (R, width_p) f32
    acc = None
    for kh in range(3):                              # unrolled at trace time
        start = dil * kh * Wp                        # multiple of 8 -> aligned
        blk = jnp.concatenate(
            [lax.slice_in_dim(sh, start, start + L, axis=0) for sh in shifts],
            axis=1).astype(jnp.bfloat16)             # (L, 3*width_p) bf16
        d = jnp.dot(blk, w2_ref[kh], preferred_element_type=jnp.float32)
        acc = d if acc is None else acc + d          # sum-of-dots (MRB-friendly)
    s2 = ((acc + b2_ref[...]) >= V_TH).astype(jnp.bfloat16)

    # ---- conv3 (1x1) + bn3 + sn3.
    pre3 = (jnp.dot(s2, w3_ref[...], preferred_element_type=jnp.float32)
            + b3_ref[...])
    s3 = (pre3 >= V_TH).astype(jnp.float32)

    # ---- identity path: aligned center window of the input.
    x_id = lax.slice_in_dim(xe, base + dil * Wp, base + dil * Wp + L, axis=0)
    if has_down:
        pred = (jnp.dot(x_id, wd_ref[...], preferred_element_type=jnp.float32)
                + bd_ref[...])
        idn = (pred >= V_TH).astype(jnp.float32)
    else:
        idn = x_id.astype(jnp.float32)               # requires Cin == Cout

    # ---- sew_function(out, identity, cnf)
    if cnf == 'ADD':
        out = s3 + idn
    elif cnf == 'AND':
        out = s3 * idn
    elif cnf == 'IAND':
        out = s3 * (1.0 - idn)
    else:
        raise NotImplementedError(cnf)

    o_ref[0] = out


# ------------------------------ wrapper --------------------------------------

def _round_up(v, m):
    return (v + m - 1) // m * m


def _fold_bn(w, bn):
    """Fold eval-mode BatchNorm into the conv weight -> (bf16 w*scale, f32 bias)."""
    gamma, beta, mean, var = bn
    scale = gamma / jnp.sqrt(var + BN_EPS)
    bias = (beta - mean * scale).reshape(1, -1).astype(jnp.float32)
    return (w * scale).astype(jnp.bfloat16), bias


def _pad2(w, rows, cols):
    return jnp.pad(w, ((0, rows - w.shape[0]), (0, cols - w.shape[1])))


def sew_bottleneck_forward(x_nchw, params, cnf='ADD', stride=1, dilation=1):
    """Forward pass of the SEW Bottleneck.  Input/output are NCHW (PyTorch)."""
    # TODO(synk): stride > 1 (strided conv3x3 + strided downsample) and
    #             groups > 1 (grouped conv2) are not implemented.
    assert stride == 1
    dil = dilation
    x = jnp.transpose(x_nchw, (0, 2, 3, 1)).astype(jnp.float32)      # -> NHWC
    N, H, W, Cin = x.shape

    # ---- fold eval-mode BN into bf16 conv weights / f32 biases.
    w1, b1 = _fold_bn(params['w1'], params['bn1'])
    w2, b2 = _fold_bn(params['w2'], params['bn2'])
    w3, b3 = _fold_bn(params['w3'], params['bn3'])
    width, outc = w1.shape[-1], w3.shape[-1]
    has_down = params.get('wd') is not None
    if not has_down:
        assert Cin == outc, "identity path without downsample needs Cin == Cout"

    # ---- lane-dense channel padding (multiples of 128).  One spare input
    # channel carries the real-pixel mask -> no separate (P,1) mask DMA.
    cin_p = _round_up(Cin + 1, 128)
    width_p = _round_up(width, 128)
    outc_p = _round_up(outc, 128)

    # ---- pixel geometry.  Wp is rounded to a sublane multiple so the three
    # conv2 kh windows and the identity window start on aligned rows.
    Hp = H + 2 * dil
    Wp = _round_up(W + 2 * dil, 8)
    base = _round_up(dil, 8)             # flat offset of padded pixel (0, 0)
    R = Hp * Wp                          # rows spanned by the kh windows
    L = H * Wp                           # output rows (padded-width layout)
    P = _round_up(base + R + dil, 8)     # total extended rows

    # ---- input prep: append mask channel, zero-pad spatially, flatten pixels,
    # pad channels to 128 lanes, cast to bf16 (0/1 spikes are exact in bf16).
    xa = jnp.concatenate([x, jnp.ones((N, H, W, 1), jnp.float32)], axis=-1)
    xp = jnp.pad(xa, ((0, 0), (dil, dil), (dil, Wp - W - dil), (0, 0)))
    xf = xp.reshape(N, R, Cin + 1)
    xe = jnp.pad(xf, ((0, 0), (base, P - base - R), (0, cin_p - (Cin + 1))))
    xe = xe.astype(jnp.bfloat16)

    # ---- pad weights/biases to the 128-lane channel sizes.
    w1p = _pad2(w1, cin_p, width_p)
    b1p = _pad2(b1, 1, width_p)
    w2p = jnp.pad(w2, ((0, 0), (0, 0),
                       (0, width_p - width), (0, width_p - width)))
    # per-kh im2col weight: stack the 3 kw taps along the contraction axis.
    w2cat = jnp.concatenate([w2p[:, 0], w2p[:, 1], w2p[:, 2]], axis=1)
    b2p = _pad2(b2, 1, width_p)
    w3p = _pad2(w3, width_p, outc_p)
    b3p = _pad2(b3, 1, outc_p)

    full2 = lambda s: pl.BlockSpec(s, lambda n: (0, 0))
    full3 = lambda s: pl.BlockSpec(s, lambda n: (0, 0, 0))
    in_specs = [
        pl.BlockSpec((1, P, cin_p), lambda n: (n, 0, 0)),          # x (per image)
        full2((cin_p, width_p)), full2((1, width_p)),              # conv1 / bn1
        full3((3, 3 * width_p, width_p)), full2((1, width_p)),     # conv2 / bn2
        full2((width_p, outc_p)), full2((1, outc_p)),              # conv3 / bn3
    ]
    args = [xe, w1p, b1p, w2cat, b2p, w3p, b3p]
    if has_down:
        wd, bd = _fold_bn(params['wd'], params['bnd'])
        args += [_pad2(wd, cin_p, outc_p), _pad2(bd, 1, outc_p)]
        in_specs += [full2((cin_p, outc_p)), full2((1, outc_p))]   # downsample

    kernel = functools.partial(_sew_bottleneck_kernel, cnf=cnf,
                               has_down=has_down, H=H, W=W, Wp=Wp, dil=dil,
                               base=base, cin=Cin)

    # TODO(synk): add a row-tiled (halo) grid axis for large H (v7x 64 MiB
    #             VMEM / v5e 16 MiB scoped default); per-image footprint at
    #             demo sizes is ~2 MB so a single step per image is fine.
    out_flat = pl.pallas_call(
        kernel,
        out_shape=jax.ShapeDtypeStruct((N, L, outc_p), jnp.float32),
        grid=(N,),
        in_specs=in_specs,
        out_specs=pl.BlockSpec((1, L, outc_p), lambda n: (n, 0, 0)),
        compiler_params=pltpu.CompilerParams(
            dimension_semantics=("parallel",),
            vmem_limit_bytes=32 * 1024 * 1024),
    )(*args)

    # TODO(synk): for chained blocks keep NHWC end-to-end; the crop + NCHW
    #             transpose below only exists to match the PyTorch interface.
    out = out_flat.reshape(N, H, Wp, outc_p)[:, :, dil:dil + W, :outc]
    return jnp.transpose(out, (0, 3, 1, 2))


# -------------------------- pure-JAX reference -------------------------------

def _ref_forward(x_nchw, params, cnf, dilation=1):
    """Reference using the same BN-folded, bf16-rounded weights as the kernel
    (f32 math, HIGHEST precision) so the hard Heaviside threshold is compared
    against identical weight values; spike activations are exact 0/1."""
    x = jnp.transpose(x_nchw, (0, 2, 3, 1)).astype(jnp.float32)
    dn = ('NHWC', 'HWIO', 'NHWC')
    hp = lax.Precision.HIGHEST

    def spike(v):
        return (v >= V_TH).astype(jnp.float32)

    def c1(y, wb):
        w, b = wb
        w = w.astype(jnp.float32)
        o = lax.conv_general_dilated(y, w.reshape(1, 1, *w.shape), (1, 1),
                                     [(0, 0), (0, 0)], dimension_numbers=dn,
                                     precision=hp)
        return o + b.reshape(1, 1, 1, -1)

    def c3(y, wb):
        w, b = wb
        w = w.astype(jnp.float32)
        o = lax.conv_general_dilated(y, w, (1, 1),
                                     [(dilation, dilation)] * 2,
                                     rhs_dilation=(dilation, dilation),
                                     dimension_numbers=dn, precision=hp)
        return o + b.reshape(1, 1, 1, -1)

    identity = x
    if params.get('wd') is not None:
        identity = spike(c1(x, _fold_bn(params['wd'], params['bnd'])))
    out = spike(c1(x, _fold_bn(params['w1'], params['bn1'])))
    out = spike(c3(out, _fold_bn(params['w2'], params['bn2'])))
    out = spike(c1(out, _fold_bn(params['w3'], params['bn3'])))
    if cnf == 'ADD':
        r = out + identity
    elif cnf == 'AND':
        r = out * identity
    elif cnf == 'IAND':
        r = out * (1.0 - identity)
    else:
        raise NotImplementedError(cnf)
    return jnp.transpose(r, (0, 3, 1, 2))


# ------------------------------ param init -----------------------------------

def _init_bn(key, c):
    k1, k2, k3, k4 = jax.random.split(key, 4)
    gamma = jax.random.uniform(k1, (c,), jnp.float32, 0.5, 1.5)
    beta = 0.1 * jax.random.normal(k2, (c,), jnp.float32)
    mean = 0.1 * jax.random.normal(k3, (c,), jnp.float32)
    var = jax.random.uniform(k4, (c,), jnp.float32, 0.5, 1.5)
    return (gamma, beta, mean, var)


def init_bottleneck_params(key, inplanes, planes, base_width=64, groups=1,
                           with_downsample=True):
    assert groups == 1   # TODO(synk): grouped conv2 not supported
    expansion = 4
    width = int(planes * (base_width / 64.0)) * groups
    outc = planes * expansion
    ks = jax.random.split(key, 8)
    p = {
        'w1': jax.random.normal(ks[0], (inplanes, width), jnp.float32) / np.sqrt(inplanes) * 2.0,
        'bn1': _init_bn(ks[1], width),
        'w2': jax.random.normal(ks[2], (3, 3, width, width), jnp.float32) / np.sqrt(9 * width) * 2.0,
        'bn2': _init_bn(ks[3], width),
        'w3': jax.random.normal(ks[4], (width, outc), jnp.float32) / np.sqrt(width) * 2.0,
        'bn3': _init_bn(ks[5], outc),
        'wd': None, 'bnd': None,
    }
    if with_downsample:
        p['wd'] = jax.random.normal(ks[6], (inplanes, outc), jnp.float32) / np.sqrt(inplanes) * 2.0
        p['bnd'] = _init_bn(ks[7], outc)
    return p


# --------------------------------- main ---------------------------------------

if __name__ == "__main__":
    key = jax.random.PRNGKey(0)
    kx, kp = jax.random.split(key)

    # Bottleneck(inplanes=16, planes=8, stride=1, downsample=conv1x1+BN, cnf='ADD')
    N, INPLANES, H, W = 2, 16, 16, 16
    PLANES, CNF = 8, 'ADD'

    # spiking inputs (0/1), NCHW like PyTorch
    x = jax.random.bernoulli(kx, 0.5, (N, INPLANES, H, W)).astype(jnp.float32)
    params = init_bottleneck_params(kp, INPLANES, PLANES, with_downsample=True)

    out = sew_bottleneck_forward(x, params, cnf=CNF)
    out = jax.block_until_ready(out)

    ref = jax.block_until_ready(_ref_forward(x, params, CNF))
    assert out.shape == (N, PLANES * 4, H, W), out.shape
    np.testing.assert_allclose(np.asarray(out), np.asarray(ref), atol=1e-5, rtol=0)

    print("KERNEL_OK")
</pallas_src>

<mosaic_0001>
module attributes {stable_mosaic.version = 11 : i64} {
  func.func @_sew_bottleneck_kernel(%arg0: i32, %arg1: memref<1x448x128xbf16, #tpu.memory_space<vmem>>, %arg2: memref<128x128xbf16, #tpu.memory_space<vmem>>, %arg3: memref<1x128xf32, #tpu.memory_space<vmem>>, %arg4: memref<3x384x128xbf16, #tpu.memory_space<vmem>>, %arg5: memref<1x128xf32, #tpu.memory_space<vmem>>, %arg6: memref<128x128xbf16, #tpu.memory_space<vmem>>, %arg7: memref<1x128xf32, #tpu.memory_space<vmem>>, %arg8: memref<128x128xbf16, #tpu.memory_space<vmem>>, %arg9: memref<1x128xf32, #tpu.memory_space<vmem>>, %arg10: memref<1x384x128xf32, #tpu.memory_space<vmem>>) attributes {dimension_semantics = [#tpu.dimension_semantics<parallel>], iteration_bounds = array<i64: 2>, scalar_prefetch = 0 : i64, scratch_operands = 0 : i64, tpu.core_type = #tpu.core_type<tc>, window_params = [{transform_indices = @transform_0, window_bounds = array<i64: 1, 448, 128>}, {pipeline_mode = #tpu.pipeline_mode<synchronous>, transform_indices = @transform_1, window_bounds = array<i64: 128, 128>}, {pipeline_mode = #tpu.pipeline_mode<synchronous>, transform_indices = @transform_2, window_bounds = array<i64: 1, 128>}, {pipeline_mode = #tpu.pipeline_mode<synchronous>, transform_indices = @transform_3, window_bounds = array<i64: 3, 384, 128>}, {pipeline_mode = #tpu.pipeline_mode<synchronous>, transform_indices = @transform_4, window_bounds = array<i64: 1, 128>}, {pipeline_mode = #tpu.pipeline_mode<synchronous>, transform_indices = @transform_5, window_bounds = array<i64: 128, 128>}, {pipeline_mode = #tpu.pipeline_mode<synchronous>, transform_indices = @transform_6, window_bounds = array<i64: 1, 128>}, {pipeline_mode = #tpu.pipeline_mode<synchronous>, transform_indices = @transform_7, window_bounds = array<i64: 128, 128>}, {pipeline_mode = #tpu.pipeline_mode<synchronous>, transform_indices = @transform_8, window_bounds = array<i64: 1, 128>}, {transform_indices = @transform_9, window_bounds = array<i64: 1, 384, 128>}]} {
    %c0 = arith.constant 0 : index
    %c0_0 = arith.constant 0 : index
    %c0_1 = arith.constant 0 : index
    %0 = vector.load %arg1[%c0, %c0_0, %c0_1] : memref<1x448x128xbf16, #tpu.memory_space<vmem>>, vector<1x448x128xbf16>
    %1 = vector.shape_cast %0 : vector<1x448x128xbf16> to vector<448x128xbf16>
    %2 = vector.extract_strided_slice %1 {offsets = [0, 16], sizes = [448, 1], strides = [1, 1]} : vector<448x128xbf16> to vector<448x1xbf16>
    %3 = arith.extf %2 : vector<448x1xbf16> to vector<448x1xf32>
    %c0_2 = arith.constant 0 : index
    %c0_3 = arith.constant 0 : index
    %4 = vector.load %arg2[%c0_2, %c0_3] : memref<128x128xbf16, #tpu.memory_space<vmem>>, vector<128x128xbf16>
    %cst = arith.constant dense<0.000000e+00> : vector<448x128xf32>
    %5 = tpu.matmul %1, %4, %cst {dimension_numbers = #tpu.dot_dimension_numbers<[1], [0], [0], [1], [0, 0, 1, 1], [], []>} : vector<448x128xbf16>, vector<128x128xbf16>, vector<448x128xf32> -> vector<448x128xf32>
    %c0_4 = arith.constant 0 : index
    %c0_5 = arith.constant 0 : index
    %6 = vector.load %arg3[%c0_4, %c0_5] : memref<1x128xf32, #tpu.memory_space<vmem>>, vector<1x128xf32>
    %7 = vector.broadcast %6 : vector<1x128xf32> to vector<448x128xf32>
    %8 = arith.addf %5, %7 : vector<448x128xf32>
    %cst_6 = arith.constant 1.000000e+00 : f32
    %9 = vector.broadcast %cst_6 : f32 to vector<448x128xf32>
    %10 = arith.cmpf oge, %8, %9 : vector<448x128xf32>
    %11 = arith.extui %10 : vector<448x128xi1> to vector<448x128xi32>
    %12 = arith.sitofp %11 : vector<448x128xi32> to vector<448x128xf32>
    %13 = vector.broadcast %3 : vector<448x1xf32> to vector<448x128xf32>
    %14 = arith.mulf %12, %13 : vector<448x128xf32>
    %15 = vector.extract_strided_slice %14 {offsets = [7, 0], sizes = [432, 128], strides = [1, 1]} : vector<448x128xf32> to vector<432x128xf32>
    %16 = vector.extract_strided_slice %14 {offsets = [8, 0], sizes = [432, 128], strides = [1, 1]} : vector<448x128xf32> to vector<432x128xf32>
    %17 = vector.extract_strided_slice %14 {offsets = [9, 0], sizes = [432, 128], strides = [1, 1]} : vector<448x128xf32> to vector<432x128xf32>
    %18 = vector.extract_strided_slice %15 {offsets = [0, 0], sizes = [384, 128], strides = [1, 1]} : vector<432x128xf32> to vector<384x128xf32>
    %19 = vector.extract_strided_slice %16 {offsets = [0, 0], sizes = [384, 128], strides = [1, 1]} : vector<432x128xf32> to vector<384x128xf32>
    %20 = vector.extract_strided_slice %17 {offsets = [0, 0], sizes = [384, 128], strides = [1, 1]} : vector<432x128xf32> to vector<384x128xf32>
    %21 = tpu.concatenate %18, %19, %20 in 1 : vector<384x128xf32>, vector<384x128xf32>, vector<384x128xf32> -> vector<384x384xf32>
    %22 = arith.truncf %21 : vector<384x384xf32> to vector<384x384xbf16>
    %c0_7 = arith.constant 0 : index
    %c0_8 = arith.constant 0 : index
    %c0_9 = arith.constant 0 : index
    %23 = vector.load %arg4[%c0_7, %c0_8, %c0_9] : memref<3x384x128xbf16, #tpu.memory_space<vmem>>, vector<1x384x128xbf16>
    %24 = vector.shape_cast %23 : vector<1x384x128xbf16> to vector<384x128xbf16>
    %cst_10 = arith.constant dense<0.000000e+00> : vector<384x128xf32>
    %25 = tpu.matmul %22, %24, %cst_10 {dimension_numbers = #tpu.dot_dimension_numbers<[1], [0], [0], [1], [0, 0, 1, 1], [], []>} : vector<384x384xbf16>, vector<384x128xbf16>, vector<384x128xf32> -> vector<384x128xf32>
    %26 = vector.extract_strided_slice %15 {offsets = [24, 0], sizes = [384, 128], strides = [1, 1]} : vector<432x128xf32> to vector<384x128xf32>
    %27 = vector.extract_strided_slice %16 {offsets = [24, 0], sizes = [384, 128], strides = [1, 1]} : vector<432x128xf32> to vector<384x128xf32>
    %28 = vector.extract_strided_slice %17 {offsets = [24, 0], sizes = [384, 128], strides = [1, 1]} : vector<432x128xf32> to vector<384x128xf32>
    %29 = tpu.concatenate %26, %27, %28 in 1 : vector<384x128xf32>, vector<384x128xf32>, vector<384x128xf32> -> vector<384x384xf32>
    %30 = arith.truncf %29 : vector<384x384xf32> to vector<384x384xbf16>
    %c1 = arith.constant 1 : index
    %c0_11 = arith.constant 0 : index
    %c0_12 = arith.constant 0 : index
    %31 = vector.load %arg4[%c1, %c0_11, %c0_12] : memref<3x384x128xbf16, #tpu.memory_space<vmem>>, vector<1x384x128xbf16>
    %32 = vector.shape_cast %31 : vector<1x384x128xbf16> to vector<384x128xbf16>
    %cst_13 = arith.constant dense<0.000000e+00> : vector<384x128xf32>
    %33 = tpu.matmul %30, %32, %cst_13 {dimension_numbers = #tpu.dot_dimension_numbers<[1], [0], [0], [1], [0, 0, 1, 1], [], []>} : vector<384x384xbf16>, vector<384x128xbf16>, vector<384x128xf32> -> vector<384x128xf32>
    %34 = arith.addf %25, %33 : vector<384x128xf32>
    %35 = vector.extract_strided_slice %15 {offsets = [48, 0], sizes = [384, 128], strides = [1, 1]} : vector<432x128xf32> to vector<384x128xf32>
    %36 = vector.extract_strided_slice %16 {offsets = [48, 0], sizes = [384, 128], strides = [1, 1]} : vector<432x128xf32> to vector<384x128xf32>
    %37 = vector.extract_strided_slice %17 {offsets = [48, 0], sizes = [384, 128], strides = [1, 1]} : vector<432x128xf32> to vector<384x128xf32>
    %38 = tpu.concatenate %35, %36, %37 in 1 : vector<384x128xf32>, vector<384x128xf32>, vector<384x128xf32> -> vector<384x384xf32>
    %39 = arith.truncf %38 : vector<384x384xf32> to vector<384x384xbf16>
    %c2 = arith.constant 2 : index
    %c0_14 = arith.constant 0 : index
    %c0_15 = arith.constant 0 : index
    %40 = vector.load %arg4[%c2, %c0_14, %c0_15] : memref<3x384x128xbf16, #tpu.memory_space<vmem>>, vector<1x384x128xbf16>
    %41 = vector.shape_cast %40 : vector<1x384x128xbf16> to vector<384x128xbf16>
    %cst_16 = arith.constant dense<0.000000e+00> : vector<384x128xf32>
    %42 = tpu.matmul %39, %41, %cst_16 {dimension_numbers = #tpu.dot_dimension_numbers<[1], [0], [0], [1], [0, 0, 1, 1], [], []>} : vector<384x384xbf16>, vector<384x128xbf16>, vector<384x128xf32> -> vector<384x128xf32>
    %43 = arith.addf %34, %42 : vector<384x128xf32>
    %c0_17 = arith.constant 0 : index
    %c0_18 = arith.constant 0 : index
    %44 = vector.load %arg5[%c0_17, %c0_18] : memref<1x128xf32, #tpu.memory_space<vmem>>, vector<1x128xf32>
    %45 = vector.broadcast %44 : vector<1x128xf32> to vector<384x128xf32>
    %46 = arith.addf %43, %45 : vector<384x128xf32>
    %cst_19 = arith.constant 1.000000e+00 : f32
    %47 = vector.broadcast %cst_19 : f32 to vector<384x128xf32>
    %48 = arith.cmpf oge, %46, %47 : vector<384x128xf32>
    %49 = arith.extui %48 : vector<384x128xi1> to vector<384x128xi32>
    %50 = arith.sitofp %49 : vector<384x128xi32> to vector<384x128xf32>
    %51 = arith.truncf %50 : vector<384x128xf32> to vector<384x128xbf16>
    %c0_20 = arith.constant 0 : index
    %c0_21 = arith.constant 0 : index
    %52 = vector.load %arg6[%c0_20, %c0_21] : memref<128x128xbf16, #tpu.memory_space<vmem>>, vector<128x128xbf16>
    %cst_22 = arith.constant dense<0.000000e+00> : vector<384x128xf32>
    %53 = tpu.matmul %51, %52, %cst_22 {dimension_numbers = #tpu.dot_dimension_numbers<[1], [0], [0], [1], [0, 0, 1, 1], [], []>} : vector<384x128xbf16>, vector<128x128xbf16>, vector<384x128xf32> -> vector<384x128xf32>
    %c0_23 = arith.constant 0 : index
    %c0_24 = arith.constant 0 : index
    %54 = vector.load %arg7[%c0_23, %c0_24] : memref<1x128xf32, #tpu.memory_space<vmem>>, vector<1x128xf32>
    %55 = vector.broadcast %54 : vector<1x128xf32> to vector<384x128xf32>
    %56 = arith.addf %53, %55 : vector<384x128xf32>
    %cst_25 = arith.constant 1.000000e+00 : f32
    %57 = vector.broadcast %cst_25 : f32 to vector<384x128xf32>
    %58 = arith.cmpf oge, %56, %57 : vector<384x128xf32>
    %59 = arith.extui %58 : vector<384x128xi1> to vector<384x128xi32>
    %60 = arith.sitofp %59 : vector<384x128xi32> to vector<384x128xf32>
    %61 = vector.extract_strided_slice %1 {offsets = [32, 0], sizes = [384, 128], strides = [1, 1]} : vector<448x128xbf16> to vector<384x128xbf16>
    %c0_26 = arith.constant 0 : index
    %c0_27 = arith.constant 0 : index
    %62 = vector.load %arg8[%c0_26, %c0_27] : memref<128x128xbf16, #tpu.memory_space<vmem>>, vector<128x128xbf16>
    %cst_28 = arith.constant dense<0.000000e+00> : vector<384x128xf32>
    %63 = tpu.matmul %61, %62, %cst_28 {dimension_numbers = #tpu.dot_dimension_numbers<[1], [0], [0], [1], [0, 0, 1, 1], [], []>} : vector<384x128xbf16>, vector<128x128xbf16>, vector<384x128xf32> -> vector<384x128xf32>
    %c0_29 = arith.constant 0 : index
    %c0_30 = arith.constant 0 : index
    %64 = vector.load %arg9[%c0_29, %c0_30] : memref<1x128xf32, #tpu.memory_space<vmem>>, vector<1x128xf32>
    %65 = vector.broadcast %64 : vector<1x128xf32> to vector<384x128xf32>
    %66 = arith.addf %63, %65 : vector<384x128xf32>
    %cst_31 = arith.constant 1.000000e+00 : f32
    %67 = vector.broadcast %cst_31 : f32 to vector<384x128xf32>
    %68 = arith.cmpf oge, %66, %67 : vector<384x128xf32>
    %69 = arith.extui %68 : vector<384x128xi1> to vector<384x128xi32>
    %70 = arith.sitofp %69 : vector<384x128xi32> to vector<384x128xf32>
    %71 = arith.addf %60, %70 : vector<384x128xf32>
    %c0_32 = arith.constant 0 : index
    %c0_33 = arith.constant 0 : index
    %c0_34 = arith.constant 0 : index
    %72 = vector.load %arg10[%c0_32, %c0_33, %c0_34] : memref<1x384x128xf32, #tpu.memory_space<vmem>>, vector<1x384x128xf32>
    %73 = vector.shape_cast %72 : vector<1x384x128xf32> to vector<384x128xf32>
    %74 = vector.shape_cast %71 : vector<384x128xf32> to vector<1x384x128xf32>
    tpu.vector_store %arg10[%c0_32, %c0_33, %c0_34], %74 {strides = array<i32>} : memref<1x384x128xf32, #tpu.memory_space<vmem>>, vector<1x384x128xf32>,
    return
  }
  func.func @transform_0(%arg0: i32) -> (i32, i32, i32) {
    %c0_i32 = arith.constant 0 : i32
    %c0_i32_0 = arith.constant 0 : i32
    %c0_i32_1 = arith.constant 0 : i32
    return %arg0, %c0_i32, %c0_i32_0 : i32, i32, i32
  }
  func.func @transform_1(%arg0: i32) -> (i32, i32) {
    %c0_i32 = arith.constant 0 : i32
    %c0_i32_0 = arith.constant 0 : i32
    %c0_i32_1 = arith.constant 0 : i32
    return %c0_i32, %c0_i32_0 : i32, i32
  }
  func.func @transform_2(%arg0: i32) -> (i32, i32) {
    %c0_i32 = arith.constant 0 : i32
    %c0_i32_0 = arith.constant 0 : i32
    %c0_i32_1 = arith.constant 0 : i32
    return %c0_i32, %c0_i32_0 : i32, i32
  }
  func.func @transform_3(%arg0: i32) -> (i32, i32, i32) {
    %c0_i32 = arith.constant 0 : i32
    %c0_i32_0 = arith.constant 0 : i32
    %c0_i32_1 = arith.constant 0 : i32
    %c0_i32_2 = arith.constant 0 : i32
    return %c0_i32, %c0_i32_0, %c0_i32_1 : i32, i32, i32
  }
  func.func @transform_4(%arg0: i32) -> (i32, i32) {
    %c0_i32 = arith.constant 0 : i32
    %c0_i32_0 = arith.constant 0 : i32
    %c0_i32_1 = arith.constant 0 : i32
    return %c0_i32, %c0_i32_0 : i32, i32
  }
  func.func @transform_5(%arg0: i32) -> (i32, i32) {
    %c0_i32 = arith.constant 0 : i32
    %c0_i32_0 = arith.constant 0 : i32
    %c0_i32_1 = arith.constant 0 : i32
    return %c0_i32, %c0_i32_0 : i32, i32
  }
  func.func @transform_6(%arg0: i32) -> (i32, i32) {
    %c0_i32 = arith.constant 0 : i32
    %c0_i32_0 = arith.constant 0 : i32
    %c0_i32_1 = arith.constant 0 : i32
    return %c0_i32, %c0_i32_0 : i32, i32
  }
  func.func @transform_7(%arg0: i32) -> (i32, i32) {
    %c0_i32 = arith.constant 0 : i32
    %c0_i32_0 = arith.constant 0 : i32
    %c0_i32_1 = arith.constant 0 : i32
    return %c0_i32, %c0_i32_0 : i32, i32
  }
  func.func @transform_8(%arg0: i32) -> (i32, i32) {
    %c0_i32 = arith.constant 0 : i32
    %c0_i32_0 = arith.constant 0 : i32
    %c0_i32_1 = arith.constant 0 : i32
    return %c0_i32, %c0_i32_0 : i32, i32
  }
  func.func @transform_9(%arg0: i32) -> (i32, i32, i32) {
    %c0_i32 = arith.constant 0 : i32
    %c0_i32_0 = arith.constant 0 : i32
    %c0_i32_1 = arith.constant 0 : i32
    return %arg0, %c0_i32, %c0_i32_0 : i32, i32, i32
  }
}

</mosaic_0001>

<llo_original>
// kernel: tpu_custom_call.1
$region0: #{tpu_custom_call.1}
  #allocation0 [shape = 'u32[]', space=smem, size = 0x4, offset = 0x4, fixed_abs, tag = 'smem constant byte address 0x4 - core index']
  #allocation1 [shape = 'u32[72,128]{1,0:T(1,128)}', space=vmem, size = 0x9000, scoped, tag = 'internal scratch']
  %s0 = inlined_call_operand.hbm [shape: bf16[2,448,128], index: 0, kind: input, shape index: {}]
  %s1 = inlined_call_operand.hbm [shape: bf16[128,128], index: 1, kind: input, shape index: {}]
  %s2 = inlined_call_operand.vmem [shape: f32[1,128], index: 2, kind: input, shape index: {}]
  %s3 = inlined_call_operand.hbm [shape: bf16[3,384,128], index: 3, kind: input, shape index: {}]
  %s4 = inlined_call_operand.vmem [shape: f32[1,128], index: 4, kind: input, shape index: {}]
  %s5 = inlined_call_operand.hbm [shape: bf16[128,128], index: 5, kind: input, shape index: {}]
  %s6 = inlined_call_operand.vmem [shape: f32[1,128], index: 6, kind: input, shape index: {}]
  %s7 = inlined_call_operand.hbm [shape: bf16[128,128], index: 7, kind: input, shape index: {}]
  %s8 = inlined_call_operand.vmem [shape: f32[1,128], index: 8, kind: input, shape index: {}]
  %s9 = inlined_call_operand.hbm [shape: f32[2,384,128], index: 9, kind: output, shape index: {}]
  %s10 = sld [smem:[#allocation0]]
  $region89: #{tpu_custom_call.1} parent=0
    _
  %s12 = ssub.s32 1, %s10
  %s13 = scalar_select 0, %s12, %s10
  $region1: #{tpu_custom_call.1} parent=0
    #allocation2 [shape = 'u8[229376]{0}', space=vmem, size = 0x38000, scoped, tag = 'input window, operand 0']
    #allocation3 [shape = 's32[2]{0}', space=sflag, size = 0x8, scoped, tag = 'scoped memory for tpu_custom_call.1']
    #allocation4 [shape = 's32[2]{0}', space=sflag, size = 0x8, scoped, tag = 'scoped memory for tpu_custom_call.1']
    #allocation5 [shape = 'u8[32768]{0}', space=vmem, size = 0x8000, scoped, tag = 'input window, operand 1, single buffered']
    #allocation6 [shape = 's32[1]{0}', space=sflag, size = 0x4, scoped, tag = 'scoped memory for tpu_custom_call.1']
    #allocation7 [shape = 'u8[294912]{0}', space=vmem, size = 0x48000, scoped, tag = 'input window, operand 3, single buffered']
    #allocation8 [shape = 'u8[32768]{0}', space=vmem, size = 0x8000, scoped, tag = 'input window, operand 5, single buffered']
    #allocation9 [shape = 's32[1]{0}', space=sflag, size = 0x4, scoped, tag = 'scoped memory for tpu_custom_call.1']
    #allocation10 [shape = 'u8[32768]{0}', space=vmem, size = 0x8000, scoped, tag = 'input window, operand 7, single buffered']
    #allocation11 [shape = 'u8[393216]{0}', space=vmem, size = 0x60000, scoped, tag = 'output window, operand 0']
    %14 = vsyncpa [#allocation3], 0
    %s15 = scalar_lea.sflag [#allocation3], 1
    %16 = vsyncpa %s15, 0
    %17 = vsyncpa [#allocation6], 0
    %18 = vsyncpa [#allocation9], 0
    %19 = vsyncpa [#allocation4], 0
    %s20 = scalar_lea.sflag [#allocation4], 1
    %21 = vsyncpa %s20, 0
    loop: start=0, step=1, limit=4
    $region2: #{tpu_custom_call.1} parent=1 // loop_pre_header
      _
    $region3: #{tpu_custom_call.1} parent=1 // loop_header
      %s23 = sphi 0, %s27
      %p24 = scmp.ge.s32.totalorder %s23, 4
      %s33 = sphi 0, %s35
      %s36 = sphi 0, %s33
      %s37 = sphi 0, %s36
      %s53 = sphi 0, %s37
      %s57 = sphi 0, %s57
      %s59 = sphi 0, %s57
      %s60 = sphi 0, %s59
      %s74 = sphi 0, %s60
      %s78 = sphi 0, %s78
      %s80 = sphi 0, %s78
      %s81 = sphi 0, %s80
      %s95 = sphi 0, %s81
      %s99 = sphi 0, %s99
      %s101 = sphi 0, %s99
      %s102 = sphi 0, %s101
      %s116 = sphi 0, %s102
      %s120 = sphi 0, %s120
      %s122 = sphi 0, %s120
      %s123 = sphi 0, %s122
      %s137 = sphi 0, %s123
      %s141 = sphi 0, %s141
      %s143 = sphi 0, %s141
      %s144 = sphi 0, %s143
      %s158 = sphi 0, %s144
      %s162 = sphi 0, %s162
      %s164 = sphi 0, %s162
      %s165 = sphi 0, %s164
      %s179 = sphi 0, %s165
      %s183 = sphi 0, %s183
      %s185 = sphi 0, %s183
      %s186 = sphi 0, %s185
      %s200 = sphi 0, %s186
      %s204 = sphi 0, %s204
      %s206 = sphi 0, %s204
      %s207 = sphi 0, %s206
      %s221 = sphi 0, %s207
      %s227 = sphi 0, %s229
      %s230 = sphi 0, %s227
      %s231 = sphi 0, %s230
      %s247 = sphi 0, %s231
    $region4: #{tpu_custom_call.1} parent=1 // loop_header_branch
      %26 = sbr.rel (%p24) target = $region8
    $region5: #{tpu_custom_call.1} parent=1 // loop_body
      %s28 = ssub.s32 %s23, 1
      %s29 = ssub.s32 %s23, 2
      %s30 = sadd.s32 %s23, 1
      %s31 = ssub.s32 %s23, %s30
      %p32 = scmp.eq.s32.totalorder %s31, 0
      %s34 = sadd.s32 %s33, 1
      %s35 = scalar_select %p32, %s33, %s34
      %p38 = pneg %p32
      %p39 = scmp.eq.s32.totalorder %s23, 1
      %p40 = por %p38, %p39
      %p41 = scmp.ne.s32.totalorder %s33, %s36
      %p42 = scmp.eq.s32.totalorder %s23, 0
      %p43 = por %p41, %p42
      %p44 = scmp.ne.s32.totalorder %s33, %s36
      %p45 = scmp.eq.s32.totalorder %s28, 1
      %p46 = por %p44, %p45
      %p47 = scmp.ne.s32.totalorder %s36, %s37
      %p48 = scmp.eq.s32.totalorder %s28, 0
      %p49 = por %p47, %p48
      %p50 = scmp.ne.s32.totalorder %s36, %s37
      %p51 = scmp.eq.s32.totalorder %s29, 1
      %p52 = por %p50, %p51
      %p54 = scmp.ne.s32.totalorder %s37, %s53
      %p55 = scmp.eq.s32.totalorder %s29, 0
      %p56 = por %p54, %p55
      %s58 = sadd.s32 %s57, 1
      %p61 = scmp.eq.s32.totalorder %s23, 1
      %p62 = scmp.ne.s32.totalorder %s57, %s59
      %p63 = scmp.eq.s32.totalorder %s23, 0
      %p64 = por %p62, %p63
      %p65 = scmp.ne.s32.totalorder %s57, %s59
      %p66 = scmp.eq.s32.totalorder %s28, 1
      %p67 = por %p65, %p66
      %p68 = scmp.ne.s32.totalorder %s59, %s60
      %p69 = scmp.eq.s32.totalorder %s28, 0
      %p70 = por %p68, %p69
      %p71 = scmp.ne.s32.totalorder %s59, %s60
      %p72 = scmp.eq.s32.totalorder %s29, 1
      %p73 = por %p71, %p72
      %p75 = scmp.ne.s32.totalorder %s60, %s74
      %p76 = scmp.eq.s32.totalorder %s29, 0
      %p77 = por %p75, %p76
      %s79 = sadd.s32 %s78, 1
      %p82 = scmp.eq.s32.totalorder %s23, 1
      %p83 = scmp.ne.s32.totalorder %s78, %s80
      %p84 = scmp.eq.s32.totalorder %s23, 0
      %p85 = por %p83, %p84
      %p86 = scmp.ne.s32.totalorder %s78, %s80
      %p87 = scmp.eq.s32.totalorder %s28, 1
      %p88 = por %p86, %p87
      %p89 = scmp.ne.s32.totalorder %s80, %s81
      %p90 = scmp.eq.s32.totalorder %s28, 0
      %p91 = por %p89, %p90
      %p92 = scmp.ne.s32.totalorder %s80, %s81
      %p93 = scmp.eq.s32.totalorder %s29, 1
      %p94 = por %p92, %p93
      %p96 = scmp.ne.s32.totalorder %s81, %s95
      %p97 = scmp.eq.s32.totalorder %s29, 0
      %p98 = por %p96, %p97
      %s100 = sadd.s32 %s99, 1
      %p103 = scmp.eq.s32.totalorder %s23, 1
      %p104 = scmp.ne.s32.totalorder %s99, %s101
      %p105 = scmp.eq.s32.totalorder %s23, 0
      %p106 = por %p104, %p105
      %p107 = scmp.ne.s32.totalorder %s99, %s101
      %p108 = scmp.eq.s32.totalorder %s28, 1
      %p109 = por %p107, %p108
      %p110 = scmp.ne.s32.totalorder %s101, %s102
      %p111 = scmp.eq.s32.totalorder %s28, 0
      %p112 = por %p110, %p111
      %p113 = scmp.ne.s32.totalorder %s101, %s102
      %p114 = scmp.eq.s32.totalorder %s29, 1
      %p115 = por %p113, %p114
      %p117 = scmp.ne.s32.totalorder %s102, %s116
      %p118 = scmp.eq.s32.totalorder %s29, 0
      %p119 = por %p117, %p118
      %s121 = sadd.s32 %s120, 1
      %p124 = scmp.eq.s32.totalorder %s23, 1
      %p125 = scmp.ne.s32.totalorder %s120, %s122
      %p126 = scmp.eq.s32.totalorder %s23, 0
      %p127 = por %p125, %p126
      %p128 = scmp.ne.s32.totalorder %s120, %s122
      %p129 = scmp.eq.s32.totalorder %s28, 1
      %p130 = por %p128, %p129
      %p131 = scmp.ne.s32.totalorder %s122, %s123
      %p132 = scmp.eq.s32.totalorder %s28, 0
      %p133 = por %p131, %p132
      %p134 = scmp.ne.s32.totalorder %s122, %s123
      %p135 = scmp.eq.s32.totalorder %s29, 1
      %p136 = por %p134, %p135
      %p138 = scmp.ne.s32.totalorder %s123, %s137
      %p139 = scmp.eq.s32.totalorder %s29, 0
      %p140 = por %p138, %p139
      %s142 = sadd.s32 %s141, 1
      %p145 = scmp.eq.s32.totalorder %s23, 1
      %p146 = scmp.ne.s32.totalorder %s141, %s143
      %p147 = scmp.eq.s32.totalorder %s23, 0
      %p148 = por %p146, %p147
      %p149 = scmp.ne.s32.totalorder %s141, %s143
      %p150 = scmp.eq.s32.totalorder %s28, 1
      %p151 = por %p149, %p150
      %p152 = scmp.ne.s32.totalorder %s143, %s144
      %p153 = scmp.eq.s32.totalorder %s28, 0
      %p154 = por %p152, %p153
      %p155 = scmp.ne.s32.totalorder %s143, %s144
      %p156 = scmp.eq.s32.totalorder %s29, 1
      %p157 = por %p155, %p156
      %p159 = scmp.ne.s32.totalorder %s144, %s158
      %p160 = scmp.eq.s32.totalorder %s29, 0
      %p161 = por %p159, %p160
      %s163 = sadd.s32 %s162, 1
      %p166 = scmp.eq.s32.totalorder %s23, 1
      %p167 = scmp.ne.s32.totalorder %s162, %s164
      %p168 = scmp.eq.s32.totalorder %s23, 0
      %p169 = por %p167, %p168
      %p170 = scmp.ne.s32.totalorder %s162, %s164
      %p171 = scmp.eq.s32.totalorder %s28, 1
      %p172 = por %p170, %p171
      %p173 = scmp.ne.s32.totalorder %s164, %s165
      %p174 = scmp.eq.s32.totalorder %s28, 0
      %p175 = por %p173, %p174
      %p176 = scmp.ne.s32.totalorder %s164, %s165
      %p177 = scmp.eq.s32.totalorder %s29, 1
      %p178 = por %p176, %p177
      %p180 = scmp.ne.s32.totalorder %s165, %s179
      %p181 = scmp.eq.s32.totalorder %s29, 0
      %p182 = por %p180, %p181
      %s184 = sadd.s32 %s183, 1
      %p187 = scmp.eq.s32.totalorder %s23, 1
      %p188 = scmp.ne.s32.totalorder %s183, %s185
      %p189 = scmp.eq.s32.totalorder %s23, 0
      %p190 = por %p188, %p189
      %p191 = scmp.ne.s32.totalorder %s183, %s185
      %p192 = scmp.eq.s32.totalorder %s28, 1
      %p193 = por %p191, %p192
      %p194 = scmp.ne.s32.totalorder %s185, %s186
      %p195 = scmp.eq.s32.totalorder %s28, 0
      %p196 = por %p194, %p195
      %p197 = scmp.ne.s32.totalorder %s185, %s186
      %p198 = scmp.eq.s32.totalorder %s29, 1
      %p199 = por %p197, %p198
      %p201 = scmp.ne.s32.totalorder %s186, %s200
      %p202 = scmp.eq.s32.totalorder %s29, 0
      %p203 = por %p201, %p202
      %s205 = sadd.s32 %s204, 1
      %p208 = scmp.eq.s32.totalorder %s23, 1
      %p209 = scmp.ne.s32.totalorder %s204, %s206
      %p210 = scmp.eq.s32.totalorder %s23, 0
      %p211 = por %p209, %p210
      %p212 = scmp.ne.s32.totalorder %s204, %s206
      %p213 = scmp.eq.s32.totalorder %s28, 1
      %p214 = por %p212, %p213
      %p215 = scmp.ne.s32.totalorder %s206, %s207
      %p216 = scmp.eq.s32.totalorder %s28, 0
      %p217 = por %p215, %p216
      %p218 = scmp.ne.s32.totalorder %s206, %s207
      %p219 = scmp.eq.s32.totalorder %s29, 1
      %p220 = por %p218, %p219
      %p222 = scmp.ne.s32.totalorder %s207, %s221
      %p223 = scmp.eq.s32.totalorder %s29, 0
      %p224 = por %p222, %p223
      %s225 = ssub.s32 %s23, %s30
      %p226 = scmp.eq.s32.totalorder %s225, 0
      %s228 = sadd.s32 %s227, 1
      %s229 = scalar_select %p226, %s227, %s228
      %p232 = pneg %p226
      %p233 = scmp.eq.s32.totalorder %s23, 1
      %p234 = por %p232, %p233
      %p235 = scmp.ne.s32.totalorder %s227, %s230
      %p236 = scmp.eq.s32.totalorder %s23, 0
      %p237 = por %p235, %p236
      %p238 = scmp.ne.s32.totalorder %s227, %s230
      %p239 = scmp.eq.s32.totalorder %s28, 1
      %p240 = por %p238, %p239
      %p241 = scmp.ne.s32.totalorder %s230, %s231
      %p242 = scmp.eq.s32.totalorder %s28, 0
      %p243 = por %p241, %p242
      %p244 = scmp.ne.s32.totalorder %s230, %s231
      %p245 = scmp.eq.s32.totalorder %s29, 1
      %p246 = por %p244, %p245
      %p248 = scmp.ne.s32.totalorder %s231, %s247
      %p249 = scmp.eq.s32.totalorder %s29, 0
      %p250 = por %p248, %p249
      %p251 = scmp.le.s32.totalorder 1, %s23
      %p252 = scmp.lt.s32.totalorder %s23, 3
      %p253 = pnand %p251, %p252
      %p254 = pneg %p253
      // Predicated region
      $region9: #{tpu_custom_call.1} parent=5 // pred_check
        _
      $region10: #{tpu_custom_call.1} parent=5 // pred_check_branch
        %256 = sbr.rel (%p253) target = $region12
      $region11: #{tpu_custom_call.1} parent=5 // pred_region
        %s257 = ssub.s32 %s23, 1
        // Predicated region
        $region13: #{tpu_custom_call.1} parent=11 // pred_check
          %p258 = pneg %p70
        $region14: #{tpu_custom_call.1} parent=11 // pred_check_branch
          %260 = sbr.rel (%p258) target = $region16
        $region15: #{tpu_custom_call.1} parent=11 // pred_region
          %262 = vsyncadd [#allocation6], 0
          %s263 = sshll.u32 %s1, 4
          %s264 = int_to_ptr.hbm [resolvable:$true] %s263
          %s265 = sshll.u32 [#allocation5], 4
          %s266 = int_to_ptr.vmem [resolvable:$true] %s265
          %271 = dma.hbm_to_vmem [thread:$0]  %s264, 1024, %s266, [#allocation6], 64, 64, 4
        $region16: #{tpu_custom_call.1} parent=11 // pred_fallthru
          _
        // Predicated region
        $region17: #{tpu_custom_call.1} parent=11 // pred_check
          %p272 = pneg %p91
        $region18: #{tpu_custom_call.1} parent=11 // pred_check_branch
          %274 = sbr.rel (%p272) target = $region20
        $region19: #{tpu_custom_call.1} parent=11 // pred_region
          _
        $region20: #{tpu_custom_call.1} parent=11 // pred_fallthru
          _
        // Predicated region
        $region21: #{tpu_custom_call.1} parent=11 // pred_check
          %p275 = pneg %p112
        $region22: #{tpu_custom_call.1} parent=11 // pred_check_branch
          %277 = sbr.rel (%p275) target = $region24
        $region23: #{tpu_custom_call.1} parent=11 // pred_region
          %279 = vsyncadd [#allocation6], 0
          %s280 = sshll.u32 %s3, 4
          %s281 = int_to_ptr.hbm [resolvable:$true] %s280
          %s282 = sshll.u32 [#allocation7], 4
          %s283 = int_to_ptr.vmem [resolvable:$true] %s282
          %288 = dma.hbm_to_vmem [thread:$0]  %s281, 9216, %s283, [#allocation6], 64, 64, 4
        $region24: #{tpu_custom_call.1} parent=11 // pred_fallthru
          _
        // Predicated region
        $region25: #{tpu_custom_call.1} parent=11 // pred_check
          %p289 = pneg %p133
        $region26: #{tpu_custom_call.1} parent=11 // pred_check_branch
          %291 = sbr.rel (%p289) target = $region28
        $region27: #{tpu_custom_call.1} parent=11 // pred_region
          _
        $region28: #{tpu_custom_call.1} parent=11 // pred_fallthru
          _
        // Predicated region
        $region29: #{tpu_custom_call.1} parent=11 // pred_check
          %p292 = pneg %p154
        $region30: #{tpu_custom_call.1} parent=11 // pred_check_branch
          %294 = sbr.rel (%p292) target = $region32
        $region31: #{tpu_custom_call.1} parent=11 // pred_region
          %296 = vsyncadd [#allocation9], 0
          %s297 = sshll.u32 %s5, 4
          %s298 = int_to_ptr.hbm [resolvable:$true] %s297
          %s299 = sshll.u32 [#allocation8], 4
          %s300 = int_to_ptr.vmem [resolvable:$true] %s299
          %305 = dma.hbm_to_vmem [thread:$0]  %s298, 1024, %s300, [#allocation9], 64, 64, 4
        $region32: #{tpu_custom_call.1} parent=11 // pred_fallthru
          _
        // Predicated region
        $region33: #{tpu_custom_call.1} parent=11 // pred_check
          %p306 = pneg %p175
        $region34: #{tpu_custom_call.1} parent=11 // pred_check_branch
          %308 = sbr.rel (%p306) target = $region36
        $region35: #{tpu_custom_call.1} parent=11 // pred_region
          _
        $region36: #{tpu_custom_call.1} parent=11 // pred_fallthru
          _
        // Predicated region
        $region37: #{tpu_custom_call.1} parent=11 // pred_check
          %p309 = pneg %p196
        $region38: #{tpu_custom_call.1} parent=11 // pred_check_branch
          %311 = sbr.rel (%p309) target = $region40
        $region39: #{tpu_custom_call.1} parent=11 // pred_region
          %313 = vsyncadd [#allocation9], 0
          %s314 = sshll.u32 %s7, 4
          %s315 = int_to_ptr.hbm [resolvable:$true] %s314
          %s316 = sshll.u32 [#allocation10], 4
          %s317 = int_to_ptr.vmem [resolvable:$true] %s316
          %322 = dma.hbm_to_vmem [thread:$0]  %s315, 1024, %s317, [#allocation9], 64, 64, 4
        $region40: #{tpu_custom_call.1} parent=11 // pred_fallthru
          _
        // Predicated region
        $region41: #{tpu_custom_call.1} parent=11 // pred_check
          %p323 = pneg %p217
        $region42: #{tpu_custom_call.1} parent=11 // pred_check_branch
          %325 = sbr.rel (%p323) target = $region44
        $region43: #{tpu_custom_call.1} parent=11 // pred_region
          _
        $region44: #{tpu_custom_call.1} parent=11 // pred_fallthru
          _
      $region12: #{tpu_custom_call.1} parent=5 // pred_fallthru
        _
      %p326 = scmp.lt.s32.totalorder %s23, 2
      // Predicated region
      $region45: #{tpu_custom_call.1} parent=5 // pred_check
        %p327 = pneg %p326
      $region46: #{tpu_custom_call.1} parent=5 // pred_check_branch
        %329 = sbr.rel (%p327) target = $region48
      $region47: #{tpu_custom_call.1} parent=5 // pred_region
        // Predicated region
        $region49: #{tpu_custom_call.1} parent=47 // pred_check
          %p330 = pneg %p43
        $region50: #{tpu_custom_call.1} parent=47 // pred_check_branch
          %332 = sbr.rel (%p330) target = $region52
        $region51: #{tpu_custom_call.1} parent=47 // pred_region
          %s333 = sand.u32 %s33, 1
          %s334 = scalar_lea.sflag [#allocation3], %s333
          %s335 = sand.u32 %s33, 1
          %s336 = smul.addr %s335, 224
          %s337 = scalar_lea.vmem [#allocation2], %s336
          %339 = vsyncadd %s334, 0
          %s340 = smul.addr %s23, 56
          %s341 = smul.addr %s340, 4
          %s342 = scalar_lea.hbm %s0, %s341
          %s343 = sshll.u32 %s342, 4
          %s344 = int_to_ptr.hbm [resolvable:$true] %s343
          %s345 = sshll.u32 %s337, 4
          %s346 = int_to_ptr.vmem [resolvable:$true] %s345
          %351 = dma.hbm_to_vmem [thread:$0]  %s344, 3584, %s346, %s334, 64, 64, 4
        $region52: #{tpu_custom_call.1} parent=47 // pred_fallthru
          _
      $region48: #{tpu_custom_call.1} parent=5 // pred_fallthru
        _
      %p352 = scmp.le.s32.totalorder 1, %s23
      %p353 = scmp.lt.s32.totalorder %s23, 3
      %p354 = pnand %p352, %p353
      %p355 = pneg %p354
      // Predicated region
      $region53: #{tpu_custom_call.1} parent=5 // pred_check
        _
      $region54: #{tpu_custom_call.1} parent=5 // pred_check_branch
        %357 = sbr.rel (%p354) target = $region56
      $region55: #{tpu_custom_call.1} parent=5 // pred_region
        %s358 = ssub.s32 %s23, 1
        %s359 = sand.u32 %s36, 1
        %s360 = scalar_lea.sflag [#allocation3], %s359
        %s361 = sand.u32 %s36, 1
        %s362 = smul.addr %s361, 224
        %s363 = scalar_lea.vmem [#allocation2], %s362
        // Predicated region
        $region57: #{tpu_custom_call.1} parent=55 // pred_check
          %p364 = pneg %p49
        $region58: #{tpu_custom_call.1} parent=55 // pred_check_branch
          %366 = sbr.rel (%p364) target = $region60
        $region59: #{tpu_custom_call.1} parent=55 // pred_region
          %368 = dma.done %s360, 3584
        $region60: #{tpu_custom_call.1} parent=55 // pred_fallthru
          _
        // Predicated region
        $region61: #{tpu_custom_call.1} parent=55 // pred_check
          %p369 = pneg %p70
        $region62: #{tpu_custom_call.1} parent=55 // pred_check_branch
          %371 = sbr.rel (%p369) target = $region64
        $region63: #{tpu_custom_call.1} parent=55 // pred_region
          %373 = dma.done [#allocation6], 1024
        $region64: #{tpu_custom_call.1} parent=55 // pred_fallthru
          _
        // Predicated region
        $region65: #{tpu_custom_call.1} parent=55 // pred_check
          %p374 = pneg %p112
        $region66: #{tpu_custom_call.1} parent=55 // pred_check_branch
          %376 = sbr.rel (%p374) target = $region68
        $region67: #{tpu_custom_call.1} parent=55 // pred_region
          %378 = dma.done [#allocation6], 9216
        $region68: #{tpu_custom_call.1} parent=55 // pred_fallthru
          _
        // Predicated region
        $region69: #{tpu_custom_call.1} parent=55 // pred_check
          %p379 = pneg %p154
        $region70: #{tpu_custom_call.1} parent=55 // pred_check_branch
          %381 = sbr.rel (%p379) target = $region72
        $region71: #{tpu_custom_call.1} parent=55 // pred_region
          %383 = dma.done [#allocation9], 1024
        $region72: #{tpu_custom_call.1} parent=55 // pred_fallthru
          _
        // Predicated region
        $region73: #{tpu_custom_call.1} parent=55 // pred_check
          %p384 = pneg %p196
        $region74: #{tpu_custom_call.1} parent=55 // pred_check_branch
          %386 = sbr.rel (%p384) target = $region76
        $region75: #{tpu_custom_call.1} parent=55 // pred_region
          %388 = dma.done [#allocation9], 1024
        $region76: #{tpu_custom_call.1} parent=55 // pred_fallthru
          _
        %s389 = sand.u32 %s36, 1
        %s390 = scalar_lea.sflag [#allocation3], %s389
        %s391 = sand.u32 %s36, 1
        %s392 = smul.addr %s391, 224
        %s393 = scalar_lea.vmem [#allocation2], %s392
        %p394 = pneg %p49
        %p395 = pneg %p46
        %p396 = pneg %p70
        %p397 = pneg %p67
        %p398 = pneg %p91
        %p399 = pneg %p88
        %p400 = pneg %p112
        %p401 = pneg %p109
        %p402 = pneg %p133
        %p403 = pneg %p130
        %p404 = pneg %p154
        %p405 = pneg %p151
        %p406 = pneg %p175
        %p407 = pneg %p172
        %p408 = pneg %p196
        %p409 = pneg %p193
        %p410 = pneg %p217
        %p411 = pneg %p214
        %p412 = pneg %p243
        %p413 = pneg %p240
        %s414 = sand.u32 %s230, 1
        %s415 = scalar_lea.sflag [#allocation4], %s414
        %s416 = sand.u32 %s230, 1
        %s417 = smul.addr %s416, 384
        %s418 = scalar_lea.vmem [#allocation11], %s417
        %v419 = vld [vmem:[%s363] sm:$0xf]
        %v420 = vld [vmem:[%s363 + $0x4] sm:$0xf]
        %v421 = vld [vmem:[%s363 + $0x8] sm:$0xf]
        %v422 = vld [vmem:[%s363 + $0xc] sm:$0xf]
        %v423 = vld [vmem:[%s363 + $0x10] sm:$0xf]
        %v424 = vld [vmem:[%s363 + $0x14] sm:$0xf]
        %v425 = vld [vmem:[%s363 + $0x18] sm:$0xf]
        %v426 = vld [vmem:[%s363 + $0x1c] sm:$0xf]
        %v427 = vld [vmem:[%s363 + $0x20] sm:$0xf]
        %v428 = vld [vmem:[%s363 + $0x24] sm:$0xf]
        %v429 = vld [vmem:[%s363 + $0x28] sm:$0xf]
        %v430 = vld [vmem:[%s363 + $0x2c] sm:$0xf]
        %v431 = vld [vmem:[%s363 + $0x30] sm:$0xf]
        %v432 = vld [vmem:[%s363 + $0x34] sm:$0xf]
        %v433 = vld [vmem:[%s363 + $0x38] sm:$0xf]
        %v434 = vld [vmem:[%s363 + $0x3c] sm:$0xf]
        %v435 = vld [vmem:[%s363 + $0x40] sm:$0xf]
        %v436 = vld [vmem:[%s363 + $0x44] sm:$0xf]
        %v437 = vld [vmem:[%s363 + $0x48] sm:$0xf]
        %v438 = vld [vmem:[%s363 + $0x4c] sm:$0xf]
        %v439 = vld [vmem:[%s363 + $0x50] sm:$0xf]
        %v440 = vld [vmem:[%s363 + $0x54] sm:$0xf]
        %v441 = vld [vmem:[%s363 + $0x58] sm:$0xf]
        %v442 = vld [vmem:[%s363 + $0x5c] sm:$0xf]
        %v443 = vld [vmem:[%s363 + $0x60] sm:$0xf]
        %v444 = vld [vmem:[%s363 + $0x64] sm:$0xf]
        %v445 = vld [vmem:[%s363 + $0x68] sm:$0xf]
        %v446 = vld [vmem:[%s363 + $0x6c] sm:$0xf]
        %v447 = vld [vmem:[%s363 + $0x70] sm:$0xf]
        %v448 = vld [vmem:[%s363 + $0x74] sm:$0xf]
        %v449 = vld [vmem:[%s363 + $0x78] sm:$0xf]
        %v450 = vld [vmem:[%s363 + $0x7c] sm:$0xf]
        %v451 = vld [vmem:[%s363 + $0x80] sm:$0xf]
        %v452 = vld [vmem:[%s363 + $0x84] sm:$0xf]
        %v453 = vld [vmem:[%s363 + $0x88] sm:$0xf]
        %v454 = vld [vmem:[%s363 + $0x8c] sm:$0xf]
        %v455 = vld [vmem:[%s363 + $0x90] sm:$0xf]
        %v456 = vld [vmem:[%s363 + $0x94] sm:$0xf]
        %v457 = vld [vmem:[%s363 + $0x98] sm:$0xf]
        %v458 = vld [vmem:[%s363 + $0x9c] sm:$0xf]
        %v459 = vld [vmem:[%s363 + $0xa0] sm:$0xf]
        %v460 = vld [vmem:[%s363 + $0xa4] sm:$0xf]
        %v461 = vld [vmem:[%s363 + $0xa8] sm:$0xf]
        %v462 = vld [vmem:[%s363 + $0xac] sm:$0xf]
        %v463 = vld [vmem:[%s363 + $0xb0] sm:$0xf]
        %v464 = vld [vmem:[%s363 + $0xb4] sm:$0xf]
        %v465 = vld [vmem:[%s363 + $0xb8] sm:$0xf]
        %v466 = vld [vmem:[%s363 + $0xbc] sm:$0xf]
        %v467 = vld [vmem:[%s363 + $0xc0] sm:$0xf]
        %v468 = vld [vmem:[%s363 + $0xc4] sm:$0xf]
        %v469 = vld [vmem:[%s363 + $0xc8] sm:$0xf]
        %v470 = vld [vmem:[%s363 + $0xcc] sm:$0xf]
        %v471 = vld [vmem:[%s363 + $0xd0] sm:$0xf]
        %v472 = vld [vmem:[%s363 + $0xd4] sm:$0xf]
        %v473 = vld [vmem:[%s363 + $0xd8] sm:$0xf]
        %v474 = vld [vmem:[%s363 + $0xdc] sm:$0xf]
        %v475 = vunpack.c.l.bf16 %v419
        %v476 = vunpack.c.l.bf16 %v420
        %v477 = vunpack.c.l.bf16 %v421
        %v478 = vunpack.c.l.bf16 %v422
        %v479 = vunpack.c.l.bf16 %v423
        %v480 = vunpack.c.l.bf16 %v424
        %v481 = vunpack.c.l.bf16 %v425
        %v482 = vunpack.c.l.bf16 %v426
        %v483 = vunpack.c.l.bf16 %v427
        %v484 = vunpack.c.l.bf16 %v428
        %v485 = vunpack.c.l.bf16 %v429
        %v486 = vunpack.c.l.bf16 %v430
        %v487 = vunpack.c.l.bf16 %v431
        %v488 = vunpack.c.l.bf16 %v432
        %v489 = vunpack.c.l.bf16 %v433
        %v490 = vunpack.c.l.bf16 %v434
        %v491 = vunpack.c.l.bf16 %v435
        %v492 = vunpack.c.l.bf16 %v436
        %v493 = vunpack.c.l.bf16 %v437
        %v494 = vunpack.c.l.bf16 %v438
        %v495 = vunpack.c.l.bf16 %v439
        %v496 = vunpack.c.l.bf16 %v440
        %v497 = vunpack.c.l.bf16 %v441
        %v498 = vunpack.c.l.bf16 %v442
        %v499 = vunpack.c.l.bf16 %v443
        %v500 = vunpack.c.l.bf16 %v444
        %v501 = vunpack.c.l.bf16 %v445
        %v502 = vunpack.c.l.bf16 %v446
        %v503 = vunpack.c.l.bf16 %v447
        %v504 = vunpack.c.l.bf16 %v448
        %v505 = vunpack.c.l.bf16 %v449
        %v506 = vunpack.c.l.bf16 %v450
        %v507 = vunpack.c.l.bf16 %v451
        %v508 = vunpack.c.l.bf16 %v452
        %v509 = vunpack.c.l.bf16 %v453
        %v510 = vunpack.c.l.bf16 %v454
        %v511 = vunpack.c.l.bf16 %v455
        %v512 = vunpack.c.l.bf16 %v456
        %v513 = vunpack.c.l.bf16 %v457
        %v514 = vunpack.c.l.bf16 %v458
        %v515 = vunpack.c.l.bf16 %v459
        %v516 = vunpack.c.l.bf16 %v460
        %v517 = vunpack.c.l.bf16 %v461
        %v518 = vunpack.c.l.bf16 %v462
        %v519 = vunpack.c.l.bf16 %v463
        %v520 = vunpack.c.l.bf16 %v464
        %v521 = vunpack.c.l.bf16 %v465
        %v522 = vunpack.c.l.bf16 %v466
        %v523 = vunpack.c.l.bf16 %v467
        %v524 = vunpack.c.l.bf16 %v468
        %v525 = vunpack.c.l.bf16 %v469
        %v526 = vunpack.c.l.bf16 %v470
        %v527 = vunpack.c.l.bf16 %v471
        %v528 = vunpack.c.l.bf16 %v472
        %v529 = vunpack.c.l.bf16 %v473
        %v530 = vunpack.c.l.bf16 %v474
        %v531 = vld [vmem:[#allocation5] sm:$0xf]
        %v532 = vld [vmem:[#allocation5 + $0x4] sm:$0xf]
        %v533 = vld [vmem:[#allocation5 + $0x8] sm:$0xf]
        %v534 = vld [vmem:[#allocation5 + $0xc] sm:$0xf]
        %v535 = vld [vmem:[#allocation5 + $0x10] sm:$0xf]
        %v536 = vld [vmem:[#allocation5 + $0x14] sm:$0xf]
        %v537 = vld [vmem:[#allocation5 + $0x18] sm:$0xf]
        %v538 = vld [vmem:[#allocation5 + $0x1c] sm:$0xf]
        %v539 = vld [vmem:[#allocation5 + $0x20] sm:$0xf]
        %v540 = vld [vmem:[#allocation5 + $0x24] sm:$0xf]
        %v541 = vld [vmem:[#allocation5 + $0x28] sm:$0xf]
        %v542 = vld [vmem:[#allocation5 + $0x2c] sm:$0xf]
        %v543 = vld [vmem:[#allocation5 + $0x30] sm:$0xf]
        %v544 = vld [vmem:[#allocation5 + $0x34] sm:$0xf]
        %v545 = vld [vmem:[#allocation5 + $0x38] sm:$0xf]
        %v546 = vld [vmem:[#allocation5 + $0x3c] sm:$0xf]
        %v547 = vld [vmem:[%s2] sm:$0x1]
        %v549 = vperm.slane %v547, 0
        %v607 = vunpack.c.l.b16 %v419
        %v608 = vunpack.c.l.b16 %v420
        %v609 = vunpack.c.l.b16 %v421
        %v610 = vunpack.c.l.b16 %v422
        %v611 = vunpack.c.l.b16 %v423
        %v612 = vunpack.c.l.b16 %v424
        %v613 = vunpack.c.l.b16 %v425
        %v614 = vunpack.c.l.b16 %v426
        %v615 = vunpack.c.l.b16 %v427
        %v616 = vunpack.c.l.b16 %v428
        %v617 = vunpack.c.l.b16 %v429
        %v618 = vunpack.c.l.b16 %v430
        %v619 = vunpack.c.l.b16 %v431
        %v620 = vunpack.c.l.b16 %v432
        %v621 = vunpack.c.l.b16 %v433
        %v622 = vunpack.c.l.b16 %v434
        %v623 = vunpack.c.l.b16 %v435
        %v624 = vunpack.c.l.b16 %v436
        %v625 = vunpack.c.l.b16 %v437
        %v626 = vunpack.c.l.b16 %v438
        %v627 = vunpack.c.l.b16 %v439
        %v628 = vunpack.c.l.b16 %v440
        %v629 = vunpack.c.l.b16 %v441
        %v630 = vunpack.c.l.b16 %v442
        %v631 = vunpack.c.l.b16 %v443
        %v632 = vunpack.c.l.b16 %v444
        %v633 = vunpack.c.l.b16 %v445
        %v634 = vunpack.c.l.b16 %v446
        %v635 = vunpack.c.l.b16 %v447
        %v636 = vunpack.c.l.b16 %v448
        %v637 = vunpack.c.l.b16 %v449
        %v638 = vunpack.c.l.b16 %v450
        %v639 = vunpack.c.l.b16 %v451
        %v640 = vunpack.c.l.b16 %v452
        %v641 = vunpack.c.l.b16 %v453
        %v642 = vunpack.c.l.b16 %v454
        %v643 = vunpack.c.l.b16 %v455
        %v644 = vunpack.c.l.b16 %v456
        %v645 = vunpack.c.l.b16 %v457
        %v646 = vunpack.c.l.b16 %v458
        %v647 = vunpack.c.l.b16 %v459
        %v648 = vunpack.c.l.b16 %v460
        %v649 = vunpack.c.l.b16 %v461
        %v650 = vunpack.c.l.b16 %v462
        %v651 = vunpack.c.l.b16 %v463
        %v652 = vunpack.c.l.b16 %v464
        %v653 = vunpack.c.l.b16 %v465
        %v654 = vunpack.c.l.b16 %v466
        %v655 = vunpack.c.l.b16 %v467
        %v656 = vunpack.c.l.b16 %v468
        %v657 = vunpack.c.l.b16 %v469
        %v658 = vunpack.c.l.b16 %v470
        %v659 = vunpack.c.l.b16 %v471
        %v660 = vunpack.c.l.b16 %v472
        %v661 = vunpack.c.l.b16 %v473
        %v662 = vunpack.c.l.b16 %v474
        %v663 = vpack.c.b16 %v608, %v607
        %v664 = vpack.c.b16 %v610, %v609
        %v665 = vpack.c.b16 %v612, %v611
        %v666 = vpack.c.b16 %v614, %v613
        %v667 = vpack.c.b16 %v616, %v615
        %v668 = vpack.c.b16 %v618, %v617
        %v669 = vpack.c.b16 %v620, %v619
        %v670 = vpack.c.b16 %v622, %v621
        %v671 = vpack.c.b16 %v624, %v623
        %v672 = vpack.c.b16 %v626, %v625
        %v673 = vpack.c.b16 %v628, %v627
        %v674 = vpack.c.b16 %v630, %v629
        %v675 = vpack.c.b16 %v632, %v631
        %v676 = vpack.c.b16 %v634, %v633
        %v677 = vpack.c.b16 %v636, %v635
        %v678 = vpack.c.b16 %v638, %v637
        %v679 = vpack.c.b16 %v640, %v639
        %v680 = vpack.c.b16 %v642, %v641
        %v681 = vpack.c.b16 %v644, %v643
        %v682 = vpack.c.b16 %v646, %v645
        %v683 = vpack.c.b16 %v648, %v647
        %v684 = vpack.c.b16 %v650, %v649
        %v685 = vpack.c.b16 %v652, %v651
        %v686 = vpack.c.b16 %v654, %v653
        %v687 = vpack.c.b16 %v656, %v655
        %v688 = vpack.c.b16 %v658, %v657
        %v689 = vpack.c.b16 %v660, %v659
        %v690 = vpack.c.b16 %v662, %v661
        %v735 = vunpack.c.l.b16 %v531
        %v736 = vunpack.c.l.b16 %v532
        %v737 = vunpack.c.l.b16 %v533
        %v738 = vunpack.c.l.b16 %v534
        %v739 = vunpack.c.l.b16 %v535
        %v740 = vunpack.c.l.b16 %v536
        %v741 = vunpack.c.l.b16 %v537
        %v742 = vunpack.c.l.b16 %v538
        %v743 = vunpack.c.l.b16 %v539
        %v744 = vunpack.c.l.b16 %v540
        %v745 = vunpack.c.l.b16 %v541
        %v746 = vunpack.c.l.b16 %v542
        %v747 = vunpack.c.l.b16 %v543
        %v748 = vunpack.c.l.b16 %v544
        %v749 = vunpack.c.l.b16 %v545
        %v750 = vunpack.c.l.b16 %v546
        %v751 = vpack.c.b16 %v736, %v735
        %v752 = vpack.c.b16 %v738, %v737
        %v753 = vpack.c.b16 %v740, %v739
        %v754 = vpack.c.b16 %v742, %v741
        %v755 = vpack.c.b16 %v744, %v743
        %v756 = vpack.c.b16 %v746, %v745
        %v757 = vpack.c.b16 %v748, %v747
        %v758 = vpack.c.b16 %v750, %v749
        %767 = vmatpush.bf16.msra.mxu0 %v758
        %768 = vmatpush.bf16.msra.mxu0 %v757
        %769 = vmatpush.bf16.msra.mxu0 %v756
        %770 = vmatpush.bf16.msra.mxu0 %v755
        %771 = vmatpush.bf16.msra.mxu0 %v754
        %772 = vmatpush.bf16.msra.mxu0 %v753
        %773 = vmatpush.bf16.msra.mxu0 %v752
        %774 = vmatpush.bf16.msra.mxu0 %v751
        %775 = vmatmul.bf16.gmra.mxu0 %v663
        %v776 = vpop.f32.mrf.mxu0
        %v777 = vadd.f32 %v549, %v776
        %v778 = vpop.f32.mrf.mxu0
        %v779 = vadd.f32 %v549, %v778
        %780 = vmatmul.bf16.gmra.mxu0 %v664
        %v781 = vpop.f32.mrf.mxu0
        %v782 = vadd.f32 %v549, %v781
        %v783 = vpop.f32.mrf.mxu0
        %v784 = vadd.f32 %v549, %v783
        %785 = vmatmul.bf16.gmra.mxu0 %v665
        %v786 = vpop.f32.mrf.mxu0
        %v787 = vadd.f32 %v549, %v786
        %v788 = vpop.f32.mrf.mxu0
        %v789 = vadd.f32 %v549, %v788
        %790 = vmatmul.bf16.gmra.mxu0 %v666
        %v791 = vpop.f32.mrf.mxu0
        %v792 = vadd.f32 %v549, %v791
        %v793 = vpop.f32.mrf.mxu0
        %v794 = vadd.f32 %v549, %v793
        %795 = vmatmul.bf16.gmra.mxu0 %v667
        %v796 = vpop.f32.mrf.mxu0
        %v797 = vadd.f32 %v549, %v796
        %v798 = vpop.f32.mrf.mxu0
        %v799 = vadd.f32 %v549, %v798
        %800 = vmatmul.bf16.gmra.mxu0 %v668
        %v801 = vpop.f32.mrf.mxu0
        %v802 = vadd.f32 %v549, %v801
        %v803 = vpop.f32.mrf.mxu0
        %v804 = vadd.f32 %v549, %v803
        %805 = vmatmul.bf16.gmra.mxu0 %v669
        %v806 = vpop.f32.mrf.mxu0
        %v807 = vadd.f32 %v549, %v806
        %v808 = vpop.f32.mrf.mxu0
        %v809 = vadd.f32 %v549, %v808
        %810 = vmatmul.bf16.gmra.mxu0 %v670
        %v811 = vpop.f32.mrf.mxu0
        %v812 = vadd.f32 %v549, %v811
        %v813 = vpop.f32.mrf.mxu0
        %v814 = vadd.f32 %v549, %v813
        %815 = vmatmul.bf16.gmra.mxu0 %v671
        %v816 = vpop.f32.mrf.mxu0
        %v817 = vadd.f32 %v549, %v816
        %v818 = vpop.f32.mrf.mxu0
        %v819 = vadd.f32 %v549, %v818
        %820 = vmatmul.bf16.gmra.mxu0 %v672
        %v821 = vpop.f32.mrf.mxu0
        %v822 = vadd.f32 %v549, %v821
        %v823 = vpop.f32.mrf.mxu0
        %v824 = vadd.f32 %v549, %v823
        %825 = vmatmul.bf16.gmra.mxu0 %v673
        %v826 = vpop.f32.mrf.mxu0
        %v827 = vadd.f32 %v549, %v826
        %v828 = vpop.f32.mrf.mxu0
        %v829 = vadd.f32 %v549, %v828
        %830 = vmatmul.bf16.gmra.mxu0 %v674
        %v831 = vpop.f32.mrf.mxu0
        %v832 = vadd.f32 %v549, %v831
        %v833 = vpop.f32.mrf.mxu0
        %v834 = vadd.f32 %v549, %v833
        %835 = vmatmul.bf16.gmra.mxu0 %v675
        %v836 = vpop.f32.mrf.mxu0
        %v837 = vadd.f32 %v549, %v836
        %v838 = vpop.f32.mrf.mxu0
        %v839 = vadd.f32 %v549, %v838
        %840 = vmatmul.bf16.gmra.mxu0 %v676
        %v841 = vpop.f32.mrf.mxu0
        %v842 = vadd.f32 %v549, %v841
        %v843 = vpop.f32.mrf.mxu0
        %v844 = vadd.f32 %v549, %v843
        %845 = vmatmul.bf16.gmra.mxu0 %v677
        %v846 = vpop.f32.mrf.mxu0
        %v847 = vadd.f32 %v549, %v846
        %v848 = vpop.f32.mrf.mxu0
        %v849 = vadd.f32 %v549, %v848
        %850 = vmatmul.bf16.gmra.mxu0 %v678
        %v851 = vpop.f32.mrf.mxu0
        %v852 = vadd.f32 %v549, %v851
        %v853 = vpop.f32.mrf.mxu0
        %v854 = vadd.f32 %v549, %v853
        %855 = vmatmul.bf16.gmra.mxu0 %v679
        %v856 = vpop.f32.mrf.mxu0
        %v857 = vadd.f32 %v549, %v856
        %v858 = vpop.f32.mrf.mxu0
        %v859 = vadd.f32 %v549, %v858
        %860 = vmatmul.bf16.gmra.mxu0 %v680
        %v861 = vpop.f32.mrf.mxu0
        %v862 = vadd.f32 %v549, %v861
        %v863 = vpop.f32.mrf.mxu0
        %v864 = vadd.f32 %v549, %v863
        %865 = vmatmul.bf16.gmra.mxu0 %v681
        %v866 = vpop.f32.mrf.mxu0
        %v867 = vadd.f32 %v549, %v866
        %v868 = vpop.f32.mrf.mxu0
        %v869 = vadd.f32 %v549, %v868
        %870 = vmatmul.bf16.gmra.mxu0 %v682
        %v871 = vpop.f32.mrf.mxu0
        %v872 = vadd.f32 %v549, %v871
        %v873 = vpop.f32.mrf.mxu0
        %v874 = vadd.f32 %v549, %v873
        %875 = vmatmul.bf16.gmra.mxu0 %v683
        %v876 = vpop.f32.mrf.mxu0
        %v877 = vadd.f32 %v549, %v876
        %v878 = vpop.f32.mrf.mxu0
        %v879 = vadd.f32 %v549, %v878
        %880 = vmatmul.bf16.gmra.mxu0 %v684
        %v881 = vpop.f32.mrf.mxu0
        %v882 = vadd.f32 %v549, %v881
        %v883 = vpop.f32.mrf.mxu0
        %v884 = vadd.f32 %v549, %v883
        %885 = vmatmul.bf16.gmra.mxu0 %v685
        %v886 = vpop.f32.mrf.mxu0
        %v887 = vadd.f32 %v549, %v886
        %v888 = vpop.f32.mrf.mxu0
        %v889 = vadd.f32 %v549, %v888
        %890 = vmatmul.bf16.gmra.mxu0 %v686
        %v891 = vpop.f32.mrf.mxu0
        %v892 = vadd.f32 %v549, %v891
        %v893 = vpop.f32.mrf.mxu0
        %v894 = vadd.f32 %v549, %v893
        %895 = vmatmul.bf16.gmra.mxu0 %v687
        %v896 = vpop.f32.mrf.mxu0
        %v897 = vadd.f32 %v549, %v896
        %v898 = vpop.f32.mrf.mxu0
        %v899 = vadd.f32 %v549, %v898
        %900 = vmatmul.bf16.gmra.mxu0 %v688
        %v901 = vpop.f32.mrf.mxu0
        %v902 = vadd.f32 %v549, %v901
        %v903 = vpop.f32.mrf.mxu0
        %v904 = vadd.f32 %v549, %v903
        %905 = vmatmul.bf16.gmra.mxu0 %v689
        %v906 = vpop.f32.mrf.mxu0
        %v907 = vadd.f32 %v549, %v906
        %v908 = vpop.f32.mrf.mxu0
        %v909 = vadd.f32 %v549, %v908
        %910 = vmatmul.bf16.gmra.mxu0 %v690
        %v911 = vpop.f32.mrf.mxu0
        %v912 = vadd.f32 %v549, %v911
        %v913 = vpop.f32.mrf.mxu0
        %v914 = vadd.f32 %v549, %v913
        %915 = vdwg.mxu0
        %vm916 = vcmp.ge.f32.partialorder %v777, 1.0
        %vm917 = vcmp.ge.f32.partialorder %v779, 1.0
        %vm918 = vcmp.ge.f32.partialorder %v782, 1.0
        %vm919 = vcmp.ge.f32.partialorder %v784, 1.0
        %vm920 = vcmp.ge.f32.partialorder %v787, 1.0
        %vm921 = vcmp.ge.f32.partialorder %v789, 1.0
        %vm922 = vcmp.ge.f32.partialorder %v792, 1.0
        %vm923 = vcmp.ge.f32.partialorder %v794, 1.0
        %vm924 = vcmp.ge.f32.partialorder %v797, 1.0
        %vm925 = vcmp.ge.f32.partialorder %v799, 1.0
        %vm926 = vcmp.ge.f32.partialorder %v802, 1.0
        %vm927 = vcmp.ge.f32.partialorder %v804, 1.0
        %vm928 = vcmp.ge.f32.partialorder %v807, 1.0
        %vm929 = vcmp.ge.f32.partialorder %v809, 1.0
        %vm930 = vcmp.ge.f32.partialorder %v812, 1.0
        %vm931 = vcmp.ge.f32.partialorder %v814, 1.0
        %vm932 = vcmp.ge.f32.partialorder %v817, 1.0
        %vm933 = vcmp.ge.f32.partialorder %v819, 1.0
        %vm934 = vcmp.ge.f32.partialorder %v822, 1.0
        %vm935 = vcmp.ge.f32.partialorder %v824, 1.0
        %vm936 = vcmp.ge.f32.partialorder %v827, 1.0
        %vm937 = vcmp.ge.f32.partialorder %v829, 1.0
        %vm938 = vcmp.ge.f32.partialorder %v832, 1.0
        %vm939 = vcmp.ge.f32.partialorder %v834, 1.0
        %vm940 = vcmp.ge.f32.partialorder %v837, 1.0
        %vm941 = vcmp.ge.f32.partialorder %v839, 1.0
        %vm942 = vcmp.ge.f32.partialorder %v842, 1.0
        %vm943 = vcmp.ge.f32.partialorder %v844, 1.0
        %vm944 = vcmp.ge.f32.partialorder %v847, 1.0
        %vm945 = vcmp.ge.f32.partialorder %v849, 1.0
        %vm946 = vcmp.ge.f32.partialorder %v852, 1.0
        %vm947 = vcmp.ge.f32.partialorder %v854, 1.0
        %vm948 = vcmp.ge.f32.partialorder %v857, 1.0
        %vm949 = vcmp.ge.f32.partialorder %v859, 1.0
        %vm950 = vcmp.ge.f32.partialorder %v862, 1.0
        %vm951 = vcmp.ge.f32.partialorder %v864, 1.0
        %vm952 = vcmp.ge.f32.partialorder %v867, 1.0
        %vm953 = vcmp.ge.f32.partialorder %v869, 1.0
        %vm954 = vcmp.ge.f32.partialorder %v872, 1.0
        %vm955 = vcmp.ge.f32.partialorder %v874, 1.0
        %vm956 = vcmp.ge.f32.partialorder %v877, 1.0
        %vm957 = vcmp.ge.f32.partialorder %v879, 1.0
        %vm958 = vcmp.ge.f32.partialorder %v882, 1.0
        %vm959 = vcmp.ge.f32.partialorder %v884, 1.0
        %vm960 = vcmp.ge.f32.partialorder %v887, 1.0
        %vm961 = vcmp.ge.f32.partialorder %v889, 1.0
        %vm962 = vcmp.ge.f32.partialorder %v892, 1.0
        %vm963 = vcmp.ge.f32.partialorder %v894, 1.0
        %vm964 = vcmp.ge.f32.partialorder %v897, 1.0
        %vm965 = vcmp.ge.f32.partialorder %v899, 1.0
        %vm966 = vcmp.ge.f32.partialorder %v902, 1.0
        %vm967 = vcmp.ge.f32.partialorder %v904, 1.0
        %vm968 = vcmp.ge.f32.partialorder %v907, 1.0
        %vm969 = vcmp.ge.f32.partialorder %v909, 1.0
        %vm970 = vcmp.ge.f32.partialorder %v912, 1.0
        %vm971 = vcmp.ge.f32.partialorder %v914, 1.0
        %v972 = vsel %vm916, 1, 0
        %v973 = vsel %vm917, 1, 0
        %v974 = vsel %vm918, 1, 0
        %v975 = vsel %vm919, 1, 0
        %v976 = vsel %vm920, 1, 0
        %v977 = vsel %vm921, 1, 0
        %v978 = vsel %vm922, 1, 0
        %v979 = vsel %vm923, 1, 0
        %v980 = vsel %vm924, 1, 0
        %v981 = vsel %vm925, 1, 0
        %v982 = vsel %vm926, 1, 0
        %v983 = vsel %vm927, 1, 0
        %v984 = vsel %vm928, 1, 0
        %v985 = vsel %vm929, 1, 0
        %v986 = vsel %vm930, 1, 0
        %v987 = vsel %vm931, 1, 0
        %v988 = vsel %vm932, 1, 0
        %v989 = vsel %vm933, 1, 0
        %v990 = vsel %vm934, 1, 0
        %v991 = vsel %vm935, 1, 0
        %v992 = vsel %vm936, 1, 0
        %v993 = vsel %vm937, 1, 0
        %v994 = vsel %vm938, 1, 0
        %v995 = vsel %vm939, 1, 0
        %v996 = vsel %vm940, 1, 0
        %v997 = vsel %vm941, 1, 0
        %v998 = vsel %vm942, 1, 0
        %v999 = vsel %vm943, 1, 0
        %v1000 = vsel %vm944, 1, 0
        %v1001 = vsel %vm945, 1, 0
        %v1002 = vsel %vm946, 1, 0
        %v1003 = vsel %vm947, 1, 0
        %v1004 = vsel %vm948, 1, 0
        %v1005 = vsel %vm949, 1, 0
        %v1006 = vsel %vm950, 1, 0
        %v1007 = vsel %vm951, 1, 0
        %v1008 = vsel %vm952, 1, 0
        %v1009 = vsel %vm953, 1, 0
        %v1010 = vsel %vm954, 1, 0
        %v1011 = vsel %vm955, 1, 0
        %v1012 = vsel %vm956, 1, 0
        %v1013 = vsel %vm957, 1, 0
        %v1014 = vsel %vm958, 1, 0
        %v1015 = vsel %vm959, 1, 0
        %v1016 = vsel %vm960, 1, 0
        %v1017 = vsel %vm961, 1, 0
        %v1018 = vsel %vm962, 1, 0
        %v1019 = vsel %vm963, 1, 0
        %v1020 = vsel %vm964, 1, 0
        %v1021 = vsel %vm965, 1, 0
        %v1022 = vsel %vm966, 1, 0
        %v1023 = vsel %vm967, 1, 0
        %v1024 = vsel %vm968, 1, 0
        %v1025 = vsel %vm969, 1, 0
        %v1026 = vsel %vm970, 1, 0
        %v1027 = vsel %vm971, 1, 0
        %v1028 = vcvt.s32.f32 %v972
        %v1029 = vcvt.s32.f32 %v973
        %v1030 = vcvt.s32.f32 %v974
        %v1031 = vcvt.s32.f32 %v975
        %v1032 = vcvt.s32.f32 %v976
        %v1033 = vcvt.s32.f32 %v977
        %v1034 = vcvt.s32.f32 %v978
        %v1035 = vcvt.s32.f32 %v979
        %v1036 = vcvt.s32.f32 %v980
        %v1037 = vcvt.s32.f32 %v981
        %v1038 = vcvt.s32.f32 %v982
        %v1039 = vcvt.s32.f32 %v983
        %v1040 = vcvt.s32.f32 %v984
        %v1041 = vcvt.s32.f32 %v985
        %v1042 = vcvt.s32.f32 %v986
        %v1043 = vcvt.s32.f32 %v987
        %v1044 = vcvt.s32.f32 %v988
        %v1045 = vcvt.s32.f32 %v989
        %v1046 = vcvt.s32.f32 %v990
        %v1047 = vcvt.s32.f32 %v991
        %v1048 = vcvt.s32.f32 %v992
        %v1049 = vcvt.s32.f32 %v993
        %v1050 = vcvt.s32.f32 %v994
        %v1051 = vcvt.s32.f32 %v995
        %v1052 = vcvt.s32.f32 %v996
        %v1053 = vcvt.s32.f32 %v997
        %v1054 = vcvt.s32.f32 %v998
        %v1055 = vcvt.s32.f32 %v999
        %v1056 = vcvt.s32.f32 %v1000
        %v1057 = vcvt.s32.f32 %v1001
        %v1058 = vcvt.s32.f32 %v1002
        %v1059 = vcvt.s32.f32 %v1003
        %v1060 = vcvt.s32.f32 %v1004
        %v1061 = vcvt.s32.f32 %v1005
        %v1062 = vcvt.s32.f32 %v1006
        %v1063 = vcvt.s32.f32 %v1007
        %v1064 = vcvt.s32.f32 %v1008
        %v1065 = vcvt.s32.f32 %v1009
        %v1066 = vcvt.s32.f32 %v1010
        %v1067 = vcvt.s32.f32 %v1011
        %v1068 = vcvt.s32.f32 %v1012
        %v1069 = vcvt.s32.f32 %v1013
        %v1070 = vcvt.s32.f32 %v1014
        %v1071 = vcvt.s32.f32 %v1015
        %v1072 = vcvt.s32.f32 %v1016
        %v1073 = vcvt.s32.f32 %v1017
        %v1074 = vcvt.s32.f32 %v1018
        %v1075 = vcvt.s32.f32 %v1019
        %v1076 = vcvt.s32.f32 %v1020
        %v1077 = vcvt.s32.f32 %v1021
        %v1078 = vcvt.s32.f32 %v1022
        %v1079 = vcvt.s32.f32 %v1023
        %v1080 = vcvt.s32.f32 %v1024
        %v1081 = vcvt.s32.f32 %v1025
        %v1082 = vcvt.s32.f32 %v1026
        %v1083 = vcvt.s32.f32 %v1027
        %1085 = vset.pattern.permute.xlu0 16
        %1086 = vperm.xlu0 %1085, %v475
        %v1087 = vpop.permute.xlu0 %1086
        %1090 = vset.pattern.permute.xlu0 16
        %1091 = vperm.xlu0 %1090, %v476
        %v1092 = vpop.permute.xlu0 %1091
        %1095 = vset.pattern.permute.xlu0 16
        %1096 = vperm.xlu0 %1095, %v477
        %v1097 = vpop.permute.xlu0 %1096
        %1100 = vset.pattern.permute.xlu0 16
        %1101 = vperm.xlu0 %1100, %v478
        %v1102 = vpop.permute.xlu0 %1101
        %1105 = vset.pattern.permute.xlu0 16
        %1106 = vperm.xlu0 %1105, %v479
        %v1107 = vpop.permute.xlu0 %1106
        %1110 = vset.pattern.permute.xlu0 16
        %1111 = vperm.xlu0 %1110, %v480
        %v1112 = vpop.permute.xlu0 %1111
        %1115 = vset.pattern.permute.xlu0 16
        %1116 = vperm.xlu0 %1115, %v481
        %v1117 = vpop.permute.xlu0 %1116
        %1120 = vset.pattern.permute.xlu0 16
        %1121 = vperm.xlu0 %1120, %v482
        %v1122 = vpop.permute.xlu0 %1121
        %1125 = vset.pattern.permute.xlu0 16
        %1126 = vperm.xlu0 %1125, %v483
        %v1127 = vpop.permute.xlu0 %1126
        %1130 = vset.pattern.permute.xlu0 16
        %1131 = vperm.xlu0 %1130, %v484
        %v1132 = vpop.permute.xlu0 %1131
        %1135 = vset.pattern.permute.xlu0 16
        %1136 = vperm.xlu0 %1135, %v485
        %v1137 = vpop.permute.xlu0 %1136
        %1140 = vset.pattern.permute.xlu0 16
        %1141 = vperm.xlu0 %1140, %v486
        %v1142 = vpop.permute.xlu0 %1141
        %1145 = vset.pattern.permute.xlu0 16
        %1146 = vperm.xlu0 %1145, %v487
        %v1147 = vpop.permute.xlu0 %1146
        %1150 = vset.pattern.permute.xlu0 16
        %1151 = vperm.xlu0 %1150, %v488
        %v1152 = vpop.permute.xlu0 %1151
        %1155 = vset.pattern.permute.xlu0 16
        %1156 = vperm.xlu0 %1155, %v489
        %v1157 = vpop.permute.xlu0 %1156
        %1160 = vset.pattern.permute.xlu0 16
        %1161 = vperm.xlu0 %1160, %v490
        %v1162 = vpop.permute.xlu0 %1161
        %1165 = vset.pattern.permute.xlu0 16
        %1166 = vperm.xlu0 %1165, %v491
        %v1167 = vpop.permute.xlu0 %1166
        %1170 = vset.pattern.permute.xlu0 16
        %1171 = vperm.xlu0 %1170, %v492
        %v1172 = vpop.permute.xlu0 %1171
        %1175 = vset.pattern.permute.xlu0 16
        %1176 = vperm.xlu0 %1175, %v493
        %v1177 = vpop.permute.xlu0 %1176
        %1180 = vset.pattern.permute.xlu0 16
        %1181 = vperm.xlu0 %1180, %v494
        %v1182 = vpop.permute.xlu0 %1181
        %1185 = vset.pattern.permute.xlu0 16
        %1186 = vperm.xlu0 %1185, %v495
        %v1187 = vpop.permute.xlu0 %1186
        %1190 = vset.pattern.permute.xlu0 16
        %1191 = vperm.xlu0 %1190, %v496
        %v1192 = vpop.permute.xlu0 %1191
        %1195 = vset.pattern.permute.xlu0 16
        %1196 = vperm.xlu0 %1195, %v497
        %v1197 = vpop.permute.xlu0 %1196
        %1200 = vset.pattern.permute.xlu0 16
        %1201 = vperm.xlu0 %1200, %v498
        %v1202 = vpop.permute.xlu0 %1201
        %1205 = vset.pattern.permute.xlu0 16
        %1206 = vperm.xlu0 %1205, %v499
        %v1207 = vpop.permute.xlu0 %1206
        %1210 = vset.pattern.permute.xlu0 16
        %1211 = vperm.xlu0 %1210, %v500
        %v1212 = vpop.permute.xlu0 %1211
        %1215 = vset.pattern.permute.xlu0 16
        %1216 = vperm.xlu0 %1215, %v501
        %v1217 = vpop.permute.xlu0 %1216
        %1220 = vset.pattern.permute.xlu0 16
        %1221 = vperm.xlu0 %1220, %v502
        %v1222 = vpop.permute.xlu0 %1221
        %1225 = vset.pattern.permute.xlu0 16
        %1226 = vperm.xlu0 %1225, %v503
        %v1227 = vpop.permute.xlu0 %1226
        %1230 = vset.pattern.permute.xlu0 16
        %1231 = vperm.xlu0 %1230, %v504
        %v1232 = vpop.permute.xlu0 %1231
        %1235 = vset.pattern.permute.xlu0 16
        %1236 = vperm.xlu0 %1235, %v505
        %v1237 = vpop.permute.xlu0 %1236
        %1240 = vset.pattern.permute.xlu0 16
        %1241 = vperm.xlu0 %1240, %v506
        %v1242 = vpop.permute.xlu0 %1241
        %1245 = vset.pattern.permute.xlu0 16
        %1246 = vperm.xlu0 %1245, %v507
        %v1247 = vpop.permute.xlu0 %1246
        %1250 = vset.pattern.permute.xlu0 16
        %1251 = vperm.xlu0 %1250, %v508
        %v1252 = vpop.permute.xlu0 %1251
        %1255 = vset.pattern.permute.xlu0 16
        %1256 = vperm.xlu0 %1255, %v509
        %v1257 = vpop.permute.xlu0 %1256
        %1260 = vset.pattern.permute.xlu0 16
        %1261 = vperm.xlu0 %1260, %v510
        %v1262 = vpop.permute.xlu0 %1261
        %1265 = vset.pattern.permute.xlu0 16
        %1266 = vperm.xlu0 %1265, %v511
        %v1267 = vpop.permute.xlu0 %1266
        %1270 = vset.pattern.permute.xlu0 16
        %1271 = vperm.xlu0 %1270, %v512
        %v1272 = vpop.permute.xlu0 %1271
        %1275 = vset.pattern.permute.xlu0 16
        %1276 = vperm.xlu0 %1275, %v513
        %v1277 = vpop.permute.xlu0 %1276
        %1280 = vset.pattern.permute.xlu0 16
        %1281 = vperm.xlu0 %1280, %v514
        %v1282 = vpop.permute.xlu0 %1281
        %1285 = vset.pattern.permute.xlu0 16
        %1286 = vperm.xlu0 %1285, %v515
        %v1287 = vpop.permute.xlu0 %1286
        %1290 = vset.pattern.permute.xlu0 16
        %1291 = vperm.xlu0 %1290, %v516
        %v1292 = vpop.permute.xlu0 %1291
        %1295 = vset.pattern.permute.xlu0 16
        %1296 = vperm.xlu0 %1295, %v517
        %v1297 = vpop.permute.xlu0 %1296
        %1300 = vset.pattern.permute.xlu0 16
        %1301 = vperm.xlu0 %1300, %v518
        %v1302 = vpop.permute.xlu0 %1301
        %1305 = vset.pattern.permute.xlu0 16
        %1306 = vperm.xlu0 %1305, %v519
        %v1307 = vpop.permute.xlu0 %1306
        %1310 = vset.pattern.permute.xlu0 16
        %1311 = vperm.xlu0 %1310, %v520
        %v1312 = vpop.permute.xlu0 %1311
        %1315 = vset.pattern.permute.xlu0 16
        %1316 = vperm.xlu0 %1315, %v521
        %v1317 = vpop.permute.xlu0 %1316
        %1320 = vset.pattern.permute.xlu0 16
        %1321 = vperm.xlu0 %1320, %v522
        %v1322 = vpop.permute.xlu0 %1321
        %1325 = vset.pattern.permute.xlu0 16
        %1326 = vperm.xlu0 %1325, %v523
        %v1327 = vpop.permute.xlu0 %1326
        %1330 = vset.pattern.permute.xlu0 16
        %1331 = vperm.xlu0 %1330, %v524
        %v1332 = vpop.permute.xlu0 %1331
        %1335 = vset.pattern.permute.xlu0 16
        %1336 = vperm.xlu0 %1335, %v525
        %v1337 = vpop.permute.xlu0 %1336
        %1340 = vset.pattern.permute.xlu0 16
        %1341 = vperm.xlu0 %1340, %v526
        %v1342 = vpop.permute.xlu0 %1341
        %1345 = vset.pattern.permute.xlu0 16
        %1346 = vperm.xlu0 %1345, %v527
        %v1347 = vpop.permute.xlu0 %1346
        %1350 = vset.pattern.permute.xlu0 16
        %1351 = vperm.xlu0 %1350, %v528
        %v1352 = vpop.permute.xlu0 %1351
        %1355 = vset.pattern.permute.xlu0 16
        %1356 = vperm.xlu0 %1355, %v529
        %v1357 = vpop.permute.xlu0 %1356
        %1360 = vset.pattern.permute.xlu0 16
        %1361 = vperm.xlu0 %1360, %v530
        %v1362 = vpop.permute.xlu0 %1361
        %v1364 = vmul.f32 %v1028, %v1087
        %v1365 = vmul.f32 %v1029, %v1092
        %v1366 = vmul.f32 %v1030, %v1097
        %v1367 = vmul.f32 %v1031, %v1102
        %v1368 = vmul.f32 %v1032, %v1107
        %v1369 = vmul.f32 %v1033, %v1112
        %v1370 = vmul.f32 %v1034, %v1117
        %v1371 = vmul.f32 %v1035, %v1122
        %v1372 = vmul.f32 %v1036, %v1127
        %v1373 = vmul.f32 %v1037, %v1132
        %v1374 = vmul.f32 %v1038, %v1137
        %v1375 = vmul.f32 %v1039, %v1142
        %v1376 = vmul.f32 %v1040, %v1147
        %v1377 = vmul.f32 %v1041, %v1152
        %v1378 = vmul.f32 %v1042, %v1157
        %v1379 = vmul.f32 %v1043, %v1162
        %v1380 = vmul.f32 %v1044, %v1167
        %v1381 = vmul.f32 %v1045, %v1172
        %v1382 = vmul.f32 %v1046, %v1177
        %v1383 = vmul.f32 %v1047, %v1182
        %v1384 = vmul.f32 %v1048, %v1187
        %v1385 = vmul.f32 %v1049, %v1192
        %v1386 = vmul.f32 %v1050, %v1197
        %v1387 = vmul.f32 %v1051, %v1202
        %v1388 = vmul.f32 %v1052, %v1207
        %v1389 = vmul.f32 %v1053, %v1212
        %v1390 = vmul.f32 %v1054, %v1217
        %v1391 = vmul.f32 %v1055, %v1222
        %v1392 = vmul.f32 %v1056, %v1227
        %v1393 = vmul.f32 %v1057, %v1232
        %v1394 = vmul.f32 %v1058, %v1237
        %v1395 = vmul.f32 %v1059, %v1242
        %v1396 = vmul.f32 %v1060, %v1247
        %v1397 = vmul.f32 %v1061, %v1252
        %v1398 = vmul.f32 %v1062, %v1257
        %v1399 = vmul.f32 %v1063, %v1262
        %v1400 = vmul.f32 %v1064, %v1267
        %v1401 = vmul.f32 %v1065, %v1272
        %v1402 = vmul.f32 %v1066, %v1277
        %v1403 = vmul.f32 %v1067, %v1282
        %v1404 = vmul.f32 %v1068, %v1287
        %v1405 = vmul.f32 %v1069, %v1292
        %v1406 = vmul.f32 %v1070, %v1297
        %v1407 = vmul.f32 %v1071, %v1302
        %v1408 = vmul.f32 %v1072, %v1307
        %v1409 = vmul.f32 %v1073, %v1312
        %v1410 = vmul.f32 %v1074, %v1317
        %v1411 = vmul.f32 %v1075, %v1322
        %v1412 = vmul.f32 %v1076, %v1327
        %v1413 = vmul.f32 %v1077, %v1332
        %v1414 = vmul.f32 %v1078, %v1337
        %v1415 = vmul.f32 %v1079, %v1342
        %v1416 = vmul.f32 %v1080, %v1347
        %v1417 = vmul.f32 %v1081, %v1352
        %v1418 = vmul.f32 %v1082, %v1357
        %v1419 = vmul.f32 %v1083, %v1362
        %vm1468 = vcmask 1046528
        %v1469 = vrot.slane %v1365, 1
        %v1470 = vrot.slane %v1366, 1
        %v1471 = vsel %vm1468, %v1469, %v1470
        %v1472 = vrot.slane %v1367, 1
        %v1473 = vsel %vm1468, %v1470, %v1472
        %v1474 = vrot.slane %v1368, 1
        %v1475 = vsel %vm1468, %v1472, %v1474
        %v1476 = vrot.slane %v1369, 1
        %v1477 = vsel %vm1468, %v1474, %v1476
        %v1478 = vrot.slane %v1370, 1
        %v1479 = vsel %vm1468, %v1476, %v1478
        %v1480 = vrot.slane %v1371, 1
        %v1481 = vsel %vm1468, %v1478, %v1480
        %v1482 = vrot.slane %v1372, 1
        %v1483 = vsel %vm1468, %v1480, %v1482
        %v1484 = vrot.slane %v1373, 1
        %v1485 = vsel %vm1468, %v1482, %v1484
        %v1486 = vrot.slane %v1374, 1
        %v1487 = vsel %vm1468, %v1484, %v1486
        %v1488 = vrot.slane %v1375, 1
        %v1489 = vsel %vm1468, %v1486, %v1488
        %v1490 = vrot.slane %v1376, 1
        %v1491 = vsel %vm1468, %v1488, %v1490
        %v1492 = vrot.slane %v1377, 1
        %v1493 = vsel %vm1468, %v1490, %v1492
        %v1494 = vrot.slane %v1378, 1
        %v1495 = vsel %vm1468, %v1492, %v1494
        %v1496 = vrot.slane %v1379, 1
        %v1497 = vsel %vm1468, %v1494, %v1496
        %v1498 = vrot.slane %v1380, 1
        %v1499 = vsel %vm1468, %v1496, %v1498
        %v1500 = vrot.slane %v1381, 1
        %v1501 = vsel %vm1468, %v1498, %v1500
        %v1502 = vrot.slane %v1382, 1
        %v1503 = vsel %vm1468, %v1500, %v1502
        %v1504 = vrot.slane %v1383, 1
        %v1505 = vsel %vm1468, %v1502, %v1504
        %v1506 = vrot.slane %v1384, 1
        %v1507 = vsel %vm1468, %v1504, %v1506
        %v1508 = vrot.slane %v1385, 1
        %v1509 = vsel %vm1468, %v1506, %v1508
        %v1510 = vrot.slane %v1386, 1
        %v1511 = vsel %vm1468, %v1508, %v1510
        %v1512 = vrot.slane %v1387, 1
        %v1513 = vsel %vm1468, %v1510, %v1512
        %v1514 = vrot.slane %v1388, 1
        %v1515 = vsel %vm1468, %v1512, %v1514
        %v1516 = vrot.slane %v1389, 1
        %v1517 = vsel %vm1468, %v1514, %v1516
        %v1518 = vrot.slane %v1390, 1
        %v1519 = vsel %vm1468, %v1516, %v1518
        %v1520 = vrot.slane %v1391, 1
        %v1521 = vsel %vm1468, %v1518, %v1520
        %v1522 = vrot.slane %v1392, 1
        %v1523 = vsel %vm1468, %v1520, %v1522
        %v1524 = vrot.slane %v1393, 1
        %v1525 = vsel %vm1468, %v1522, %v1524
        %v1526 = vrot.slane %v1394, 1
        %v1527 = vsel %vm1468, %v1524, %v1526
        %v1528 = vrot.slane %v1395, 1
        %v1529 = vsel %vm1468, %v1526, %v1528
        %v1530 = vrot.slane %v1396, 1
        %v1531 = vsel %vm1468, %v1528, %v1530
        %v1532 = vrot.slane %v1397, 1
        %v1533 = vsel %vm1468, %v1530, %v1532
        %v1534 = vrot.slane %v1398, 1
        %v1535 = vsel %vm1468, %v1532, %v1534
        %v1536 = vrot.slane %v1399, 1
        %v1537 = vsel %vm1468, %v1534, %v1536
        %v1538 = vrot.slane %v1400, 1
        %v1539 = vsel %vm1468, %v1536, %v1538
        %v1540 = vrot.slane %v1401, 1
        %v1541 = vsel %vm1468, %v1538, %v1540
        %v1542 = vrot.slane %v1402, 1
        %v1543 = vsel %vm1468, %v1540, %v1542
        %v1544 = vrot.slane %v1403, 1
        %v1545 = vsel %vm1468, %v1542, %v1544
        %v1546 = vrot.slane %v1404, 1
        %v1547 = vsel %vm1468, %v1544, %v1546
        %v1548 = vrot.slane %v1405, 1
        %v1549 = vsel %vm1468, %v1546, %v1548
        %v1550 = vrot.slane %v1406, 1
        %v1551 = vsel %vm1468, %v1548, %v1550
        %v1552 = vrot.slane %v1407, 1
        %v1553 = vsel %vm1468, %v1550, %v1552
        %v1554 = vrot.slane %v1408, 1
        %v1555 = vsel %vm1468, %v1552, %v1554
        %v1556 = vrot.slane %v1409, 1
        %v1557 = vsel %vm1468, %v1554, %v1556
        %v1558 = vrot.slane %v1410, 1
        %v1559 = vsel %vm1468, %v1556, %v1558
        %v1560 = vrot.slane %v1411, 1
        %v1561 = vsel %vm1468, %v1558, %v1560
        %v1562 = vrot.slane %v1412, 1
        %v1563 = vsel %vm1468, %v1560, %v1562
        %vm1614 = vcmask 1045504
        %v1615 = vrot.slane %v1365, 2
        %v1616 = vrot.slane %v1366, 2
        %v1617 = vsel %vm1614, %v1615, %v1616
        %v1618 = vrot.slane %v1367, 2
        %v1619 = vsel %vm1614, %v1616, %v1618
        %v1620 = vrot.slane %v1368, 2
        %v1621 = vsel %vm1614, %v1618, %v1620
        %v1622 = vrot.slane %v1369, 2
        %v1623 = vsel %vm1614, %v1620, %v1622
        %v1624 = vrot.slane %v1370, 2
        %v1625 = vsel %vm1614, %v1622, %v1624
        %v1626 = vrot.slane %v1371, 2
        %v1627 = vsel %vm1614, %v1624, %v1626
        %v1628 = vrot.slane %v1372, 2
        %v1629 = vsel %vm1614, %v1626, %v1628
        %v1630 = vrot.slane %v1373, 2
        %v1631 = vsel %vm1614, %v1628, %v1630
        %v1632 = vrot.slane %v1374, 2
        %v1633 = vsel %vm1614, %v1630, %v1632
        %v1634 = vrot.slane %v1375, 2
        %v1635 = vsel %vm1614, %v1632, %v1634
        %v1636 = vrot.slane %v1376, 2
        %v1637 = vsel %vm1614, %v1634, %v1636
        %v1638 = vrot.slane %v1377, 2
        %v1639 = vsel %vm1614, %v1636, %v1638
        %v1640 = vrot.slane %v1378, 2
        %v1641 = vsel %vm1614, %v1638, %v1640
        %v1642 = vrot.slane %v1379, 2
        %v1643 = vsel %vm1614, %v1640, %v1642
        %v1644 = vrot.slane %v1380, 2
        %v1645 = vsel %vm1614, %v1642, %v1644
        %v1646 = vrot.slane %v1381, 2
        %v1647 = vsel %vm1614, %v1644, %v1646
        %v1648 = vrot.slane %v1382, 2
        %v1649 = vsel %vm1614, %v1646, %v1648
        %v1650 = vrot.slane %v1383, 2
        %v1651 = vsel %vm1614, %v1648, %v1650
        %v1652 = vrot.slane %v1384, 2
        %v1653 = vsel %vm1614, %v1650, %v1652
        %v1654 = vrot.slane %v1385, 2
        %v1655 = vsel %vm1614, %v1652, %v1654
        %v1656 = vrot.slane %v1386, 2
        %v1657 = vsel %vm1614, %v1654, %v1656
        %v1658 = vrot.slane %v1387, 2
        %v1659 = vsel %vm1614, %v1656, %v1658
        %v1660 = vrot.slane %v1388, 2
        %v1661 = vsel %vm1614, %v1658, %v1660
        %v1662 = vrot.slane %v1389, 2
        %v1663 = vsel %vm1614, %v1660, %v1662
        %v1664 = vrot.slane %v1390, 2
        %v1665 = vsel %vm1614, %v1662, %v1664
        %v1666 = vrot.slane %v1391, 2
        %v1667 = vsel %vm1614, %v1664, %v1666
        %v1668 = vrot.slane %v1392, 2
        %v1669 = vsel %vm1614, %v1666, %v1668
        %v1670 = vrot.slane %v1393, 2
        %v1671 = vsel %vm1614, %v1668, %v1670
        %v1672 = vrot.slane %v1394, 2
        %v1673 = vsel %vm1614, %v1670, %v1672
        %v1674 = vrot.slane %v1395, 2
        %v1675 = vsel %vm1614, %v1672, %v1674
        %v1676 = vrot.slane %v1396, 2
        %v1677 = vsel %vm1614, %v1674, %v1676
        %v1678 = vrot.slane %v1397, 2
        %v1679 = vsel %vm1614, %v1676, %v1678
        %v1680 = vrot.slane %v1398, 2
        %v1681 = vsel %vm1614, %v1678, %v1680
        %v1682 = vrot.slane %v1399, 2
        %v1683 = vsel %vm1614, %v1680, %v1682
        %v1684 = vrot.slane %v1400, 2
        %v1685 = vsel %vm1614, %v1682, %v1684
        %v1686 = vrot.slane %v1401, 2
        %v1687 = vsel %vm1614, %v1684, %v1686
        %v1688 = vrot.slane %v1402, 2
        %v1689 = vsel %vm1614, %v1686, %v1688
        %v1690 = vrot.slane %v1403, 2
        %v1691 = vsel %vm1614, %v1688, %v1690
        %v1692 = vrot.slane %v1404, 2
        %v1693 = vsel %vm1614, %v1690, %v1692
        %v1694 = vrot.slane %v1405, 2
        %v1695 = vsel %vm1614, %v1692, %v1694
        %v1696 = vrot.slane %v1406, 2
        %v1697 = vsel %vm1614, %v1694, %v1696
        %v1698 = vrot.slane %v1407, 2
        %v1699 = vsel %vm1614, %v1696, %v1698
        %v1700 = vrot.slane %v1408, 2
        %v1701 = vsel %vm1614, %v1698, %v1700
        %v1702 = vrot.slane %v1409, 2
        %v1703 = vsel %vm1614, %v1700, %v1702
        %v1704 = vrot.slane %v1410, 2
        %v1705 = vsel %vm1614, %v1702, %v1704
        %v1706 = vrot.slane %v1411, 2
        %v1707 = vsel %vm1614, %v1704, %v1706
        %v1708 = vrot.slane %v1412, 2
        %v1709 = vsel %vm1614, %v1706, %v1708
        %v1710 = vrot.slane %v1413, 2
        %v1711 = vsel %vm1614, %v1708, %v1710
        %v1761 = vpack.c.bf16 %v1365, %v1364
        %v1762 = vpack.c.bf16 %v1471, %v1469
        %v1763 = vpack.c.bf16 %v1617, %v1615
        %v1764 = vpack.c.bf16 %v1367, %v1366
        %v1765 = vpack.c.bf16 %v1475, %v1473
        %v1766 = vpack.c.bf16 %v1621, %v1619
        %v1767 = vpack.c.bf16 %v1369, %v1368
        %v1768 = vpack.c.bf16 %v1479, %v1477
        %v1769 = vpack.c.bf16 %v1625, %v1623
        %v1770 = vpack.c.bf16 %v1371, %v1370
        %v1771 = vpack.c.bf16 %v1483, %v1481
        %v1772 = vpack.c.bf16 %v1629, %v1627
        %v1773 = vpack.c.bf16 %v1373, %v1372
        %v1774 = vpack.c.bf16 %v1487, %v1485
        %v1775 = vpack.c.bf16 %v1633, %v1631
        %v1776 = vpack.c.bf16 %v1375, %v1374
        %v1777 = vpack.c.bf16 %v1491, %v1489
        %v1778 = vpack.c.bf16 %v1637, %v1635
        %v1779 = vpack.c.bf16 %v1377, %v1376
        %v1780 = vpack.c.bf16 %v1495, %v1493
        %v1781 = vpack.c.bf16 %v1641, %v1639
        %v1782 = vpack.c.bf16 %v1379, %v1378
        %v1783 = vpack.c.bf16 %v1499, %v1497
        %v1784 = vpack.c.bf16 %v1645, %v1643
        %v1785 = vpack.c.bf16 %v1381, %v1380
        %v1786 = vpack.c.bf16 %v1503, %v1501
        %v1787 = vpack.c.bf16 %v1649, %v1647
        %v1788 = vpack.c.bf16 %v1383, %v1382
        %v1789 = vpack.c.bf16 %v1507, %v1505
        %v1790 = vpack.c.bf16 %v1653, %v1651
        %v1791 = vpack.c.bf16 %v1385, %v1384
        %v1792 = vpack.c.bf16 %v1511, %v1509
        %v1793 = vpack.c.bf16 %v1657, %v1655
        %v1794 = vpack.c.bf16 %v1387, %v1386
        %v1795 = vpack.c.bf16 %v1515, %v1513
        %v1796 = vpack.c.bf16 %v1661, %v1659
        %v1797 = vpack.c.bf16 %v1389, %v1388
        %v1798 = vpack.c.bf16 %v1519, %v1517
        %v1799 = vpack.c.bf16 %v1665, %v1663
        %v1800 = vpack.c.bf16 %v1391, %v1390
        %v1801 = vpack.c.bf16 %v1523, %v1521
        %v1802 = vpack.c.bf16 %v1669, %v1667
        %v1803 = vpack.c.bf16 %v1393, %v1392
        %v1804 = vpack.c.bf16 %v1527, %v1525
        %v1805 = vpack.c.bf16 %v1673, %v1671
        %v1806 = vpack.c.bf16 %v1395, %v1394
        %v1807 = vpack.c.bf16 %v1531, %v1529
        %v1808 = vpack.c.bf16 %v1677, %v1675
        %v1809 = vpack.c.bf16 %v1397, %v1396
        %v1810 = vpack.c.bf16 %v1535, %v1533
        %v1811 = vpack.c.bf16 %v1681, %v1679
        %v1812 = vpack.c.bf16 %v1399, %v1398
        %v1813 = vpack.c.bf16 %v1539, %v1537
        %v1814 = vpack.c.bf16 %v1685, %v1683
        %v1815 = vpack.c.bf16 %v1401, %v1400
        %v1816 = vpack.c.bf16 %v1543, %v1541
        %v1817 = vpack.c.bf16 %v1689, %v1687
        %v1818 = vpack.c.bf16 %v1403, %v1402
        %v1819 = vpack.c.bf16 %v1547, %v1545
        %v1820 = vpack.c.bf16 %v1693, %v1691
        %v1821 = vpack.c.bf16 %v1405, %v1404
        %v1822 = vpack.c.bf16 %v1551, %v1549
        %v1823 = vpack.c.bf16 %v1697, %v1695
        %v1824 = vpack.c.bf16 %v1407, %v1406
        %v1825 = vpack.c.bf16 %v1555, %v1553
        %v1826 = vpack.c.bf16 %v1701, %v1699
        %v1827 = vpack.c.bf16 %v1409, %v1408
        %v1828 = vpack.c.bf16 %v1559, %v1557
        %v1829 = vpack.c.bf16 %v1705, %v1703
        %v1830 = vpack.c.bf16 %v1411, %v1410
        %v1831 = vpack.c.bf16 %v1563, %v1561
        %v1832 = vpack.c.bf16 %v1709, %v1707
        %v1833 = vpack.c.bf16 %v1412, %v1412
        %v1834 = vpack.c.bf16 %v1562, %v1562
        %v1835 = vpack.c.bf16 %v1711, %v1711
        %v1836 = vld [vmem:[#allocation7] sm:$0xf]
        %v1837 = vld [vmem:[#allocation7 + $0x4] sm:$0xf]
        %v1838 = vld [vmem:[#allocation7 + $0x8] sm:$0xf]
        %v1839 = vld [vmem:[#allocation7 + $0xc] sm:$0xf]
        %v1840 = vld [vmem:[#allocation7 + $0x10] sm:$0xf]
        %v1841 = vld [vmem:[#allocation7 + $0x14] sm:$0xf]
        %v1842 = vld [vmem:[#allocation7 + $0x18] sm:$0xf]
        %v1843 = vld [vmem:[#allocation7 + $0x1c] sm:$0xf]
        %v1844 = vld [vmem:[#allocation7 + $0x20] sm:$0xf]
        %v1845 = vld [vmem:[#allocation7 + $0x24] sm:$0xf]
        %v1846 = vld [vmem:[#allocation7 + $0x28] sm:$0xf]
        %v1847 = vld [vmem:[#allocation7 + $0x2c] sm:$0xf]
        %v1848 = vld [vmem:[#allocation7 + $0x30] sm:$0xf]
        %v1849 = vld [vmem:[#allocation7 + $0x34] sm:$0xf]
        %v1850 = vld [vmem:[#allocation7 + $0x38] sm:$0xf]
        %v1851 = vld [vmem:[#allocation7 + $0x3c] sm:$0xf]
        %v1852 = vld [vmem:[#allocation7 + $0x40] sm:$0xf]
        %v1853 = vld [vmem:[#allocation7 + $0x44] sm:$0xf]
        %v1854 = vld [vmem:[#allocation7 + $0x48] sm:$0xf]
        %v1855 = vld [vmem:[#allocation7 + $0x4c] sm:$0xf]
        %v1856 = vld [vmem:[#allocation7 + $0x50] sm:$0xf]
        %v1857 = vld [vmem:[#allocation7 + $0x54] sm:$0xf]
        %v1858 = vld [vmem:[#allocation7 + $0x58] sm:$0xf]
        %v1859 = vld [vmem:[#allocation7 + $0x5c] sm:$0xf]
        %v1860 = vld [vmem:[#allocation7 + $0x60] sm:$0xf]
        %v1861 = vld [vmem:[#allocation7 + $0x64] sm:$0xf]
        %v1862 = vld [vmem:[#allocation7 + $0x68] sm:$0xf]
        %v1863 = vld [vmem:[#allocation7 + $0x6c] sm:$0xf]
        %v1864 = vld [vmem:[#allocation7 + $0x70] sm:$0xf]
        %v1865 = vld [vmem:[#allocation7 + $0x74] sm:$0xf]
        %v1866 = vld [vmem:[#allocation7 + $0x78] sm:$0xf]
        %v1867 = vld [vmem:[#allocation7 + $0x7c] sm:$0xf]
        %v1868 = vld [vmem:[#allocation7 + $0x80] sm:$0xf]
        %v1869 = vld [vmem:[#allocation7 + $0x84] sm:$0xf]
        %v1870 = vld [vmem:[#allocation7 + $0x88] sm:$0xf]
        %v1871 = vld [vmem:[#allocation7 + $0x8c] sm:$0xf]
        %v1872 = vld [vmem:[#allocation7 + $0x90] sm:$0xf]
        %v1873 = vld [vmem:[#allocation7 + $0x94] sm:$0xf]
        %v1874 = vld [vmem:[#allocation7 + $0x98] sm:$0xf]
        %v1875 = vld [vmem:[#allocation7 + $0x9c] sm:$0xf]
        %v1876 = vld [vmem:[#allocation7 + $0xa0] sm:$0xf]
        %v1877 = vld [vmem:[#allocation7 + $0xa4] sm:$0xf]
        %v1878 = vld [vmem:[#allocation7 + $0xa8] sm:$0xf]
        %v1879 = vld [vmem:[#allocation7 + $0xac] sm:$0xf]
        %v1880 = vld [vmem:[#allocation7 + $0xb0] sm:$0xf]
        %v1881 = vld [vmem:[#allocation7 + $0xb4] sm:$0xf]
        %v1882 = vld [vmem:[#allocation7 + $0xb8] sm:$0xf]
        %v1883 = vld [vmem:[#allocation7 + $0xbc] sm:$0xf]
        %v1886 = vrot.slane %v1413, 1
        %v1887 = vsel %vm1468, %v1562, %v1886
        %v1888 = vrot.slane %v1414, 1
        %v1889 = vsel %vm1468, %v1886, %v1888
        %v1890 = vrot.slane %v1415, 1
        %v1891 = vsel %vm1468, %v1888, %v1890
        %v1898 = vrot.slane %v1414, 2
        %v1899 = vsel %vm1614, %v1710, %v1898
        %v1900 = vrot.slane %v1415, 2
        %v1901 = vsel %vm1614, %v1898, %v1900
        %v1902 = vrot.slane %v1416, 2
        %v1903 = vsel %vm1614, %v1900, %v1902
        %v1908 = vpack.c.bf16 %v1368, %v1367
        %v1909 = vpack.c.bf16 %v1477, %v1474
        %v1910 = vpack.c.bf16 %v1623, %v1620
        %v1911 = vpack.c.bf16 %v1370, %v1369
        %v1912 = vpack.c.bf16 %v1481, %v1479
        %v1913 = vpack.c.bf16 %v1627, %v1625
        %v1914 = vpack.c.bf16 %v1372, %v1371
        %v1915 = vpack.c.bf16 %v1485, %v1483
        %v1916 = vpack.c.bf16 %v1631, %v1629
        %v1917 = vpack.c.bf16 %v1374, %v1373
        %v1918 = vpack.c.bf16 %v1489, %v1487
        %v1919 = vpack.c.bf16 %v1635, %v1633
        %v1920 = vpack.c.bf16 %v1376, %v1375
        %v1921 = vpack.c.bf16 %v1493, %v1491
        %v1922 = vpack.c.bf16 %v1639, %v1637
        %v1923 = vpack.c.bf16 %v1378, %v1377
        %v1924 = vpack.c.bf16 %v1497, %v1495
        %v1925 = vpack.c.bf16 %v1643, %v1641
        %v1926 = vpack.c.bf16 %v1380, %v1379
        %v1927 = vpack.c.bf16 %v1501, %v1499
        %v1928 = vpack.c.bf16 %v1647, %v1645
        %v1929 = vpack.c.bf16 %v1382, %v1381
        %v1930 = vpack.c.bf16 %v1505, %v1503
        %v1931 = vpack.c.bf16 %v1651, %v1649
        %v1932 = vpack.c.bf16 %v1384, %v1383
        %v1933 = vpack.c.bf16 %v1509, %v1507
        %v1934 = vpack.c.bf16 %v1655, %v1653
        %v1935 = vpack.c.bf16 %v1386, %v1385
        %v1936 = vpack.c.bf16 %v1513, %v1511
        %v1937 = vpack.c.bf16 %v1659, %v1657
        %v1938 = vpack.c.bf16 %v1388, %v1387
        %v1939 = vpack.c.bf16 %v1517, %v1515
        %v1940 = vpack.c.bf16 %v1663, %v1661
        %v1941 = vpack.c.bf16 %v1390, %v1389
        %v1942 = vpack.c.bf16 %v1521, %v1519
        %v1943 = vpack.c.bf16 %v1667, %v1665
        %v1944 = vpack.c.bf16 %v1392, %v1391
        %v1945 = vpack.c.bf16 %v1525, %v1523
        %v1946 = vpack.c.bf16 %v1671, %v1669
        %v1947 = vpack.c.bf16 %v1394, %v1393
        %v1948 = vpack.c.bf16 %v1529, %v1527
        %v1949 = vpack.c.bf16 %v1675, %v1673
        %v1950 = vpack.c.bf16 %v1396, %v1395
        %v1951 = vpack.c.bf16 %v1533, %v1531
        %v1952 = vpack.c.bf16 %v1679, %v1677
        %v1953 = vpack.c.bf16 %v1398, %v1397
        %v1954 = vpack.c.bf16 %v1537, %v1535
        %v1955 = vpack.c.bf16 %v1683, %v1681
        %v1956 = vpack.c.bf16 %v1400, %v1399
        %v1957 = vpack.c.bf16 %v1541, %v1539
        %v1958 = vpack.c.bf16 %v1687, %v1685
        %v1959 = vpack.c.bf16 %v1402, %v1401
        %v1960 = vpack.c.bf16 %v1545, %v1543
        %v1961 = vpack.c.bf16 %v1691, %v1689
        %v1962 = vpack.c.bf16 %v1404, %v1403
        %v1963 = vpack.c.bf16 %v1549, %v1547
        %v1964 = vpack.c.bf16 %v1695, %v1693
        %v1965 = vpack.c.bf16 %v1406, %v1405
        %v1966 = vpack.c.bf16 %v1553, %v1551
        %v1967 = vpack.c.bf16 %v1699, %v1697
        %v1968 = vpack.c.bf16 %v1408, %v1407
        %v1969 = vpack.c.bf16 %v1557, %v1555
        %v1970 = vpack.c.bf16 %v1703, %v1701
        %v1971 = vpack.c.bf16 %v1410, %v1409
        %v1972 = vpack.c.bf16 %v1561, %v1559
        %v1973 = vpack.c.bf16 %v1707, %v1705
        %v1974 = vpack.c.bf16 %v1412, %v1411
        %v1975 = vpack.c.bf16 %v1887, %v1563
        %v1976 = vpack.c.bf16 %v1711, %v1709
        %v1977 = vpack.c.bf16 %v1414, %v1413
        %v1978 = vpack.c.bf16 %v1891, %v1889
        %v1979 = vpack.c.bf16 %v1901, %v1899
        %v1980 = vpack.c.bf16 %v1415, %v1415
        %v1981 = vpack.c.bf16 %v1890, %v1890
        %v1982 = vpack.c.bf16 %v1903, %v1903
        %s1983 = scalar_lea.vmem [#allocation7], 192
        %v1984 = vld [vmem:[%s1983] sm:$0xf]
        %v1985 = vld [vmem:[%s1983 + $0x4] sm:$0xf]
        %v1986 = vld [vmem:[%s1983 + $0x8] sm:$0xf]
        %v1987 = vld [vmem:[%s1983 + $0xc] sm:$0xf]
        %v1988 = vld [vmem:[%s1983 + $0x10] sm:$0xf]
        %v1989 = vld [vmem:[%s1983 + $0x14] sm:$0xf]
        %v1990 = vld [vmem:[%s1983 + $0x18] sm:$0xf]
        %v1991 = vld [vmem:[%s1983 + $0x1c] sm:$0xf]
        %v1992 = vld [vmem:[%s1983 + $0x20] sm:$0xf]
        %v1993 = vld [vmem:[%s1983 + $0x24] sm:$0xf]
        %v1994 = vld [vmem:[%s1983 + $0x28] sm:$0xf]
        %v1995 = vld [vmem:[%s1983 + $0x2c] sm:$0xf]
        %v1996 = vld [vmem:[%s1983 + $0x30] sm:$0xf]
        %v1997 = vld [vmem:[%s1983 + $0x34] sm:$0xf]
        %v1998 = vld [vmem:[%s1983 + $0x38] sm:$0xf]
        %v1999 = vld [vmem:[%s1983 + $0x3c] sm:$0xf]
        %v2000 = vld [vmem:[%s1983 + $0x40] sm:$0xf]
        %v2001 = vld [vmem:[%s1983 + $0x44] sm:$0xf]
        %v2002 = vld [vmem:[%s1983 + $0x48] sm:$0xf]
        %v2003 = vld [vmem:[%s1983 + $0x4c] sm:$0xf]
        %v2004 = vld [vmem:[%s1983 + $0x50] sm:$0xf]
        %v2005 = vld [vmem:[%s1983 + $0x54] sm:$0xf]
        %v2006 = vld [vmem:[%s1983 + $0x58] sm:$0xf]
        %v2007 = vld [vmem:[%s1983 + $0x5c] sm:$0xf]
        %v2008 = vld [vmem:[%s1983 + $0x60] sm:$0xf]
        %v2009 = vld [vmem:[%s1983 + $0x64] sm:$0xf]
        %v2010 = vld [vmem:[%s1983 + $0x68] sm:$0xf]
        %v2011 = vld [vmem:[%s1983 + $0x6c] sm:$0xf]
        %v2012 = vld [vmem:[%s1983 + $0x70] sm:$0xf]
        %v2013 = vld [vmem:[%s1983 + $0x74] sm:$0xf]
        %v2014 = vld [vmem:[%s1983 + $0x78] sm:$0xf]
        %v2015 = vld [vmem:[%s1983 + $0x7c] sm:$0xf]
        %v2016 = vld [vmem:[%s1983 + $0x80] sm:$0xf]
        %v2017 = vld [vmem:[%s1983 + $0x84] sm:$0xf]
        %v2018 = vld [vmem:[%s1983 + $0x88] sm:$0xf]
        %v2019 = vld [vmem:[%s1983 + $0x8c] sm:$0xf]
        %v2020 = vld [vmem:[%s1983 + $0x90] sm:$0xf]
        %v2021 = vld [vmem:[%s1983 + $0x94] sm:$0xf]
        %v2022 = vld [vmem:[%s1983 + $0x98] sm:$0xf]
        %v2023 = vld [vmem:[%s1983 + $0x9c] sm:$0xf]
        %v2024 = vld [vmem:[%s1983 + $0xa0] sm:$0xf]
        %v2025 = vld [vmem:[%s1983 + $0xa4] sm:$0xf]
        %v2026 = vld [vmem:[%s1983 + $0xa8] sm:$0xf]
        %v2027 = vld [vmem:[%s1983 + $0xac] sm:$0xf]
        %v2028 = vld [vmem:[%s1983 + $0xb0] sm:$0xf]
        %v2029 = vld [vmem:[%s1983 + $0xb4] sm:$0xf]
        %v2030 = vld [vmem:[%s1983 + $0xb8] sm:$0xf]
        %v2031 = vld [vmem:[%s1983 + $0xbc] sm:$0xf]
        %vm2032 = vsmask.f32 4352
        %v2034 = vshrl.u32 %v1908, 16
        %v2036 = vrot.slane %v2034, 3
        %v2037 = vshll.u32 %v1908, 16
        %v2039 = vrot.slane %v2037, 4
        %v2040 = vor.u32 %v2036, %v2039
        %v2042 = vshrl.u32 %v1911, 16
        %v2044 = vrot.slane %v2042, 3
        %v2045 = vshll.u32 %v1911, 16
        %v2047 = vrot.slane %v2045, 4
        %v2048 = vor.u32 %v2044, %v2047
        %v2049 = vsel %vm2032, %v2040, %v2048
        %v2051 = vshrl.u32 %v1909, 16
        %v2053 = vrot.slane %v2051, 3
        %v2054 = vshll.u32 %v1909, 16
        %v2056 = vrot.slane %v2054, 4
        %v2057 = vor.u32 %v2053, %v2056
        %v2059 = vshrl.u32 %v1912, 16
        %v2061 = vrot.slane %v2059, 3
        %v2062 = vshll.u32 %v1912, 16
        %v2064 = vrot.slane %v2062, 4
        %v2065 = vor.u32 %v2061, %v2064
        %v2066 = vsel %vm2032, %v2057, %v2065
        %v2068 = vshrl.u32 %v1910, 16
        %v2070 = vrot.slane %v2068, 3
        %v2071 = vshll.u32 %v1910, 16
        %v2073 = vrot.slane %v2071, 4
        %v2074 = vor.u32 %v2070, %v2073
        %v2076 = vshrl.u32 %v1913, 16
        %v2078 = vrot.slane %v2076, 3
        %v2079 = vshll.u32 %v1913, 16
        %v2081 = vrot.slane %v2079, 4
        %v2082 = vor.u32 %v2078, %v2081
        %v2083 = vsel %vm2032, %v2074, %v2082
        %v2085 = vshrl.u32 %v1914, 16
        %v2087 = vrot.slane %v2085, 3
        %v2088 = vshll.u32 %v1914, 16
        %v2090 = vrot.slane %v2088, 4
        %v2091 = vor.u32 %v2087, %v2090
        %v2092 = vsel %vm2032, %v2048, %v2091
        %v2094 = vshrl.u32 %v1915, 16
        %v2096 = vrot.slane %v2094, 3
        %v2097 = vshll.u32 %v1915, 16
        %v2099 = vrot.slane %v2097, 4
        %v2100 = vor.u32 %v2096, %v2099
        %v2101 = vsel %vm2032, %v2065, %v2100
        %v2103 = vshrl.u32 %v1916, 16
        %v2105 = vrot.slane %v2103, 3
        %v2106 = vshll.u32 %v1916, 16
        %v2108 = vrot.slane %v2106, 4
        %v2109 = vor.u32 %v2105, %v2108
        %v2110 = vsel %vm2032, %v2082, %v2109
        %v2112 = vshrl.u32 %v1917, 16
        %v2114 = vrot.slane %v2112, 3
        %v2115 = vshll.u32 %v1917, 16
        %v2117 = vrot.slane %v2115, 4
        %v2118 = vor.u32 %v2114, %v2117
        %v2119 = vsel %vm2032, %v2091, %v2118
        %v2121 = vshrl.u32 %v1918, 16
        %v2123 = vrot.slane %v2121, 3
        %v2124 = vshll.u32 %v1918, 16
        %v2126 = vrot.slane %v2124, 4
        %v2127 = vor.u32 %v2123, %v2126
        %v2128 = vsel %vm2032, %v2100, %v2127
        %v2130 = vshrl.u32 %v1919, 16
        %v2132 = vrot.slane %v2130, 3
        %v2133 = vshll.u32 %v1919, 16
        %v2135 = vrot.slane %v2133, 4
        %v2136 = vor.u32 %v2132, %v2135
        %v2137 = vsel %vm2032, %v2109, %v2136
        %v2139 = vshrl.u32 %v1920, 16
        %v2141 = vrot.slane %v2139, 3
        %v2142 = vshll.u32 %v1920, 16
        %v2144 = vrot.slane %v2142, 4
        %v2145 = vor.u32 %v2141, %v2144
        %v2146 = vsel %vm2032, %v2118, %v2145
        %v2148 = vshrl.u32 %v1921, 16
        %v2150 = vrot.slane %v2148, 3
        %v2151 = vshll.u32 %v1921, 16
        %v2153 = vrot.slane %v2151, 4
        %v2154 = vor.u32 %v2150, %v2153
        %v2155 = vsel %vm2032, %v2127, %v2154
        %v2157 = vshrl.u32 %v1922, 16
        %v2159 = vrot.slane %v2157, 3
        %v2160 = vshll.u32 %v1922, 16
        %v2162 = vrot.slane %v2160, 4
        %v2163 = vor.u32 %v2159, %v2162
        %v2164 = vsel %vm2032, %v2136, %v2163
        %v2166 = vshrl.u32 %v1923, 16
        %v2168 = vrot.slane %v2166, 3
        %v2169 = vshll.u32 %v1923, 16
        %v2171 = vrot.slane %v2169, 4
        %v2172 = vor.u32 %v2168, %v2171
        %v2173 = vsel %vm2032, %v2145, %v2172
        %v2175 = vshrl.u32 %v1924, 16
        %v2177 = vrot.slane %v2175, 3
        %v2178 = vshll.u32 %v1924, 16
        %v2180 = vrot.slane %v2178, 4
        %v2181 = vor.u32 %v2177, %v2180
        %v2182 = vsel %vm2032, %v2154, %v2181
        %v2184 = vshrl.u32 %v1925, 16
        %v2186 = vrot.slane %v2184, 3
        %v2187 = vshll.u32 %v1925, 16
        %v2189 = vrot.slane %v2187, 4
        %v2190 = vor.u32 %v2186, %v2189
        %v2191 = vsel %vm2032, %v2163, %v2190
        %v2193 = vshrl.u32 %v1926, 16
        %v2195 = vrot.slane %v2193, 3
        %v2196 = vshll.u32 %v1926, 16
        %v2198 = vrot.slane %v2196, 4
        %v2199 = vor.u32 %v2195, %v2198
        %v2200 = vsel %vm2032, %v2172, %v2199
        %v2202 = vshrl.u32 %v1927, 16
        %v2204 = vrot.slane %v2202, 3
        %v2205 = vshll.u32 %v1927, 16
        %v2207 = vrot.slane %v2205, 4
        %v2208 = vor.u32 %v2204, %v2207
        %v2209 = vsel %vm2032, %v2181, %v2208
        %v2211 = vshrl.u32 %v1928, 16
        %v2213 = vrot.slane %v2211, 3
        %v2214 = vshll.u32 %v1928, 16
        %v2216 = vrot.slane %v2214, 4
        %v2217 = vor.u32 %v2213, %v2216
        %v2218 = vsel %vm2032, %v2190, %v2217
        %v2220 = vshrl.u32 %v1929, 16
        %v2222 = vrot.slane %v2220, 3
        %v2223 = vshll.u32 %v1929, 16
        %v2225 = vrot.slane %v2223, 4
        %v2226 = vor.u32 %v2222, %v2225
        %v2227 = vsel %vm2032, %v2199, %v2226
        %v2229 = vshrl.u32 %v1930, 16
        %v2231 = vrot.slane %v2229, 3
        %v2232 = vshll.u32 %v1930, 16
        %v2234 = vrot.slane %v2232, 4
        %v2235 = vor.u32 %v2231, %v2234
        %v2236 = vsel %vm2032, %v2208, %v2235
        %v2238 = vshrl.u32 %v1931, 16
        %v2240 = vrot.slane %v2238, 3
        %v2241 = vshll.u32 %v1931, 16
        %v2243 = vrot.slane %v2241, 4
        %v2244 = vor.u32 %v2240, %v2243
        %v2245 = vsel %vm2032, %v2217, %v2244
        %v2247 = vshrl.u32 %v1932, 16
        %v2249 = vrot.slane %v2247, 3
        %v2250 = vshll.u32 %v1932, 16
        %v2252 = vrot.slane %v2250, 4
        %v2253 = vor.u32 %v2249, %v2252
        %v2254 = vsel %vm2032, %v2226, %v2253
        %v2256 = vshrl.u32 %v1933, 16
        %v2258 = vrot.slane %v2256, 3
        %v2259 = vshll.u32 %v1933, 16
        %v2261 = vrot.slane %v2259, 4
        %v2262 = vor.u32 %v2258, %v2261
        %v2263 = vsel %vm2032, %v2235, %v2262
        %v2265 = vshrl.u32 %v1934, 16
        %v2267 = vrot.slane %v2265, 3
        %v2268 = vshll.u32 %v1934, 16
        %v2270 = vrot.slane %v2268, 4
        %v2271 = vor.u32 %v2267, %v2270
        %v2272 = vsel %vm2032, %v2244, %v2271
        %v2274 = vshrl.u32 %v1935, 16
        %v2276 = vrot.slane %v2274, 3
        %v2277 = vshll.u32 %v1935, 16
        %v2279 = vrot.slane %v2277, 4
        %v2280 = vor.u32 %v2276, %v2279
        %v2281 = vsel %vm2032, %v2253, %v2280
        %v2283 = vshrl.u32 %v1936, 16
        %v2285 = vrot.slane %v2283, 3
        %v2286 = vshll.u32 %v1936, 16
        %v2288 = vrot.slane %v2286, 4
        %v2289 = vor.u32 %v2285, %v2288
        %v2290 = vsel %vm2032, %v2262, %v2289
        %v2292 = vshrl.u32 %v1937, 16
        %v2294 = vrot.slane %v2292, 3
        %v2295 = vshll.u32 %v1937, 16
        %v2297 = vrot.slane %v2295, 4
        %v2298 = vor.u32 %v2294, %v2297
        %v2299 = vsel %vm2032, %v2271, %v2298
        %v2301 = vshrl.u32 %v1938, 16
        %v2303 = vrot.slane %v2301, 3
        %v2304 = vshll.u32 %v1938, 16
        %v2306 = vrot.slane %v2304, 4
        %v2307 = vor.u32 %v2303, %v2306
        %v2308 = vsel %vm2032, %v2280, %v2307
        %v2310 = vshrl.u32 %v1939, 16
        %v2312 = vrot.slane %v2310, 3
        %v2313 = vshll.u32 %v1939, 16
        %v2315 = vrot.slane %v2313, 4
        %v2316 = vor.u32 %v2312, %v2315
        %v2317 = vsel %vm2032, %v2289, %v2316
        %v2319 = vshrl.u32 %v1940, 16
        %v2321 = vrot.slane %v2319, 3
        %v2322 = vshll.u32 %v1940, 16
        %v2324 = vrot.slane %v2322, 4
        %v2325 = vor.u32 %v2321, %v2324
        %v2326 = vsel %vm2032, %v2298, %v2325
        %v2328 = vshrl.u32 %v1941, 16
        %v2330 = vrot.slane %v2328, 3
        %v2331 = vshll.u32 %v1941, 16
        %v2333 = vrot.slane %v2331, 4
        %v2334 = vor.u32 %v2330, %v2333
        %v2335 = vsel %vm2032, %v2307, %v2334
        %v2337 = vshrl.u32 %v1942, 16
        %v2339 = vrot.slane %v2337, 3
        %v2340 = vshll.u32 %v1942, 16
        %v2342 = vrot.slane %v2340, 4
        %v2343 = vor.u32 %v2339, %v2342
        %v2344 = vsel %vm2032, %v2316, %v2343
        %v2346 = vshrl.u32 %v1943, 16
        %v2348 = vrot.slane %v2346, 3
        %v2349 = vshll.u32 %v1943, 16
        %v2351 = vrot.slane %v2349, 4
        %v2352 = vor.u32 %v2348, %v2351
        %v2353 = vsel %vm2032, %v2325, %v2352
        %v2355 = vshrl.u32 %v1944, 16
        %v2357 = vrot.slane %v2355, 3
        %v2358 = vshll.u32 %v1944, 16
        %v2360 = vrot.slane %v2358, 4
        %v2361 = vor.u32 %v2357, %v2360
        %v2362 = vsel %vm2032, %v2334, %v2361
        %v2364 = vshrl.u32 %v1945, 16
        %v2366 = vrot.slane %v2364, 3
        %v2367 = vshll.u32 %v1945, 16
        %v2369 = vrot.slane %v2367, 4
        %v2370 = vor.u32 %v2366, %v2369
        %v2371 = vsel %vm2032, %v2343, %v2370
        %v2373 = vshrl.u32 %v1946, 16
        %v2375 = vrot.slane %v2373, 3
        %v2376 = vshll.u32 %v1946, 16
        %v2378 = vrot.slane %v2376, 4
        %v2379 = vor.u32 %v2375, %v2378
        %v2380 = vsel %vm2032, %v2352, %v2379
        %v2382 = vshrl.u32 %v1947, 16
        %v2384 = vrot.slane %v2382, 3
        %v2385 = vshll.u32 %v1947, 16
        %v2387 = vrot.slane %v2385, 4
        %v2388 = vor.u32 %v2384, %v2387
        %v2389 = vsel %vm2032, %v2361, %v2388
        %v2391 = vshrl.u32 %v1948, 16
        %v2393 = vrot.slane %v2391, 3
        %v2394 = vshll.u32 %v1948, 16
        %v2396 = vrot.slane %v2394, 4
        %v2397 = vor.u32 %v2393, %v2396
        %v2398 = vsel %vm2032, %v2370, %v2397
        %v2400 = vshrl.u32 %v1949, 16
        %v2402 = vrot.slane %v2400, 3
        %v2403 = vshll.u32 %v1949, 16
        %v2405 = vrot.slane %v2403, 4
        %v2406 = vor.u32 %v2402, %v2405
        %v2407 = vsel %vm2032, %v2379, %v2406
        %v2409 = vshrl.u32 %v1950, 16
        %v2411 = vrot.slane %v2409, 3
        %v2412 = vshll.u32 %v1950, 16
        %v2414 = vrot.slane %v2412, 4
        %v2415 = vor.u32 %v2411, %v2414
        %v2416 = vsel %vm2032, %v2388, %v2415
        %v2418 = vshrl.u32 %v1951, 16
        %v2420 = vrot.slane %v2418, 3
        %v2421 = vshll.u32 %v1951, 16
        %v2423 = vrot.slane %v2421, 4
        %v2424 = vor.u32 %v2420, %v2423
        %v2425 = vsel %vm2032, %v2397, %v2424
        %v2427 = vshrl.u32 %v1952, 16
        %v2429 = vrot.slane %v2427, 3
        %v2430 = vshll.u32 %v1952, 16
        %v2432 = vrot.slane %v2430, 4
        %v2433 = vor.u32 %v2429, %v2432
        %v2434 = vsel %vm2032, %v2406, %v2433
        %v2436 = vshrl.u32 %v1953, 16
        %v2438 = vrot.slane %v2436, 3
        %v2439 = vshll.u32 %v1953, 16
        %v2441 = vrot.slane %v2439, 4
        %v2442 = vor.u32 %v2438, %v2441
        %v2443 = vsel %vm2032, %v2415, %v2442
        %v2445 = vshrl.u32 %v1954, 16
        %v2447 = vrot.slane %v2445, 3
        %v2448 = vshll.u32 %v1954, 16
        %v2450 = vrot.slane %v2448, 4
        %v2451 = vor.u32 %v2447, %v2450
        %v2452 = vsel %vm2032, %v2424, %v2451
        %v2454 = vshrl.u32 %v1955, 16
        %v2456 = vrot.slane %v2454, 3
        %v2457 = vshll.u32 %v1955, 16
        %v2459 = vrot.slane %v2457, 4
        %v2460 = vor.u32 %v2456, %v2459
        %v2461 = vsel %vm2032, %v2433, %v2460
        %v2463 = vshrl.u32 %v1956, 16
        %v2465 = vrot.slane %v2463, 3
        %v2466 = vshll.u32 %v1956, 16
        %v2468 = vrot.slane %v2466, 4
        %v2469 = vor.u32 %v2465, %v2468
        %v2470 = vsel %vm2032, %v2442, %v2469
        %v2472 = vshrl.u32 %v1957, 16
        %v2474 = vrot.slane %v2472, 3
        %v2475 = vshll.u32 %v1957, 16
        %v2477 = vrot.slane %v2475, 4
        %v2478 = vor.u32 %v2474, %v2477
        %v2479 = vsel %vm2032, %v2451, %v2478
        %v2481 = vshrl.u32 %v1958, 16
        %v2483 = vrot.slane %v2481, 3
        %v2484 = vshll.u32 %v1958, 16
        %v2486 = vrot.slane %v2484, 4
        %v2487 = vor.u32 %v2483, %v2486
        %v2488 = vsel %vm2032, %v2460, %v2487
        %v2490 = vshrl.u32 %v1959, 16
        %v2492 = vrot.slane %v2490, 3
        %v2493 = vshll.u32 %v1959, 16
        %v2495 = vrot.slane %v2493, 4
        %v2496 = vor.u32 %v2492, %v2495
        %v2497 = vsel %vm2032, %v2469, %v2496
        %v2499 = vshrl.u32 %v1960, 16
        %v2501 = vrot.slane %v2499, 3
        %v2502 = vshll.u32 %v1960, 16
        %v2504 = vrot.slane %v2502, 4
        %v2505 = vor.u32 %v2501, %v2504
        %v2506 = vsel %vm2032, %v2478, %v2505
        %v2508 = vshrl.u32 %v1961, 16
        %v2510 = vrot.slane %v2508, 3
        %v2511 = vshll.u32 %v1961, 16
        %v2513 = vrot.slane %v2511, 4
        %v2514 = vor.u32 %v2510, %v2513
        %v2515 = vsel %vm2032, %v2487, %v2514
        %v2517 = vshrl.u32 %v1962, 16
        %v2519 = vrot.slane %v2517, 3
        %v2520 = vshll.u32 %v1962, 16
        %v2522 = vrot.slane %v2520, 4
        %v2523 = vor.u32 %v2519, %v2522
        %v2524 = vsel %vm2032, %v2496, %v2523
        %v2526 = vshrl.u32 %v1963, 16
        %v2528 = vrot.slane %v2526, 3
        %v2529 = vshll.u32 %v1963, 16
        %v2531 = vrot.slane %v2529, 4
        %v2532 = vor.u32 %v2528, %v2531
        %v2533 = vsel %vm2032, %v2505, %v2532
        %v2535 = vshrl.u32 %v1964, 16
        %v2537 = vrot.slane %v2535, 3
        %v2538 = vshll.u32 %v1964, 16
        %v2540 = vrot.slane %v2538, 4
        %v2541 = vor.u32 %v2537, %v2540
        %v2542 = vsel %vm2032, %v2514, %v2541
        %v2544 = vshrl.u32 %v1965, 16
        %v2546 = vrot.slane %v2544, 3
        %v2547 = vshll.u32 %v1965, 16
        %v2549 = vrot.slane %v2547, 4
        %v2550 = vor.u32 %v2546, %v2549
        %v2551 = vsel %vm2032, %v2523, %v2550
        %v2553 = vshrl.u32 %v1966, 16
        %v2555 = vrot.slane %v2553, 3
        %v2556 = vshll.u32 %v1966, 16
        %v2558 = vrot.slane %v2556, 4
        %v2559 = vor.u32 %v2555, %v2558
        %v2560 = vsel %vm2032, %v2532, %v2559
        %v2562 = vshrl.u32 %v1967, 16
        %v2564 = vrot.slane %v2562, 3
        %v2565 = vshll.u32 %v1967, 16
        %v2567 = vrot.slane %v2565, 4
        %v2568 = vor.u32 %v2564, %v2567
        %v2569 = vsel %vm2032, %v2541, %v2568
        %v2571 = vshrl.u32 %v1968, 16
        %v2573 = vrot.slane %v2571, 3
        %v2574 = vshll.u32 %v1968, 16
        %v2576 = vrot.slane %v2574, 4
        %v2577 = vor.u32 %v2573, %v2576
        %v2578 = vsel %vm2032, %v2550, %v2577
        %v2580 = vshrl.u32 %v1969, 16
        %v2582 = vrot.slane %v2580, 3
        %v2583 = vshll.u32 %v1969, 16
        %v2585 = vrot.slane %v2583, 4
        %v2586 = vor.u32 %v2582, %v2585
        %v2587 = vsel %vm2032, %v2559, %v2586
        %v2589 = vshrl.u32 %v1970, 16
        %v2591 = vrot.slane %v2589, 3
        %v2592 = vshll.u32 %v1970, 16
        %v2594 = vrot.slane %v2592, 4
        %v2595 = vor.u32 %v2591, %v2594
        %v2596 = vsel %vm2032, %v2568, %v2595
        %v2598 = vshrl.u32 %v1971, 16
        %v2600 = vrot.slane %v2598, 3
        %v2601 = vshll.u32 %v1971, 16
        %v2603 = vrot.slane %v2601, 4
        %v2604 = vor.u32 %v2600, %v2603
        %v2605 = vsel %vm2032, %v2577, %v2604
        %v2607 = vshrl.u32 %v1972, 16
        %v2609 = vrot.slane %v2607, 3
        %v2610 = vshll.u32 %v1972, 16
        %v2612 = vrot.slane %v2610, 4
        %v2613 = vor.u32 %v2609, %v2612
        %v2614 = vsel %vm2032, %v2586, %v2613
        %v2616 = vshrl.u32 %v1973, 16
        %v2618 = vrot.slane %v2616, 3
        %v2619 = vshll.u32 %v1973, 16
        %v2621 = vrot.slane %v2619, 4
        %v2622 = vor.u32 %v2618, %v2621
        %v2623 = vsel %vm2032, %v2595, %v2622
        %v2625 = vshrl.u32 %v1974, 16
        %v2627 = vrot.slane %v2625, 3
        %v2628 = vshll.u32 %v1974, 16
        %v2630 = vrot.slane %v2628, 4
        %v2631 = vor.u32 %v2627, %v2630
        %v2632 = vsel %vm2032, %v2604, %v2631
        %v2634 = vshrl.u32 %v1975, 16
        %v2636 = vrot.slane %v2634, 3
        %v2637 = vshll.u32 %v1975, 16
        %v2639 = vrot.slane %v2637, 4
        %v2640 = vor.u32 %v2636, %v2639
        %v2641 = vsel %vm2032, %v2613, %v2640
        %v2643 = vshrl.u32 %v1976, 16
        %v2645 = vrot.slane %v2643, 3
        %v2646 = vshll.u32 %v1976, 16
        %v2648 = vrot.slane %v2646, 4
        %v2649 = vor.u32 %v2645, %v2648
        %v2650 = vsel %vm2032, %v2622, %v2649
        %v2652 = vshrl.u32 %v1977, 16
        %v2654 = vrot.slane %v2652, 3
        %v2655 = vshll.u32 %v1977, 16
        %v2657 = vrot.slane %v2655, 4
        %v2658 = vor.u32 %v2654, %v2657
        %v2659 = vsel %vm2032, %v2631, %v2658
        %v2661 = vshrl.u32 %v1978, 16
        %v2663 = vrot.slane %v2661, 3
        %v2664 = vshll.u32 %v1978, 16
        %v2666 = vrot.slane %v2664, 4
        %v2667 = vor.u32 %v2663, %v2666
        %v2668 = vsel %vm2032, %v2640, %v2667
        %v2670 = vshrl.u32 %v1979, 16
        %v2672 = vrot.slane %v2670, 3
        %v2673 = vshll.u32 %v1979, 16
        %v2675 = vrot.slane %v2673, 4
        %v2676 = vor.u32 %v2672, %v2675
        %v2677 = vsel %vm2032, %v2649, %v2676
        %v2679 = vshrl.u32 %v1980, 16
        %v2681 = vrot.slane %v2679, 3
        %v2682 = vshll.u32 %v1980, 16
        %v2684 = vrot.slane %v2682, 4
        %v2685 = vor.u32 %v2681, %v2684
        %v2686 = vsel %vm2032, %v2658, %v2685
        %v2688 = vshrl.u32 %v1981, 16
        %v2690 = vrot.slane %v2688, 3
        %v2691 = vshll.u32 %v1981, 16
        %v2693 = vrot.slane %v2691, 4
        %v2694 = vor.u32 %v2690, %v2693
        %v2695 = vsel %vm2032, %v2667, %v2694
        %v2697 = vshrl.u32 %v1982, 16
        %v2699 = vrot.slane %v2697, 3
        %v2700 = vshll.u32 %v1982, 16
        %v2702 = vrot.slane %v2700, 4
        %v2703 = vor.u32 %v2699, %v2702
        %v2704 = vsel %vm2032, %v2676, %v2703
        %v2825 = vunpack.c.l.b16 %v1984
        %v2826 = vunpack.c.l.b16 %v1985
        %v2827 = vunpack.c.l.b16 %v1986
        %v2828 = vunpack.c.l.b16 %v1987
        %v2829 = vunpack.c.l.b16 %v1988
        %v2830 = vunpack.c.l.b16 %v1989
        %v2831 = vunpack.c.l.b16 %v1990
        %v2832 = vunpack.c.l.b16 %v1991
        %v2833 = vunpack.c.l.b16 %v1992
        %v2834 = vunpack.c.l.b16 %v1993
        %v2835 = vunpack.c.l.b16 %v1994
        %v2836 = vunpack.c.l.b16 %v1995
        %v2837 = vunpack.c.l.b16 %v1996
        %v2838 = vunpack.c.l.b16 %v1997
        %v2839 = vunpack.c.l.b16 %v1998
        %v2840 = vunpack.c.l.b16 %v1999
        %v2841 = vunpack.c.l.b16 %v2000
        %v2842 = vunpack.c.l.b16 %v2001
        %v2843 = vunpack.c.l.b16 %v2002
        %v2844 = vunpack.c.l.b16 %v2003
        %v2845 = vunpack.c.l.b16 %v2004
        %v2846 = vunpack.c.l.b16 %v2005
        %v2847 = vunpack.c.l.b16 %v2006
        %v2848 = vunpack.c.l.b16 %v2007
        %v2849 = vunpack.c.l.b16 %v2008
        %v2850 = vunpack.c.l.b16 %v2009
        %v2851 = vunpack.c.l.b16 %v2010
        %v2852 = vunpack.c.l.b16 %v2011
        %v2853 = vunpack.c.l.b16 %v2012
        %v2854 = vunpack.c.l.b16 %v2013
        %v2855 = vunpack.c.l.b16 %v2014
        %v2856 = vunpack.c.l.b16 %v2015
        %v2857 = vunpack.c.l.b16 %v2016
        %v2858 = vunpack.c.l.b16 %v2017
        %v2859 = vunpack.c.l.b16 %v2018
        %v2860 = vunpack.c.l.b16 %v2019
        %v2861 = vunpack.c.l.b16 %v2020
        %v2862 = vunpack.c.l.b16 %v2021
        %v2863 = vunpack.c.l.b16 %v2022
        %v2864 = vunpack.c.l.b16 %v2023
        %v2865 = vunpack.c.l.b16 %v2024
        %v2866 = vunpack.c.l.b16 %v2025
        %v2867 = vunpack.c.l.b16 %v2026
        %v2868 = vunpack.c.l.b16 %v2027
        %v2869 = vunpack.c.l.b16 %v2028
        %v2870 = vunpack.c.l.b16 %v2029
        %v2871 = vunpack.c.l.b16 %v2030
        %v2872 = vunpack.c.l.b16 %v2031
        %v2873 = vpack.c.b16 %v2826, %v2825
        %v2874 = vpack.c.b16 %v2828, %v2827
        %v2875 = vpack.c.b16 %v2830, %v2829
        %v2876 = vpack.c.b16 %v2832, %v2831
        %v2877 = vpack.c.b16 %v2834, %v2833
        %v2878 = vpack.c.b16 %v2836, %v2835
        %v2879 = vpack.c.b16 %v2838, %v2837
        %v2880 = vpack.c.b16 %v2840, %v2839
        %v2881 = vpack.c.b16 %v2842, %v2841
        %v2882 = vpack.c.b16 %v2844, %v2843
        %v2883 = vpack.c.b16 %v2846, %v2845
        %v2884 = vpack.c.b16 %v2848, %v2847
        %v2885 = vpack.c.b16 %v2850, %v2849
        %v2886 = vpack.c.b16 %v2852, %v2851
        %v2887 = vpack.c.b16 %v2854, %v2853
        %v2888 = vpack.c.b16 %v2856, %v2855
        %v2889 = vpack.c.b16 %v2858, %v2857
        %v2890 = vpack.c.b16 %v2860, %v2859
        %v2891 = vpack.c.b16 %v2862, %v2861
        %v2892 = vpack.c.b16 %v2864, %v2863
        %v2893 = vpack.c.b16 %v2866, %v2865
        %v2894 = vpack.c.b16 %v2868, %v2867
        %v2895 = vpack.c.b16 %v2870, %v2869
        %v2896 = vpack.c.b16 %v2872, %v2871
        %2921 = vmatpush.bf16.msra.mxu0 %v2880
        %2922 = vmatpush.bf16.msra.mxu0 %v2879
        %2923 = vmatpush.bf16.msra.mxu0 %v2878
        %2924 = vmatpush.bf16.msra.mxu0 %v2877
        %2925 = vmatpush.bf16.msra.mxu0 %v2876
        %2926 = vmatpush.bf16.msra.mxu0 %v2875
        %2927 = vmatpush.bf16.msra.mxu0 %v2874
        %2928 = vmatpush.bf16.msra.mxu0 %v2873
        %2929 = vmatmul.bf16.gmra.mxu0 %v2049
        %v2930 = vpop.f32.mrf.mxu0
        %v2931 = vadd.f32 0.0, %v2930
        %v2932 = vpop.f32.mrf.mxu0
        %v2933 = vadd.f32 0.0, %v2932
        %2934 = vmatmul.bf16.gmra.mxu0 %v2092
        %v2935 = vpop.f32.mrf.mxu0
        %v2936 = vadd.f32 0.0, %v2935
        %v2937 = vpop.f32.mrf.mxu0
        %v2938 = vadd.f32 0.0, %v2937
        %2939 = vmatmul.bf16.gmra.mxu0 %v2119
        %v2940 = vpop.f32.mrf.mxu0
        %v2941 = vadd.f32 0.0, %v2940
        %v2942 = vpop.f32.mrf.mxu0
        %v2943 = vadd.f32 0.0, %v2942
        %2944 = vmatmul.bf16.gmra.mxu0 %v2146
        %v2945 = vpop.f32.mrf.mxu0
        %v2946 = vadd.f32 0.0, %v2945
        %v2947 = vpop.f32.mrf.mxu0
        %v2948 = vadd.f32 0.0, %v2947
        %2949 = vmatmul.bf16.gmra.mxu0 %v2173
        %v2950 = vpop.f32.mrf.mxu0
        %v2951 = vadd.f32 0.0, %v2950
        %v2952 = vpop.f32.mrf.mxu0
        %v2953 = vadd.f32 0.0, %v2952
        %2954 = vmatmul.bf16.gmra.mxu0 %v2200
        %v2955 = vpop.f32.mrf.mxu0
        %v2956 = vadd.f32 0.0, %v2955
        %v2957 = vpop.f32.mrf.mxu0
        %v2958 = vadd.f32 0.0, %v2957
        %2959 = vmatmul.bf16.gmra.mxu0 %v2227
        %v2960 = vpop.f32.mrf.mxu0
        %v2961 = vadd.f32 0.0, %v2960
        %v2962 = vpop.f32.mrf.mxu0
        %v2963 = vadd.f32 0.0, %v2962
        %2964 = vmatmul.bf16.gmra.mxu0 %v2254
        %v2965 = vpop.f32.mrf.mxu0
        %v2966 = vadd.f32 0.0, %v2965
        %v2967 = vpop.f32.mrf.mxu0
        %v2968 = vadd.f32 0.0, %v2967
        %2969 = vmatmul.bf16.gmra.mxu0 %v2281
        %v2970 = vpop.f32.mrf.mxu0
        %v2971 = vadd.f32 0.0, %v2970
        %v2972 = vpop.f32.mrf.mxu0
        %v2973 = vadd.f32 0.0, %v2972
        %2974 = vmatmul.bf16.gmra.mxu0 %v2308
        %v2975 = vpop.f32.mrf.mxu0
        %v2976 = vadd.f32 0.0, %v2975
        %v2977 = vpop.f32.mrf.mxu0
        %v2978 = vadd.f32 0.0, %v2977
        %2979 = vmatmul.bf16.gmra.mxu0 %v2335
        %v2980 = vpop.f32.mrf.mxu0
        %v2981 = vadd.f32 0.0, %v2980
        %v2982 = vpop.f32.mrf.mxu0
        %v2983 = vadd.f32 0.0, %v2982
        %2984 = vmatmul.bf16.gmra.mxu0 %v2362
        %v2985 = vpop.f32.mrf.mxu0
        %v2986 = vadd.f32 0.0, %v2985
        %v2987 = vpop.f32.mrf.mxu0
        %v2988 = vadd.f32 0.0, %v2987
        %2989 = vmatmul.bf16.gmra.mxu0 %v2389
        %v2990 = vpop.f32.mrf.mxu0
        %v2991 = vadd.f32 0.0, %v2990
        %v2992 = vpop.f32.mrf.mxu0
        %v2993 = vadd.f32 0.0, %v2992
        %2994 = vmatmul.bf16.gmra.mxu0 %v2416
        %v2995 = vpop.f32.mrf.mxu0
        %v2996 = vadd.f32 0.0, %v2995
        %v2997 = vpop.f32.mrf.mxu0
        %v2998 = vadd.f32 0.0, %v2997
        %2999 = vmatmul.bf16.gmra.mxu0 %v2443
        %v3000 = vpop.f32.mrf.mxu0
        %v3001 = vadd.f32 0.0, %v3000
        %v3002 = vpop.f32.mrf.mxu0
        %v3003 = vadd.f32 0.0, %v3002
        %3004 = vmatmul.bf16.gmra.mxu0 %v2470
        %v3005 = vpop.f32.mrf.mxu0
        %v3006 = vadd.f32 0.0, %v3005
        %v3007 = vpop.f32.mrf.mxu0
        %v3008 = vadd.f32 0.0, %v3007
        %3009 = vmatmul.bf16.gmra.mxu0 %v2497
        %v3010 = vpop.f32.mrf.mxu0
        %v3011 = vadd.f32 0.0, %v3010
        %v3012 = vpop.f32.mrf.mxu0
        %v3013 = vadd.f32 0.0, %v3012
        %3014 = vmatmul.bf16.gmra.mxu0 %v2524
        %v3015 = vpop.f32.mrf.mxu0
        %v3016 = vadd.f32 0.0, %v3015
        %v3017 = vpop.f32.mrf.mxu0
        %v3018 = vadd.f32 0.0, %v3017
        %3019 = vmatmul.bf16.gmra.mxu0 %v2551
        %v3020 = vpop.f32.mrf.mxu0
        %v3021 = vadd.f32 0.0, %v3020
        %v3022 = vpop.f32.mrf.mxu0
        %v3023 = vadd.f32 0.0, %v3022
        %3024 = vmatmul.bf16.gmra.mxu0 %v2578
        %v3025 = vpop.f32.mrf.mxu0
        %v3026 = vadd.f32 0.0, %v3025
        %v3027 = vpop.f32.mrf.mxu0
        %v3028 = vadd.f32 0.0, %v3027
        %3029 = vmatmul.bf16.gmra.mxu0 %v2605
        %v3030 = vpop.f32.mrf.mxu0
        %v3031 = vadd.f32 0.0, %v3030
        %v3032 = vpop.f32.mrf.mxu0
        %v3033 = vadd.f32 0.0, %v3032
        %3034 = vmatmul.bf16.gmra.mxu0 %v2632
        %v3035 = vpop.f32.mrf.mxu0
        %v3036 = vadd.f32 0.0, %v3035
        %v3037 = vpop.f32.mrf.mxu0
        %v3038 = vadd.f32 0.0, %v3037
        %3039 = vmatmul.bf16.gmra.mxu0 %v2659
        %v3040 = vpop.f32.mrf.mxu0
        %v3041 = vadd.f32 0.0, %v3040
        %v3042 = vpop.f32.mrf.mxu0
        %v3043 = vadd.f32 0.0, %v3042
        %3044 = vmatmul.bf16.gmra.mxu0 %v2686
        %v3045 = vpop.f32.mrf.mxu0
        %v3046 = vadd.f32 0.0, %v3045
        %v3047 = vpop.f32.mrf.mxu0
        %v3048 = vadd.f32 0.0, %v3047
        %3049 = vdwg.mxu0
        %3050 = vmatpush.bf16.msra.mxu0 %v2888
        %3051 = vmatpush.bf16.msra.mxu0 %v2887
        %3052 = vmatpush.bf16.msra.mxu0 %v2886
        %3053 = vmatpush.bf16.msra.mxu0 %v2885
        %3054 = vmatpush.bf16.msra.mxu0 %v2884
        %3055 = vmatpush.bf16.msra.mxu0 %v2883
        %3056 = vmatpush.bf16.msra.mxu0 %v2882
        %3057 = vmatpush.bf16.msra.mxu0 %v2881
        %3058 = vmatmul.bf16.gmra.mxu0 %v2066
        %v3059 = vpop.f32.mrf.mxu0
        %v3060 = vadd.f32 %v2931, %v3059
        %v3061 = vpop.f32.mrf.mxu0
        %v3062 = vadd.f32 %v2933, %v3061
        %3063 = vmatmul.bf16.gmra.mxu0 %v2101
        %v3064 = vpop.f32.mrf.mxu0
        %v3065 = vadd.f32 %v2936, %v3064
        %v3066 = vpop.f32.mrf.mxu0
        %v3067 = vadd.f32 %v2938, %v3066
        %3068 = vmatmul.bf16.gmra.mxu0 %v2128
        %v3069 = vpop.f32.mrf.mxu0
        %v3070 = vadd.f32 %v2941, %v3069
        %v3071 = vpop.f32.mrf.mxu0
        %v3072 = vadd.f32 %v2943, %v3071
        %3073 = vmatmul.bf16.gmra.mxu0 %v2155
        %v3074 = vpop.f32.mrf.mxu0
        %v3075 = vadd.f32 %v2946, %v3074
        %v3076 = vpop.f32.mrf.mxu0
        %v3077 = vadd.f32 %v2948, %v3076
        %3078 = vmatmul.bf16.gmra.mxu0 %v2182
        %v3079 = vpop.f32.mrf.mxu0
        %v3080 = vadd.f32 %v2951, %v3079
        %v3081 = vpop.f32.mrf.mxu0
        %v3082 = vadd.f32 %v2953, %v3081
        %3083 = vmatmul.bf16.gmra.mxu0 %v2209
        %v3084 = vpop.f32.mrf.mxu0
        %v3085 = vadd.f32 %v2956, %v3084
        %v3086 = vpop.f32.mrf.mxu0
        %v3087 = vadd.f32 %v2958, %v3086
        %3088 = vmatmul.bf16.gmra.mxu0 %v2236
        %v3089 = vpop.f32.mrf.mxu0
        %v3090 = vadd.f32 %v2961, %v3089
        %v3091 = vpop.f32.mrf.mxu0
        %v3092 = vadd.f32 %v2963, %v3091
        %3093 = vmatmul.bf16.gmra.mxu0 %v2263
        %v3094 = vpop.f32.mrf.mxu0
        %v3095 = vadd.f32 %v2966, %v3094
        %v3096 = vpop.f32.mrf.mxu0
        %v3097 = vadd.f32 %v2968, %v3096
        %3098 = vmatmul.bf16.gmra.mxu0 %v2290
        %v3099 = vpop.f32.mrf.mxu0
        %v3100 = vadd.f32 %v2971, %v3099
        %v3101 = vpop.f32.mrf.mxu0
        %v3102 = vadd.f32 %v2973, %v3101
        %3103 = vmatmul.bf16.gmra.mxu0 %v2317
        %v3104 = vpop.f32.mrf.mxu0
        %v3105 = vadd.f32 %v2976, %v3104
        %v3106 = vpop.f32.mrf.mxu0
        %v3107 = vadd.f32 %v2978, %v3106
        %3108 = vmatmul.bf16.gmra.mxu0 %v2344
        %v3109 = vpop.f32.mrf.mxu0
        %v3110 = vadd.f32 %v2981, %v3109
        %v3111 = vpop.f32.mrf.mxu0
        %v3112 = vadd.f32 %v2983, %v3111
        %3113 = vmatmul.bf16.gmra.mxu0 %v2371
        %v3114 = vpop.f32.mrf.mxu0
        %v3115 = vadd.f32 %v2986, %v3114
        %v3116 = vpop.f32.mrf.mxu0
        %v3117 = vadd.f32 %v2988, %v3116
        %3118 = vmatmul.bf16.gmra.mxu0 %v2398
        %v3119 = vpop.f32.mrf.mxu0
        %v3120 = vadd.f32 %v2991, %v3119
        %v3121 = vpop.f32.mrf.mxu0
        %v3122 = vadd.f32 %v2993, %v3121
        %3123 = vmatmul.bf16.gmra.mxu0 %v2425
        %v3124 = vpop.f32.mrf.mxu0
        %v3125 = vadd.f32 %v2996, %v3124
        %v3126 = vpop.f32.mrf.mxu0
        %v3127 = vadd.f32 %v2998, %v3126
        %3128 = vmatmul.bf16.gmra.mxu0 %v2452
        %v3129 = vpop.f32.mrf.mxu0
        %v3130 = vadd.f32 %v3001, %v3129
        %v3131 = vpop.f32.mrf.mxu0
        %v3132 = vadd.f32 %v3003, %v3131
        %3133 = vmatmul.bf16.gmra.mxu0 %v2479
        %v3134 = vpop.f32.mrf.mxu0
        %v3135 = vadd.f32 %v3006, %v3134
        %v3136 = vpop.f32.mrf.mxu0
        %v3137 = vadd.f32 %v3008, %v3136
        %3138 = vmatmul.bf16.gmra.mxu0 %v2506
        %v3139 = vpop.f32.mrf.mxu0
        %v3140 = vadd.f32 %v3011, %v3139
        %v3141 = vpop.f32.mrf.mxu0
        %v3142 = vadd.f32 %v3013, %v3141
        %3143 = vmatmul.bf16.gmra.mxu0 %v2533
        %v3144 = vpop.f32.mrf.mxu0
        %v3145 = vadd.f32 %v3016, %v3144
        %v3146 = vpop.f32.mrf.mxu0
        %v3147 = vadd.f32 %v3018, %v3146
        %3148 = vmatmul.bf16.gmra.mxu0 %v2560
        %v3149 = vpop.f32.mrf.mxu0
        %v3150 = vadd.f32 %v3021, %v3149
        %v3151 = vpop.f32.mrf.mxu0
        %v3152 = vadd.f32 %v3023, %v3151
        %3153 = vmatmul.bf16.gmra.mxu0 %v2587
        %v3154 = vpop.f32.mrf.mxu0
        %v3155 = vadd.f32 %v3026, %v3154
        %v3156 = vpop.f32.mrf.mxu0
        %v3157 = vadd.f32 %v3028, %v3156
        %3158 = vmatmul.bf16.gmra.mxu0 %v2614
        %v3159 = vpop.f32.mrf.mxu0
        %v3160 = vadd.f32 %v3031, %v3159
        %v3161 = vpop.f32.mrf.mxu0
        %v3162 = vadd.f32 %v3033, %v3161
        %3163 = vmatmul.bf16.gmra.mxu0 %v2641
        %v3164 = vpop.f32.mrf.mxu0
        %v3165 = vadd.f32 %v3036, %v3164
        %v3166 = vpop.f32.mrf.mxu0
        %v3167 = vadd.f32 %v3038, %v3166
        %3168 = vmatmul.bf16.gmra.mxu0 %v2668
        %v3169 = vpop.f32.mrf.mxu0
        %v3170 = vadd.f32 %v3041, %v3169
        %v3171 = vpop.f32.mrf.mxu0
        %v3172 = vadd.f32 %v3043, %v3171
        %3173 = vmatmul.bf16.gmra.mxu0 %v2695
        %v3174 = vpop.f32.mrf.mxu0
        %v3175 = vadd.f32 %v3046, %v3174
        %v3176 = vpop.f32.mrf.mxu0
        %v3177 = vadd.f32 %v3048, %v3176
        %3178 = vdwg.mxu0
        %3179 = vmatpush.bf16.msra.mxu0 %v2896
        %3180 = vmatpush.bf16.msra.mxu0 %v2895
        %3181 = vmatpush.bf16.msra.mxu0 %v2894
        %3182 = vmatpush.bf16.msra.mxu0 %v2893
        %3183 = vmatpush.bf16.msra.mxu0 %v2892
        %3184 = vmatpush.bf16.msra.mxu0 %v2891
        %3185 = vmatpush.bf16.msra.mxu0 %v2890
        %3186 = vmatpush.bf16.msra.mxu0 %v2889
        %3187 = vmatmul.bf16.gmra.mxu0 %v2083
        %v3188 = vpop.f32.mrf.mxu0
        %v3189 = vadd.f32 %v3060, %v3188
        %v3190 = vpop.f32.mrf.mxu0
        %v3191 = vadd.f32 %v3062, %v3190
        %3192 = vmatmul.bf16.gmra.mxu0 %v2110
        %v3193 = vpop.f32.mrf.mxu0
        %v3194 = vadd.f32 %v3065, %v3193
        %v3195 = vpop.f32.mrf.mxu0
        %v3196 = vadd.f32 %v3067, %v3195
        %3197 = vmatmul.bf16.gmra.mxu0 %v2137
        %v3198 = vpop.f32.mrf.mxu0
        %v3199 = vadd.f32 %v3070, %v3198
        %v3200 = vpop.f32.mrf.mxu0
        %v3201 = vadd.f32 %v3072, %v3200
        %3202 = vmatmul.bf16.gmra.mxu0 %v2164
        %v3203 = vpop.f32.mrf.mxu0
        %v3204 = vadd.f32 %v3075, %v3203
        %v3205 = vpop.f32.mrf.mxu0
        %v3206 = vadd.f32 %v3077, %v3205
        %3207 = vmatmul.bf16.gmra.mxu0 %v2191
        %v3208 = vpop.f32.mrf.mxu0
        %v3209 = vadd.f32 %v3080, %v3208
        %v3210 = vpop.f32.mrf.mxu0
        %v3211 = vadd.f32 %v3082, %v3210
        %3212 = vmatmul.bf16.gmra.mxu0 %v2218
        %v3213 = vpop.f32.mrf.mxu0
        %v3214 = vadd.f32 %v3085, %v3213
        %v3215 = vpop.f32.mrf.mxu0
        %v3216 = vadd.f32 %v3087, %v3215
        %3217 = vmatmul.bf16.gmra.mxu0 %v2245
        %v3218 = vpop.f32.mrf.mxu0
        %v3219 = vadd.f32 %v3090, %v3218
        %v3220 = vpop.f32.mrf.mxu0
        %v3221 = vadd.f32 %v3092, %v3220
        %3222 = vmatmul.bf16.gmra.mxu0 %v2272
        %v3223 = vpop.f32.mrf.mxu0
        %v3224 = vadd.f32 %v3095, %v3223
        %v3225 = vpop.f32.mrf.mxu0
        %v3226 = vadd.f32 %v3097, %v3225
        %3227 = vmatmul.bf16.gmra.mxu0 %v2299
        %v3228 = vpop.f32.mrf.mxu0
        %v3229 = vadd.f32 %v3100, %v3228
        %v3230 = vpop.f32.mrf.mxu0
        %v3231 = vadd.f32 %v3102, %v3230
        %3232 = vmatmul.bf16.gmra.mxu0 %v2326
        %v3233 = vpop.f32.mrf.mxu0
        %v3234 = vadd.f32 %v3105, %v3233
        %v3235 = vpop.f32.mrf.mxu0
        %v3236 = vadd.f32 %v3107, %v3235
        %3237 = vmatmul.bf16.gmra.mxu0 %v2353
        %v3238 = vpop.f32.mrf.mxu0
        %v3239 = vadd.f32 %v3110, %v3238
        %v3240 = vpop.f32.mrf.mxu0
        %v3241 = vadd.f32 %v3112, %v3240
        %3242 = vmatmul.bf16.gmra.mxu0 %v2380
        %v3243 = vpop.f32.mrf.mxu0
        %v3244 = vadd.f32 %v3115, %v3243
        %v3245 = vpop.f32.mrf.mxu0
        %v3246 = vadd.f32 %v3117, %v3245
        %3247 = vmatmul.bf16.gmra.mxu0 %v2407
        %v3248 = vpop.f32.mrf.mxu0
        %v3249 = vadd.f32 %v3120, %v3248
        %v3250 = vpop.f32.mrf.mxu0
        %v3251 = vadd.f32 %v3122, %v3250
        %3252 = vmatmul.bf16.gmra.mxu0 %v2434
        %v3253 = vpop.f32.mrf.mxu0
        %v3254 = vadd.f32 %v3125, %v3253
        %v3255 = vpop.f32.mrf.mxu0
        %v3256 = vadd.f32 %v3127, %v3255
        %3257 = vmatmul.bf16.gmra.mxu0 %v2461
        %v3258 = vpop.f32.mrf.mxu0
        %v3259 = vadd.f32 %v3130, %v3258
        %v3260 = vpop.f32.mrf.mxu0
        %v3261 = vadd.f32 %v3132, %v3260
        %3262 = vmatmul.bf16.gmra.mxu0 %v2488
        %v3263 = vpop.f32.mrf.mxu0
        %v3264 = vadd.f32 %v3135, %v3263
        %v3265 = vpop.f32.mrf.mxu0
        %v3266 = vadd.f32 %v3137, %v3265
        %3267 = vmatmul.bf16.gmra.mxu0 %v2515
        %v3268 = vpop.f32.mrf.mxu0
        %v3269 = vadd.f32 %v3140, %v3268
        %v3270 = vpop.f32.mrf.mxu0
        %v3271 = vadd.f32 %v3142, %v3270
        %3272 = vmatmul.bf16.gmra.mxu0 %v2542
        %v3273 = vpop.f32.mrf.mxu0
        %v3274 = vadd.f32 %v3145, %v3273
        %v3275 = vpop.f32.mrf.mxu0
        %v3276 = vadd.f32 %v3147, %v3275
        %3277 = vmatmul.bf16.gmra.mxu0 %v2569
        %v3278 = vpop.f32.mrf.mxu0
        %v3279 = vadd.f32 %v3150, %v3278
        %v3280 = vpop.f32.mrf.mxu0
        %v3281 = vadd.f32 %v3152, %v3280
        %3282 = vmatmul.bf16.gmra.mxu0 %v2596
        %v3283 = vpop.f32.mrf.mxu0
        %v3284 = vadd.f32 %v3155, %v3283
        %v3285 = vpop.f32.mrf.mxu0
        %v3286 = vadd.f32 %v3157, %v3285
        %3287 = vmatmul.bf16.gmra.mxu0 %v2623
        %v3288 = vpop.f32.mrf.mxu0
        %v3289 = vadd.f32 %v3160, %v3288
        %v3290 = vpop.f32.mrf.mxu0
        %v3291 = vadd.f32 %v3162, %v3290
        %3292 = vmatmul.bf16.gmra.mxu0 %v2650
        %v3293 = vpop.f32.mrf.mxu0
        %v3294 = vadd.f32 %v3165, %v3293
        %v3295 = vpop.f32.mrf.mxu0
        %v3296 = vadd.f32 %v3167, %v3295
        %3297 = vmatmul.bf16.gmra.mxu0 %v2677
        %v3298 = vpop.f32.mrf.mxu0
        %v3299 = vadd.f32 %v3170, %v3298
        %v3300 = vpop.f32.mrf.mxu0
        %v3301 = vadd.f32 %v3172, %v3300
        %3302 = vmatmul.bf16.gmra.mxu0 %v2704
        %v3303 = vpop.f32.mrf.mxu0
        %v3304 = vadd.f32 %v3175, %v3303
        %v3305 = vpop.f32.mrf.mxu0
        %v3306 = vadd.f32 %v3177, %v3305
        %3307 = vdwg.mxu0
        %v3309 = vshrl.u32 %v1761, 16
        %v3311 = vrot.slane %v3309, 3
        %v3312 = vshll.u32 %v1761, 16
        %v3314 = vrot.slane %v3312, 4
        %v3315 = vor.u32 %v3311, %v3314
        %v3317 = vshrl.u32 %v1764, 16
        %v3319 = vrot.slane %v3317, 3
        %v3320 = vshll.u32 %v1764, 16
        %v3322 = vrot.slane %v3320, 4
        %v3323 = vor.u32 %v3319, %v3322
        %v3324 = vsel %vm2032, %v3315, %v3323
        %v3326 = vshrl.u32 %v1762, 16
        %v3328 = vrot.slane %v3326, 3
        %v3329 = vshll.u32 %v1762, 16
        %v3331 = vrot.slane %v3329, 4
        %v3332 = vor.u32 %v3328, %v3331
        %v3334 = vshrl.u32 %v1765, 16
        %v3336 = vrot.slane %v3334, 3
        %v3337 = vshll.u32 %v1765, 16
        %v3339 = vrot.slane %v3337, 4
        %v3340 = vor.u32 %v3336, %v3339
        %v3341 = vsel %vm2032, %v3332, %v3340
        %v3343 = vshrl.u32 %v1763, 16
        %v3345 = vrot.slane %v3343, 3
        %v3346 = vshll.u32 %v1763, 16
        %v3348 = vrot.slane %v3346, 4
        %v3349 = vor.u32 %v3345, %v3348
        %v3351 = vshrl.u32 %v1766, 16
        %v3353 = vrot.slane %v3351, 3
        %v3354 = vshll.u32 %v1766, 16
        %v3356 = vrot.slane %v3354, 4
        %v3357 = vor.u32 %v3353, %v3356
        %v3358 = vsel %vm2032, %v3349, %v3357
        %v3360 = vshrl.u32 %v1767, 16
        %v3362 = vrot.slane %v3360, 3
        %v3363 = vshll.u32 %v1767, 16
        %v3365 = vrot.slane %v3363, 4
        %v3366 = vor.u32 %v3362, %v3365
        %v3367 = vsel %vm2032, %v3323, %v3366
        %v3369 = vshrl.u32 %v1768, 16
        %v3371 = vrot.slane %v3369, 3
        %v3372 = vshll.u32 %v1768, 16
        %v3374 = vrot.slane %v3372, 4
        %v3375 = vor.u32 %v3371, %v3374
        %v3376 = vsel %vm2032, %v3340, %v3375
        %v3378 = vshrl.u32 %v1769, 16
        %v3380 = vrot.slane %v3378, 3
        %v3381 = vshll.u32 %v1769, 16
        %v3383 = vrot.slane %v3381, 4
        %v3384 = vor.u32 %v3380, %v3383
        %v3385 = vsel %vm2032, %v3357, %v3384
        %v3387 = vshrl.u32 %v1770, 16
        %v3389 = vrot.slane %v3387, 3
        %v3390 = vshll.u32 %v1770, 16
        %v3392 = vrot.slane %v3390, 4
        %v3393 = vor.u32 %v3389, %v3392
        %v3394 = vsel %vm2032, %v3366, %v3393
        %v3396 = vshrl.u32 %v1771, 16
        %v3398 = vrot.slane %v3396, 3
        %v3399 = vshll.u32 %v1771, 16
        %v3401 = vrot.slane %v3399, 4
        %v3402 = vor.u32 %v3398, %v3401
        %v3403 = vsel %vm2032, %v3375, %v3402
        %v3405 = vshrl.u32 %v1772, 16
        %v3407 = vrot.slane %v3405, 3
        %v3408 = vshll.u32 %v1772, 16
        %v3410 = vrot.slane %v3408, 4
        %v3411 = vor.u32 %v3407, %v3410
        %v3412 = vsel %vm2032, %v3384, %v3411
        %v3414 = vshrl.u32 %v1773, 16
        %v3416 = vrot.slane %v3414, 3
        %v3417 = vshll.u32 %v1773, 16
        %v3419 = vrot.slane %v3417, 4
        %v3420 = vor.u32 %v3416, %v3419
        %v3421 = vsel %vm2032, %v3393, %v3420
        %v3423 = vshrl.u32 %v1774, 16
        %v3425 = vrot.slane %v3423, 3
        %v3426 = vshll.u32 %v1774, 16
        %v3428 = vrot.slane %v3426, 4
        %v3429 = vor.u32 %v3425, %v3428
        %v3430 = vsel %vm2032, %v3402, %v3429
        %v3432 = vshrl.u32 %v1775, 16
        %v3434 = vrot.slane %v3432, 3
        %v3435 = vshll.u32 %v1775, 16
        %v3437 = vrot.slane %v3435, 4
        %v3438 = vor.u32 %v3434, %v3437
        %v3439 = vsel %vm2032, %v3411, %v3438
        %v3441 = vshrl.u32 %v1776, 16
        %v3443 = vrot.slane %v3441, 3
        %v3444 = vshll.u32 %v1776, 16
        %v3446 = vrot.slane %v3444, 4
        %v3447 = vor.u32 %v3443, %v3446
        %v3448 = vsel %vm2032, %v3420, %v3447
        %v3450 = vshrl.u32 %v1777, 16
        %v3452 = vrot.slane %v3450, 3
        %v3453 = vshll.u32 %v1777, 16
        %v3455 = vrot.slane %v3453, 4
        %v3456 = vor.u32 %v3452, %v3455
        %v3457 = vsel %vm2032, %v3429, %v3456
        %v3459 = vshrl.u32 %v1778, 16
        %v3461 = vrot.slane %v3459, 3
        %v3462 = vshll.u32 %v1778, 16
        %v3464 = vrot.slane %v3462, 4
        %v3465 = vor.u32 %v3461, %v3464
        %v3466 = vsel %vm2032, %v3438, %v3465
        %v3468 = vshrl.u32 %v1779, 16
        %v3470 = vrot.slane %v3468, 3
        %v3471 = vshll.u32 %v1779, 16
        %v3473 = vrot.slane %v3471, 4
        %v3474 = vor.u32 %v3470, %v3473
        %v3475 = vsel %vm2032, %v3447, %v3474
        %v3477 = vshrl.u32 %v1780, 16
        %v3479 = vrot.slane %v3477, 3
        %v3480 = vshll.u32 %v1780, 16
        %v3482 = vrot.slane %v3480, 4
        %v3483 = vor.u32 %v3479, %v3482
        %v3484 = vsel %vm2032, %v3456, %v3483
        %v3486 = vshrl.u32 %v1781, 16
        %v3488 = vrot.slane %v3486, 3
        %v3489 = vshll.u32 %v1781, 16
        %v3491 = vrot.slane %v3489, 4
        %v3492 = vor.u32 %v3488, %v3491
        %v3493 = vsel %vm2032, %v3465, %v3492
        %v3495 = vshrl.u32 %v1782, 16
        %v3497 = vrot.slane %v3495, 3
        %v3498 = vshll.u32 %v1782, 16
        %v3500 = vrot.slane %v3498, 4
        %v3501 = vor.u32 %v3497, %v3500
        %v3502 = vsel %vm2032, %v3474, %v3501
        %v3504 = vshrl.u32 %v1783, 16
        %v3506 = vrot.slane %v3504, 3
        %v3507 = vshll.u32 %v1783, 16
        %v3509 = vrot.slane %v3507, 4
        %v3510 = vor.u32 %v3506, %v3509
        %v3511 = vsel %vm2032, %v3483, %v3510
        %v3513 = vshrl.u32 %v1784, 16
        %v3515 = vrot.slane %v3513, 3
        %v3516 = vshll.u32 %v1784, 16
        %v3518 = vrot.slane %v3516, 4
        %v3519 = vor.u32 %v3515, %v3518
        %v3520 = vsel %vm2032, %v3492, %v3519
        %v3522 = vshrl.u32 %v1785, 16
        %v3524 = vrot.slane %v3522, 3
        %v3525 = vshll.u32 %v1785, 16
        %v3527 = vrot.slane %v3525, 4
        %v3528 = vor.u32 %v3524, %v3527
        %v3529 = vsel %vm2032, %v3501, %v3528
        %v3531 = vshrl.u32 %v1786, 16
        %v3533 = vrot.slane %v3531, 3
        %v3534 = vshll.u32 %v1786, 16
        %v3536 = vrot.slane %v3534, 4
        %v3537 = vor.u32 %v3533, %v3536
        %v3538 = vsel %vm2032, %v3510, %v3537
        %v3540 = vshrl.u32 %v1787, 16
        %v3542 = vrot.slane %v3540, 3
        %v3543 = vshll.u32 %v1787, 16
        %v3545 = vrot.slane %v3543, 4
        %v3546 = vor.u32 %v3542, %v3545
        %v3547 = vsel %vm2032, %v3519, %v3546
        %v3549 = vshrl.u32 %v1788, 16
        %v3551 = vrot.slane %v3549, 3
        %v3552 = vshll.u32 %v1788, 16
        %v3554 = vrot.slane %v3552, 4
        %v3555 = vor.u32 %v3551, %v3554
        %v3556 = vsel %vm2032, %v3528, %v3555
        %v3558 = vshrl.u32 %v1789, 16
        %v3560 = vrot.slane %v3558, 3
        %v3561 = vshll.u32 %v1789, 16
        %v3563 = vrot.slane %v3561, 4
        %v3564 = vor.u32 %v3560, %v3563
        %v3565 = vsel %vm2032, %v3537, %v3564
        %v3567 = vshrl.u32 %v1790, 16
        %v3569 = vrot.slane %v3567, 3
        %v3570 = vshll.u32 %v1790, 16
        %v3572 = vrot.slane %v3570, 4
        %v3573 = vor.u32 %v3569, %v3572
        %v3574 = vsel %vm2032, %v3546, %v3573
        %v3576 = vshrl.u32 %v1791, 16
        %v3578 = vrot.slane %v3576, 3
        %v3579 = vshll.u32 %v1791, 16
        %v3581 = vrot.slane %v3579, 4
        %v3582 = vor.u32 %v3578, %v3581
        %v3583 = vsel %vm2032, %v3555, %v3582
        %v3585 = vshrl.u32 %v1792, 16
        %v3587 = vrot.slane %v3585, 3
        %v3588 = vshll.u32 %v1792, 16
        %v3590 = vrot.slane %v3588, 4
        %v3591 = vor.u32 %v3587, %v3590
        %v3592 = vsel %vm2032, %v3564, %v3591
        %v3594 = vshrl.u32 %v1793, 16
        %v3596 = vrot.slane %v3594, 3
        %v3597 = vshll.u32 %v1793, 16
        %v3599 = vrot.slane %v3597, 4
        %v3600 = vor.u32 %v3596, %v3599
        %v3601 = vsel %vm2032, %v3573, %v3600
        %v3603 = vshrl.u32 %v1794, 16
        %v3605 = vrot.slane %v3603, 3
        %v3606 = vshll.u32 %v1794, 16
        %v3608 = vrot.slane %v3606, 4
        %v3609 = vor.u32 %v3605, %v3608
        %v3610 = vsel %vm2032, %v3582, %v3609
        %v3612 = vshrl.u32 %v1795, 16
        %v3614 = vrot.slane %v3612, 3
        %v3615 = vshll.u32 %v1795, 16
        %v3617 = vrot.slane %v3615, 4
        %v3618 = vor.u32 %v3614, %v3617
        %v3619 = vsel %vm2032, %v3591, %v3618
        %v3621 = vshrl.u32 %v1796, 16
        %v3623 = vrot.slane %v3621, 3
        %v3624 = vshll.u32 %v1796, 16
        %v3626 = vrot.slane %v3624, 4
        %v3627 = vor.u32 %v3623, %v3626
        %v3628 = vsel %vm2032, %v3600, %v3627
        %v3630 = vshrl.u32 %v1797, 16
        %v3632 = vrot.slane %v3630, 3
        %v3633 = vshll.u32 %v1797, 16
        %v3635 = vrot.slane %v3633, 4
        %v3636 = vor.u32 %v3632, %v3635
        %v3637 = vsel %vm2032, %v3609, %v3636
        %v3639 = vshrl.u32 %v1798, 16
        %v3641 = vrot.slane %v3639, 3
        %v3642 = vshll.u32 %v1798, 16
        %v3644 = vrot.slane %v3642, 4
        %v3645 = vor.u32 %v3641, %v3644
        %v3646 = vsel %vm2032, %v3618, %v3645
        %v3648 = vshrl.u32 %v1799, 16
        %v3650 = vrot.slane %v3648, 3
        %v3651 = vshll.u32 %v1799, 16
        %v3653 = vrot.slane %v3651, 4
        %v3654 = vor.u32 %v3650, %v3653
        %v3655 = vsel %vm2032, %v3627, %v3654
        %v3657 = vshrl.u32 %v1800, 16
        %v3659 = vrot.slane %v3657, 3
        %v3660 = vshll.u32 %v1800, 16
        %v3662 = vrot.slane %v3660, 4
        %v3663 = vor.u32 %v3659, %v3662
        %v3664 = vsel %vm2032, %v3636, %v3663
        %v3666 = vshrl.u32 %v1801, 16
        %v3668 = vrot.slane %v3666, 3
        %v3669 = vshll.u32 %v1801, 16
        %v3671 = vrot.slane %v3669, 4
        %v3672 = vor.u32 %v3668, %v3671
        %v3673 = vsel %vm2032, %v3645, %v3672
        %v3675 = vshrl.u32 %v1802, 16
        %v3677 = vrot.slane %v3675, 3
        %v3678 = vshll.u32 %v1802, 16
        %v3680 = vrot.slane %v3678, 4
        %v3681 = vor.u32 %v3677, %v3680
        %v3682 = vsel %vm2032, %v3654, %v3681
        %v3684 = vshrl.u32 %v1803, 16
        %v3686 = vrot.slane %v3684, 3
        %v3687 = vshll.u32 %v1803, 16
        %v3689 = vrot.slane %v3687, 4
        %v3690 = vor.u32 %v3686, %v3689
        %v3691 = vsel %vm2032, %v3663, %v3690
        %v3693 = vshrl.u32 %v1804, 16
        %v3695 = vrot.slane %v3693, 3
        %v3696 = vshll.u32 %v1804, 16
        %v3698 = vrot.slane %v3696, 4
        %v3699 = vor.u32 %v3695, %v3698
        %v3700 = vsel %vm2032, %v3672, %v3699
        %v3702 = vshrl.u32 %v1805, 16
        %v3704 = vrot.slane %v3702, 3
        %v3705 = vshll.u32 %v1805, 16
        %v3707 = vrot.slane %v3705, 4
        %v3708 = vor.u32 %v3704, %v3707
        %v3709 = vsel %vm2032, %v3681, %v3708
        %v3711 = vshrl.u32 %v1806, 16
        %v3713 = vrot.slane %v3711, 3
        %v3714 = vshll.u32 %v1806, 16
        %v3716 = vrot.slane %v3714, 4
        %v3717 = vor.u32 %v3713, %v3716
        %v3718 = vsel %vm2032, %v3690, %v3717
        %v3720 = vshrl.u32 %v1807, 16
        %v3722 = vrot.slane %v3720, 3
        %v3723 = vshll.u32 %v1807, 16
        %v3725 = vrot.slane %v3723, 4
        %v3726 = vor.u32 %v3722, %v3725
        %v3727 = vsel %vm2032, %v3699, %v3726
        %v3729 = vshrl.u32 %v1808, 16
        %v3731 = vrot.slane %v3729, 3
        %v3732 = vshll.u32 %v1808, 16
        %v3734 = vrot.slane %v3732, 4
        %v3735 = vor.u32 %v3731, %v3734
        %v3736 = vsel %vm2032, %v3708, %v3735
        %v3738 = vshrl.u32 %v1809, 16
        %v3740 = vrot.slane %v3738, 3
        %v3741 = vshll.u32 %v1809, 16
        %v3743 = vrot.slane %v3741, 4
        %v3744 = vor.u32 %v3740, %v3743
        %v3745 = vsel %vm2032, %v3717, %v3744
        %v3747 = vshrl.u32 %v1810, 16
        %v3749 = vrot.slane %v3747, 3
        %v3750 = vshll.u32 %v1810, 16
        %v3752 = vrot.slane %v3750, 4
        %v3753 = vor.u32 %v3749, %v3752
        %v3754 = vsel %vm2032, %v3726, %v3753
        %v3756 = vshrl.u32 %v1811, 16
        %v3758 = vrot.slane %v3756, 3
        %v3759 = vshll.u32 %v1811, 16
        %v3761 = vrot.slane %v3759, 4
        %v3762 = vor.u32 %v3758, %v3761
        %v3763 = vsel %vm2032, %v3735, %v3762
        %v3765 = vshrl.u32 %v1812, 16
        %v3767 = vrot.slane %v3765, 3
        %v3768 = vshll.u32 %v1812, 16
        %v3770 = vrot.slane %v3768, 4
        %v3771 = vor.u32 %v3767, %v3770
        %v3772 = vsel %vm2032, %v3744, %v3771
        %v3774 = vshrl.u32 %v1813, 16
        %v3776 = vrot.slane %v3774, 3
        %v3777 = vshll.u32 %v1813, 16
        %v3779 = vrot.slane %v3777, 4
        %v3780 = vor.u32 %v3776, %v3779
        %v3781 = vsel %vm2032, %v3753, %v3780
        %v3783 = vshrl.u32 %v1814, 16
        %v3785 = vrot.slane %v3783, 3
        %v3786 = vshll.u32 %v1814, 16
        %v3788 = vrot.slane %v3786, 4
        %v3789 = vor.u32 %v3785, %v3788
        %v3790 = vsel %vm2032, %v3762, %v3789
        %v3792 = vshrl.u32 %v1815, 16
        %v3794 = vrot.slane %v3792, 3
        %v3795 = vshll.u32 %v1815, 16
        %v3797 = vrot.slane %v3795, 4
        %v3798 = vor.u32 %v3794, %v3797
        %v3799 = vsel %vm2032, %v3771, %v3798
        %v3801 = vshrl.u32 %v1816, 16
        %v3803 = vrot.slane %v3801, 3
        %v3804 = vshll.u32 %v1816, 16
        %v3806 = vrot.slane %v3804, 4
        %v3807 = vor.u32 %v3803, %v3806
        %v3808 = vsel %vm2032, %v3780, %v3807
        %v3810 = vshrl.u32 %v1817, 16
        %v3812 = vrot.slane %v3810, 3
        %v3813 = vshll.u32 %v1817, 16
        %v3815 = vrot.slane %v3813, 4
        %v3816 = vor.u32 %v3812, %v3815
        %v3817 = vsel %vm2032, %v3789, %v3816
        %v3819 = vshrl.u32 %v1818, 16
        %v3821 = vrot.slane %v3819, 3
        %v3822 = vshll.u32 %v1818, 16
        %v3824 = vrot.slane %v3822, 4
        %v3825 = vor.u32 %v3821, %v3824
        %v3826 = vsel %vm2032, %v3798, %v3825
        %v3828 = vshrl.u32 %v1819, 16
        %v3830 = vrot.slane %v3828, 3
        %v3831 = vshll.u32 %v1819, 16
        %v3833 = vrot.slane %v3831, 4
        %v3834 = vor.u32 %v3830, %v3833
        %v3835 = vsel %vm2032, %v3807, %v3834
        %v3837 = vshrl.u32 %v1820, 16
        %v3839 = vrot.slane %v3837, 3
        %v3840 = vshll.u32 %v1820, 16
        %v3842 = vrot.slane %v3840, 4
        %v3843 = vor.u32 %v3839, %v3842
        %v3844 = vsel %vm2032, %v3816, %v3843
        %v3846 = vshrl.u32 %v1821, 16
        %v3848 = vrot.slane %v3846, 3
        %v3849 = vshll.u32 %v1821, 16
        %v3851 = vrot.slane %v3849, 4
        %v3852 = vor.u32 %v3848, %v3851
        %v3853 = vsel %vm2032, %v3825, %v3852
        %v3855 = vshrl.u32 %v1822, 16
        %v3857 = vrot.slane %v3855, 3
        %v3858 = vshll.u32 %v1822, 16
        %v3860 = vrot.slane %v3858, 4
        %v3861 = vor.u32 %v3857, %v3860
        %v3862 = vsel %vm2032, %v3834, %v3861
        %v3864 = vshrl.u32 %v1823, 16
        %v3866 = vrot.slane %v3864, 3
        %v3867 = vshll.u32 %v1823, 16
        %v3869 = vrot.slane %v3867, 4
        %v3870 = vor.u32 %v3866, %v3869
        %v3871 = vsel %vm2032, %v3843, %v3870
        %v3873 = vshrl.u32 %v1824, 16
        %v3875 = vrot.slane %v3873, 3
        %v3876 = vshll.u32 %v1824, 16
        %v3878 = vrot.slane %v3876, 4
        %v3879 = vor.u32 %v3875, %v3878
        %v3880 = vsel %vm2032, %v3852, %v3879
        %v3882 = vshrl.u32 %v1825, 16
        %v3884 = vrot.slane %v3882, 3
        %v3885 = vshll.u32 %v1825, 16
        %v3887 = vrot.slane %v3885, 4
        %v3888 = vor.u32 %v3884, %v3887
        %v3889 = vsel %vm2032, %v3861, %v3888
        %v3891 = vshrl.u32 %v1826, 16
        %v3893 = vrot.slane %v3891, 3
        %v3894 = vshll.u32 %v1826, 16
        %v3896 = vrot.slane %v3894, 4
        %v3897 = vor.u32 %v3893, %v3896
        %v3898 = vsel %vm2032, %v3870, %v3897
        %v3900 = vshrl.u32 %v1827, 16
        %v3902 = vrot.slane %v3900, 3
        %v3903 = vshll.u32 %v1827, 16
        %v3905 = vrot.slane %v3903, 4
        %v3906 = vor.u32 %v3902, %v3905
        %v3907 = vsel %vm2032, %v3879, %v3906
        %v3909 = vshrl.u32 %v1828, 16
        %v3911 = vrot.slane %v3909, 3
        %v3912 = vshll.u32 %v1828, 16
        %v3914 = vrot.slane %v3912, 4
        %v3915 = vor.u32 %v3911, %v3914
        %v3916 = vsel %vm2032, %v3888, %v3915
        %v3918 = vshrl.u32 %v1829, 16
        %v3920 = vrot.slane %v3918, 3
        %v3921 = vshll.u32 %v1829, 16
        %v3923 = vrot.slane %v3921, 4
        %v3924 = vor.u32 %v3920, %v3923
        %v3925 = vsel %vm2032, %v3897, %v3924
        %v3927 = vshrl.u32 %v1830, 16
        %v3929 = vrot.slane %v3927, 3
        %v3930 = vshll.u32 %v1830, 16
        %v3932 = vrot.slane %v3930, 4
        %v3933 = vor.u32 %v3929, %v3932
        %v3934 = vsel %vm2032, %v3906, %v3933
        %v3936 = vshrl.u32 %v1831, 16
        %v3938 = vrot.slane %v3936, 3
        %v3939 = vshll.u32 %v1831, 16
        %v3941 = vrot.slane %v3939, 4
        %v3942 = vor.u32 %v3938, %v3941
        %v3943 = vsel %vm2032, %v3915, %v3942
        %v3945 = vshrl.u32 %v1832, 16
        %v3947 = vrot.slane %v3945, 3
        %v3948 = vshll.u32 %v1832, 16
        %v3950 = vrot.slane %v3948, 4
        %v3951 = vor.u32 %v3947, %v3950
        %v3952 = vsel %vm2032, %v3924, %v3951
        %v3954 = vshrl.u32 %v1833, 16
        %v3956 = vrot.slane %v3954, 3
        %v3957 = vshll.u32 %v1833, 16
        %v3959 = vrot.slane %v3957, 4
        %v3960 = vor.u32 %v3956, %v3959
        %v3961 = vsel %vm2032, %v3933, %v3960
        %v3963 = vshrl.u32 %v1834, 16
        %v3965 = vrot.slane %v3963, 3
        %v3966 = vshll.u32 %v1834, 16
        %v3968 = vrot.slane %v3966, 4
        %v3969 = vor.u32 %v3965, %v3968
        %v3970 = vsel %vm2032, %v3942, %v3969
        %v3972 = vshrl.u32 %v1835, 16
        %v3974 = vrot.slane %v3972, 3
        %v3975 = vshll.u32 %v1835, 16
        %v3977 = vrot.slane %v3975, 4
        %v3978 = vor.u32 %v3974, %v3977
        %v3979 = vsel %vm2032, %v3951, %v3978
        %v4100 = vunpack.c.l.b16 %v1836
        %v4101 = vunpack.c.l.b16 %v1837
        %v4102 = vunpack.c.l.b16 %v1838
        %v4103 = vunpack.c.l.b16 %v1839
        %v4104 = vunpack.c.l.b16 %v1840
        %v4105 = vunpack.c.l.b16 %v1841
        %v4106 = vunpack.c.l.b16 %v1842
        %v4107 = vunpack.c.l.b16 %v1843
        %v4108 = vunpack.c.l.b16 %v1844
        %v4109 = vunpack.c.l.b16 %v1845
        %v4110 = vunpack.c.l.b16 %v1846
        %v4111 = vunpack.c.l.b16 %v1847
        %v4112 = vunpack.c.l.b16 %v1848
        %v4113 = vunpack.c.l.b16 %v1849
        %v4114 = vunpack.c.l.b16 %v1850
        %v4115 = vunpack.c.l.b16 %v1851
        %v4116 = vunpack.c.l.b16 %v1852
        %v4117 = vunpack.c.l.b16 %v1853
        %v4118 = vunpack.c.l.b16 %v1854
        %v4119 = vunpack.c.l.b16 %v1855
        %v4120 = vunpack.c.l.b16 %v1856
        %v4121 = vunpack.c.l.b16 %v1857
        %v4122 = vunpack.c.l.b16 %v1858
        %v4123 = vunpack.c.l.b16 %v1859
        %v4124 = vunpack.c.l.b16 %v1860
        %v4125 = vunpack.c.l.b16 %v1861
        %v4126 = vunpack.c.l.b16 %v1862
        %v4127 = vunpack.c.l.b16 %v1863
        %v4128 = vunpack.c.l.b16 %v1864
        %v4129 = vunpack.c.l.b16 %v1865
        %v4130 = vunpack.c.l.b16 %v1866
        %v4131 = vunpack.c.l.b16 %v1867
        %v4132 = vunpack.c.l.b16 %v1868
        %v4133 = vunpack.c.l.b16 %v1869
        %v4134 = vunpack.c.l.b16 %v1870
        %v4135 = vunpack.c.l.b16 %v1871
        %v4136 = vunpack.c.l.b16 %v1872
        %v4137 = vunpack.c.l.b16 %v1873
        %v4138 = vunpack.c.l.b16 %v1874
        %v4139 = vunpack.c.l.b16 %v1875
        %v4140 = vunpack.c.l.b16 %v1876
        %v4141 = vunpack.c.l.b16 %v1877
        %v4142 = vunpack.c.l.b16 %v1878
        %v4143 = vunpack.c.l.b16 %v1879
        %v4144 = vunpack.c.l.b16 %v1880
        %v4145 = vunpack.c.l.b16 %v1881
        %v4146 = vunpack.c.l.b16 %v1882
        %v4147 = vunpack.c.l.b16 %v1883
        %v4148 = vpack.c.b16 %v4101, %v4100
        %v4149 = vpack.c.b16 %v4103, %v4102
        %v4150 = vpack.c.b16 %v4105, %v4104
        %v4151 = vpack.c.b16 %v4107, %v4106
        %v4152 = vpack.c.b16 %v4109, %v4108
        %v4153 = vpack.c.b16 %v4111, %v4110
        %v4154 = vpack.c.b16 %v4113, %v4112
        %v4155 = vpack.c.b16 %v4115, %v4114
        %v4156 = vpack.c.b16 %v4117, %v4116
        %v4157 = vpack.c.b16 %v4119, %v4118
        %v4158 = vpack.c.b16 %v4121, %v4120
        %v4159 = vpack.c.b16 %v4123, %v4122
        %v4160 = vpack.c.b16 %v4125, %v4124
        %v4161 = vpack.c.b16 %v4127, %v4126
        %v4162 = vpack.c.b16 %v4129, %v4128
        %v4163 = vpack.c.b16 %v4131, %v4130
        %v4164 = vpack.c.b16 %v4133, %v4132
        %v4165 = vpack.c.b16 %v4135, %v4134
        %v4166 = vpack.c.b16 %v4137, %v4136
        %v4167 = vpack.c.b16 %v4139, %v4138
        %v4168 = vpack.c.b16 %v4141, %v4140
        %v4169 = vpack.c.b16 %v4143, %v4142
        %v4170 = vpack.c.b16 %v4145, %v4144
        %v4171 = vpack.c.b16 %v4147, %v4146
        %4196 = vmatpush.bf16.msra.mxu0 %v4155
        %4197 = vmatpush.bf16.msra.mxu0 %v4154
        %4198 = vmatpush.bf16.msra.mxu0 %v4153
        %4199 = vmatpush.bf16.msra.mxu0 %v4152
        %4200 = vmatpush.bf16.msra.mxu0 %v4151
        %4201 = vmatpush.bf16.msra.mxu0 %v4150
        %4202 = vmatpush.bf16.msra.mxu0 %v4149
        %4203 = vmatpush.bf16.msra.mxu0 %v4148
        %4204 = vmatmul.bf16.gmra.mxu0 %v3324
        %v4205 = vpop.f32.mrf.mxu0
        %v4206 = vadd.f32 %v3189, %v4205
        %v4207 = vpop.f32.mrf.mxu0
        %v4208 = vadd.f32 %v3191, %v4207
        %4209 = vmatmul.bf16.gmra.mxu0 %v3367
        %v4210 = vpop.f32.mrf.mxu0
        %v4211 = vadd.f32 %v3194, %v4210
        %v4212 = vpop.f32.mrf.mxu0
        %v4213 = vadd.f32 %v3196, %v4212
        %4214 = vmatmul.bf16.gmra.mxu0 %v3394
        %v4215 = vpop.f32.mrf.mxu0
        %v4216 = vadd.f32 %v3199, %v4215
        %v4217 = vpop.f32.mrf.mxu0
        %v4218 = vadd.f32 %v3201, %v4217
        %4219 = vmatmul.bf16.gmra.mxu0 %v3421
        %v4220 = vpop.f32.mrf.mxu0
        %v4221 = vadd.f32 %v3204, %v4220
        %v4222 = vpop.f32.mrf.mxu0
        %v4223 = vadd.f32 %v3206, %v4222
        %4224 = vmatmul.bf16.gmra.mxu0 %v3448
        %v4225 = vpop.f32.mrf.mxu0
        %v4226 = vadd.f32 %v3209, %v4225
        %v4227 = vpop.f32.mrf.mxu0
        %v4228 = vadd.f32 %v3211, %v4227
        %4229 = vmatmul.bf16.gmra.mxu0 %v3475
        %v4230 = vpop.f32.mrf.mxu0
        %v4231 = vadd.f32 %v3214, %v4230
        %v4232 = vpop.f32.mrf.mxu0
        %v4233 = vadd.f32 %v3216, %v4232
        %4234 = vmatmul.bf16.gmra.mxu0 %v3502
        %v4235 = vpop.f32.mrf.mxu0
        %v4236 = vadd.f32 %v3219, %v4235
        %v4237 = vpop.f32.mrf.mxu0
        %v4238 = vadd.f32 %v3221, %v4237
        %4239 = vmatmul.bf16.gmra.mxu0 %v3529
        %v4240 = vpop.f32.mrf.mxu0
        %v4241 = vadd.f32 %v3224, %v4240
        %v4242 = vpop.f32.mrf.mxu0
        %v4243 = vadd.f32 %v3226, %v4242
        %4244 = vmatmul.bf16.gmra.mxu0 %v3556
        %v4245 = vpop.f32.mrf.mxu0
        %v4246 = vadd.f32 %v3229, %v4245
        %v4247 = vpop.f32.mrf.mxu0
        %v4248 = vadd.f32 %v3231, %v4247
        %4249 = vmatmul.bf16.gmra.mxu0 %v3583
        %v4250 = vpop.f32.mrf.mxu0
        %v4251 = vadd.f32 %v3234, %v4250
        %v4252 = vpop.f32.mrf.mxu0
        %v4253 = vadd.f32 %v3236, %v4252
        %4254 = vmatmul.bf16.gmra.mxu0 %v3610
        %v4255 = vpop.f32.mrf.mxu0
        %v4256 = vadd.f32 %v3239, %v4255
        %v4257 = vpop.f32.mrf.mxu0
        %v4258 = vadd.f32 %v3241, %v4257
        %4259 = vmatmul.bf16.gmra.mxu0 %v3637
        %v4260 = vpop.f32.mrf.mxu0
        %v4261 = vadd.f32 %v3244, %v4260
        %v4262 = vpop.f32.mrf.mxu0
        %v4263 = vadd.f32 %v3246, %v4262
        %4264 = vmatmul.bf16.gmra.mxu0 %v3664
        %v4265 = vpop.f32.mrf.mxu0
        %v4266 = vadd.f32 %v3249, %v4265
        %v4267 = vpop.f32.mrf.mxu0
        %v4268 = vadd.f32 %v3251, %v4267
        %4269 = vmatmul.bf16.gmra.mxu0 %v3691
        %v4270 = vpop.f32.mrf.mxu0
        %v4271 = vadd.f32 %v3254, %v4270
        %v4272 = vpop.f32.mrf.mxu0
        %v4273 = vadd.f32 %v3256, %v4272
        %4274 = vmatmul.bf16.gmra.mxu0 %v3718
        %v4275 = vpop.f32.mrf.mxu0
        %v4276 = vadd.f32 %v3259, %v4275
        %v4277 = vpop.f32.mrf.mxu0
        %v4278 = vadd.f32 %v3261, %v4277
        %4279 = vmatmul.bf16.gmra.mxu0 %v3745
        %v4280 = vpop.f32.mrf.mxu0
        %v4281 = vadd.f32 %v3264, %v4280
        %v4282 = vpop.f32.mrf.mxu0
        %v4283 = vadd.f32 %v3266, %v4282
        %4284 = vmatmul.bf16.gmra.mxu0 %v3772
        %v4285 = vpop.f32.mrf.mxu0
        %v4286 = vadd.f32 %v3269, %v4285
        %v4287 = vpop.f32.mrf.mxu0
        %v4288 = vadd.f32 %v3271, %v4287
        %4289 = vmatmul.bf16.gmra.mxu0 %v3799
        %v4290 = vpop.f32.mrf.mxu0
        %v4291 = vadd.f32 %v3274, %v4290
        %v4292 = vpop.f32.mrf.mxu0
        %v4293 = vadd.f32 %v3276, %v4292
        %4294 = vmatmul.bf16.gmra.mxu0 %v3826
        %v4295 = vpop.f32.mrf.mxu0
        %v4296 = vadd.f32 %v3279, %v4295
        %v4297 = vpop.f32.mrf.mxu0
        %v4298 = vadd.f32 %v3281, %v4297
        %4299 = vmatmul.bf16.gmra.mxu0 %v3853
        %v4300 = vpop.f32.mrf.mxu0
        %v4301 = vadd.f32 %v3284, %v4300
        %v4302 = vpop.f32.mrf.mxu0
        %v4303 = vadd.f32 %v3286, %v4302
        %4304 = vmatmul.bf16.gmra.mxu0 %v3880
        %v4305 = vpop.f32.mrf.mxu0
        %v4306 = vadd.f32 %v3289, %v4305
        %v4307 = vpop.f32.mrf.mxu0
        %v4308 = vadd.f32 %v3291, %v4307
        %4309 = vmatmul.bf16.gmra.mxu0 %v3907
        %v4310 = vpop.f32.mrf.mxu0
        %v4311 = vadd.f32 %v3294, %v4310
        %v4312 = vpop.f32.mrf.mxu0
        %v4313 = vadd.f32 %v3296, %v4312
        %4314 = vmatmul.bf16.gmra.mxu0 %v3934
        %v4315 = vpop.f32.mrf.mxu0
        %v4316 = vadd.f32 %v3299, %v4315
        %v4317 = vpop.f32.mrf.mxu0
        %v4318 = vadd.f32 %v3301, %v4317
        %4319 = vmatmul.bf16.gmra.mxu0 %v3961
        %v4320 = vpop.f32.mrf.mxu0
        %v4321 = vadd.f32 %v3304, %v4320
        %v4322 = vpop.f32.mrf.mxu0
        %v4323 = vadd.f32 %v3306, %v4322
        %4324 = vdwg.mxu0
        %4325 = vmatpush.bf16.msra.mxu0 %v4163
        %4326 = vmatpush.bf16.msra.mxu0 %v4162
        %4327 = vmatpush.bf16.msra.mxu0 %v4161
        %4328 = vmatpush.bf16.msra.mxu0 %v4160
        %4329 = vmatpush.bf16.msra.mxu0 %v4159
        %4330 = vmatpush.bf16.msra.mxu0 %v4158
        %4331 = vmatpush.bf16.msra.mxu0 %v4157
        %4332 = vmatpush.bf16.msra.mxu0 %v4156
        %4333 = vmatmul.bf16.gmra.mxu0 %v3341
        %v4334 = vpop.f32.mrf.mxu0
        %v4335 = vadd.f32 %v4206, %v4334
        %v4336 = vpop.f32.mrf.mxu0
        %v4337 = vadd.f32 %v4208, %v4336
        %4338 = vmatmul.bf16.gmra.mxu0 %v3376
        %v4339 = vpop.f32.mrf.mxu0
        %v4340 = vadd.f32 %v4211, %v4339
        %v4341 = vpop.f32.mrf.mxu0
        %v4342 = vadd.f32 %v4213, %v4341
        %4343 = vmatmul.bf16.gmra.mxu0 %v3403
        %v4344 = vpop.f32.mrf.mxu0
        %v4345 = vadd.f32 %v4216, %v4344
        %v4346 = vpop.f32.mrf.mxu0
        %v4347 = vadd.f32 %v4218, %v4346
        %4348 = vmatmul.bf16.gmra.mxu0 %v3430
        %v4349 = vpop.f32.mrf.mxu0
        %v4350 = vadd.f32 %v4221, %v4349
        %v4351 = vpop.f32.mrf.mxu0
        %v4352 = vadd.f32 %v4223, %v4351
        %4353 = vmatmul.bf16.gmra.mxu0 %v3457
        %v4354 = vpop.f32.mrf.mxu0
        %v4355 = vadd.f32 %v4226, %v4354
        %v4356 = vpop.f32.mrf.mxu0
        %v4357 = vadd.f32 %v4228, %v4356
        %4358 = vmatmul.bf16.gmra.mxu0 %v3484
        %v4359 = vpop.f32.mrf.mxu0
        %v4360 = vadd.f32 %v4231, %v4359
        %v4361 = vpop.f32.mrf.mxu0
        %v4362 = vadd.f32 %v4233, %v4361
        %4363 = vmatmul.bf16.gmra.mxu0 %v3511
        %v4364 = vpop.f32.mrf.mxu0
        %v4365 = vadd.f32 %v4236, %v4364
        %v4366 = vpop.f32.mrf.mxu0
        %v4367 = vadd.f32 %v4238, %v4366
        %4368 = vmatmul.bf16.gmra.mxu0 %v3538
        %v4369 = vpop.f32.mrf.mxu0
        %v4370 = vadd.f32 %v4241, %v4369
        %v4371 = vpop.f32.mrf.mxu0
        %v4372 = vadd.f32 %v4243, %v4371
        %4373 = vmatmul.bf16.gmra.mxu0 %v3565
        %v4374 = vpop.f32.mrf.mxu0
        %v4375 = vadd.f32 %v4246, %v4374
        %v4376 = vpop.f32.mrf.mxu0
        %v4377 = vadd.f32 %v4248, %v4376
        %4378 = vmatmul.bf16.gmra.mxu0 %v3592
        %v4379 = vpop.f32.mrf.mxu0
        %v4380 = vadd.f32 %v4251, %v4379
        %v4381 = vpop.f32.mrf.mxu0
        %v4382 = vadd.f32 %v4253, %v4381
        %4383 = vmatmul.bf16.gmra.mxu0 %v3619
        %v4384 = vpop.f32.mrf.mxu0
        %v4385 = vadd.f32 %v4256, %v4384
        %v4386 = vpop.f32.mrf.mxu0
        %v4387 = vadd.f32 %v4258, %v4386
        %4388 = vmatmul.bf16.gmra.mxu0 %v3646
        %v4389 = vpop.f32.mrf.mxu0
        %v4390 = vadd.f32 %v4261, %v4389
        %v4391 = vpop.f32.mrf.mxu0
        %v4392 = vadd.f32 %v4263, %v4391
        %4393 = vmatmul.bf16.gmra.mxu0 %v3673
        %v4394 = vpop.f32.mrf.mxu0
        %v4395 = vadd.f32 %v4266, %v4394
        %v4396 = vpop.f32.mrf.mxu0
        %v4397 = vadd.f32 %v4268, %v4396
        %4398 = vmatmul.bf16.gmra.mxu0 %v3700
        %v4399 = vpop.f32.mrf.mxu0
        %v4400 = vadd.f32 %v4271, %v4399
        %v4401 = vpop.f32.mrf.mxu0
        %v4402 = vadd.f32 %v4273, %v4401
        %4403 = vmatmul.bf16.gmra.mxu0 %v3727
        %v4404 = vpop.f32.mrf.mxu0
        %v4405 = vadd.f32 %v4276, %v4404
        %v4406 = vpop.f32.mrf.mxu0
        %v4407 = vadd.f32 %v4278, %v4406
        %4408 = vmatmul.bf16.gmra.mxu0 %v3754
        %v4409 = vpop.f32.mrf.mxu0
        %v4410 = vadd.f32 %v4281, %v4409
        %v4411 = vpop.f32.mrf.mxu0
        %v4412 = vadd.f32 %v4283, %v4411
        %4413 = vmatmul.bf16.gmra.mxu0 %v3781
        %v4414 = vpop.f32.mrf.mxu0
        %v4415 = vadd.f32 %v4286, %v4414
        %v4416 = vpop.f32.mrf.mxu0
        %v4417 = vadd.f32 %v4288, %v4416
        %4418 = vmatmul.bf16.gmra.mxu0 %v3808
        %v4419 = vpop.f32.mrf.mxu0
        %v4420 = vadd.f32 %v4291, %v4419
        %v4421 = vpop.f32.mrf.mxu0
        %v4422 = vadd.f32 %v4293, %v4421
        %4423 = vmatmul.bf16.gmra.mxu0 %v3835
        %v4424 = vpop.f32.mrf.mxu0
        %v4425 = vadd.f32 %v4296, %v4424
        %v4426 = vpop.f32.mrf.mxu0
        %v4427 = vadd.f32 %v4298, %v4426
        %4428 = vmatmul.bf16.gmra.mxu0 %v3862
        %v4429 = vpop.f32.mrf.mxu0
        %v4430 = vadd.f32 %v4301, %v4429
        %v4431 = vpop.f32.mrf.mxu0
        %v4432 = vadd.f32 %v4303, %v4431
        %4433 = vmatmul.bf16.gmra.mxu0 %v3889
        %v4434 = vpop.f32.mrf.mxu0
        %v4435 = vadd.f32 %v4306, %v4434
        %v4436 = vpop.f32.mrf.mxu0
        %v4437 = vadd.f32 %v4308, %v4436
        %4438 = vmatmul.bf16.gmra.mxu0 %v3916
        %v4439 = vpop.f32.mrf.mxu0
        %v4440 = vadd.f32 %v4311, %v4439
        %v4441 = vpop.f32.mrf.mxu0
        %v4442 = vadd.f32 %v4313, %v4441
        %4443 = vmatmul.bf16.gmra.mxu0 %v3943
        %v4444 = vpop.f32.mrf.mxu0
        %v4445 = vadd.f32 %v4316, %v4444
        %v4446 = vpop.f32.mrf.mxu0
        %v4447 = vadd.f32 %v4318, %v4446
        %4448 = vmatmul.bf16.gmra.mxu0 %v3970
        %v4449 = vpop.f32.mrf.mxu0
        %v4450 = vadd.f32 %v4321, %v4449
        %v4451 = vpop.f32.mrf.mxu0
        %v4452 = vadd.f32 %v4323, %v4451
        %4453 = vdwg.mxu0
        %4454 = vmatpush.bf16.msra.mxu0 %v4171
        %4455 = vmatpush.bf16.msra.mxu0 %v4170
        %4456 = vmatpush.bf16.msra.mxu0 %v4169
        %4457 = vmatpush.bf16.msra.mxu0 %v4168
        %4458 = vmatpush.bf16.msra.mxu0 %v4167
        %4459 = vmatpush.bf16.msra.mxu0 %v4166
        %4460 = vmatpush.bf16.msra.mxu0 %v4165
        %4461 = vmatpush.bf16.msra.mxu0 %v4164
        %4462 = vmatmul.bf16.gmra.mxu0 %v3358
        %v4463 = vpop.f32.mrf.mxu0
        %v4464 = vadd.f32 %v4335, %v4463
        %v4465 = vpop.f32.mrf.mxu0
        %v4466 = vadd.f32 %v4337, %v4465
        %4467 = vmatmul.bf16.gmra.mxu0 %v3385
        %v4468 = vpop.f32.mrf.mxu0
        %v4469 = vadd.f32 %v4340, %v4468
        %v4470 = vpop.f32.mrf.mxu0
        %v4471 = vadd.f32 %v4342, %v4470
        %4472 = vmatmul.bf16.gmra.mxu0 %v3412
        %v4473 = vpop.f32.mrf.mxu0
        %v4474 = vadd.f32 %v4345, %v4473
        %v4475 = vpop.f32.mrf.mxu0
        %v4476 = vadd.f32 %v4347, %v4475
        %4477 = vmatmul.bf16.gmra.mxu0 %v3439
        %v4478 = vpop.f32.mrf.mxu0
        %v4479 = vadd.f32 %v4350, %v4478
        %v4480 = vpop.f32.mrf.mxu0
        %v4481 = vadd.f32 %v4352, %v4480
        %4482 = vmatmul.bf16.gmra.mxu0 %v3466
        %v4483 = vpop.f32.mrf.mxu0
        %v4484 = vadd.f32 %v4355, %v4483
        %v4485 = vpop.f32.mrf.mxu0
        %v4486 = vadd.f32 %v4357, %v4485
        %4487 = vmatmul.bf16.gmra.mxu0 %v3493
        %v4488 = vpop.f32.mrf.mxu0
        %v4489 = vadd.f32 %v4360, %v4488
        %v4490 = vpop.f32.mrf.mxu0
        %v4491 = vadd.f32 %v4362, %v4490
        %4492 = vmatmul.bf16.gmra.mxu0 %v3520
        %v4493 = vpop.f32.mrf.mxu0
        %v4494 = vadd.f32 %v4365, %v4493
        %v4495 = vpop.f32.mrf.mxu0
        %v4496 = vadd.f32 %v4367, %v4495
        %4497 = vmatmul.bf16.gmra.mxu0 %v3547
        %v4498 = vpop.f32.mrf.mxu0
        %v4499 = vadd.f32 %v4370, %v4498
        %v4500 = vpop.f32.mrf.mxu0
        %v4501 = vadd.f32 %v4372, %v4500
        %4502 = vmatmul.bf16.gmra.mxu0 %v3574
        %v4503 = vpop.f32.mrf.mxu0
        %v4504 = vadd.f32 %v4375, %v4503
        %v4505 = vpop.f32.mrf.mxu0
        %v4506 = vadd.f32 %v4377, %v4505
        %4507 = vmatmul.bf16.gmra.mxu0 %v3601
        %v4508 = vpop.f32.mrf.mxu0
        %v4509 = vadd.f32 %v4380, %v4508
        %v4510 = vpop.f32.mrf.mxu0
        %v4511 = vadd.f32 %v4382, %v4510
        %4512 = vmatmul.bf16.gmra.mxu0 %v3628
        %v4513 = vpop.f32.mrf.mxu0
        %v4514 = vadd.f32 %v4385, %v4513
        %v4515 = vpop.f32.mrf.mxu0
        %v4516 = vadd.f32 %v4387, %v4515
        %4517 = vmatmul.bf16.gmra.mxu0 %v3655
        %v4518 = vpop.f32.mrf.mxu0
        %v4519 = vadd.f32 %v4390, %v4518
        %v4520 = vpop.f32.mrf.mxu0
        %v4521 = vadd.f32 %v4392, %v4520
        %4522 = vmatmul.bf16.gmra.mxu0 %v3682
        %v4523 = vpop.f32.mrf.mxu0
        %v4524 = vadd.f32 %v4395, %v4523
        %v4525 = vpop.f32.mrf.mxu0
        %v4526 = vadd.f32 %v4397, %v4525
        %4527 = vmatmul.bf16.gmra.mxu0 %v3709
        %v4528 = vpop.f32.mrf.mxu0
        %v4529 = vadd.f32 %v4400, %v4528
        %v4530 = vpop.f32.mrf.mxu0
        %v4531 = vadd.f32 %v4402, %v4530
        %4532 = vmatmul.bf16.gmra.mxu0 %v3736
        %v4533 = vpop.f32.mrf.mxu0
        %v4534 = vadd.f32 %v4405, %v4533
        %v4535 = vpop.f32.mrf.mxu0
        %v4536 = vadd.f32 %v4407, %v4535
        %4537 = vmatmul.bf16.gmra.mxu0 %v3763
        %v4538 = vpop.f32.mrf.mxu0
        %v4539 = vadd.f32 %v4410, %v4538
        %v4540 = vpop.f32.mrf.mxu0
        %v4541 = vadd.f32 %v4412, %v4540
        %4542 = vmatmul.bf16.gmra.mxu0 %v3790
        %v4543 = vpop.f32.mrf.mxu0
        %v4544 = vadd.f32 %v4415, %v4543
        %v4545 = vpop.f32.mrf.mxu0
        %v4546 = vadd.f32 %v4417, %v4545
        %4547 = vmatmul.bf16.gmra.mxu0 %v3817
        %v4548 = vpop.f32.mrf.mxu0
        %v4549 = vadd.f32 %v4420, %v4548
        %v4550 = vpop.f32.mrf.mxu0
        %v4551 = vadd.f32 %v4422, %v4550
        %4552 = vmatmul.bf16.gmra.mxu0 %v3844
        %v4553 = vpop.f32.mrf.mxu0
        %v4554 = vadd.f32 %v4425, %v4553
        %v4555 = vpop.f32.mrf.mxu0
        %v4556 = vadd.f32 %v4427, %v4555
        %4557 = vmatmul.bf16.gmra.mxu0 %v3871
        %v4558 = vpop.f32.mrf.mxu0
        %v4559 = vadd.f32 %v4430, %v4558
        %v4560 = vpop.f32.mrf.mxu0
        %v4561 = vadd.f32 %v4432, %v4560
        %4562 = vmatmul.bf16.gmra.mxu0 %v3898
        %v4563 = vpop.f32.mrf.mxu0
        %v4564 = vadd.f32 %v4435, %v4563
        %v4565 = vpop.f32.mrf.mxu0
        %v4566 = vadd.f32 %v4437, %v4565
        %4567 = vmatmul.bf16.gmra.mxu0 %v3925
        %v4568 = vpop.f32.mrf.mxu0
        %v4569 = vadd.f32 %v4440, %v4568
        %v4570 = vpop.f32.mrf.mxu0
        %v4571 = vadd.f32 %v4442, %v4570
        %4572 = vmatmul.bf16.gmra.mxu0 %v3952
        %v4573 = vpop.f32.mrf.mxu0
        %v4574 = vadd.f32 %v4445, %v4573
        %v4575 = vpop.f32.mrf.mxu0
        %v4576 = vadd.f32 %v4447, %v4575
        %4577 = vmatmul.bf16.gmra.mxu0 %v3979
        %v4578 = vpop.f32.mrf.mxu0
        %v4579 = vadd.f32 %v4450, %v4578
        %v4580 = vpop.f32.mrf.mxu0
        %v4581 = vadd.f32 %v4452, %v4580
        %4582 = vdwg.mxu0
        %v4585 = vrot.slane %v1416, 1
        %v4586 = vsel %vm1468, %v1890, %v4585
        %v4587 = vrot.slane %v1417, 1
        %v4588 = vsel %vm1468, %v4585, %v4587
        %v4589 = vrot.slane %v1418, 1
        %v4590 = vsel %vm1468, %v4587, %v4589
        %v4597 = vrot.slane %v1417, 2
        %v4598 = vsel %vm1614, %v1902, %v4597
        %v4599 = vrot.slane %v1418, 2
        %v4600 = vsel %vm1614, %v4597, %v4599
        %v4601 = vrot.slane %v1419, 2
        %v4602 = vsel %vm1614, %v4599, %v4601
        %v4607 = vpack.c.bf16 %v1483, %v1480
        %v4608 = vpack.c.bf16 %v1629, %v1626
        %v4609 = vpack.c.bf16 %v1413, %v1412
        %v4610 = vpack.c.bf16 %v1889, %v1887
        %v4611 = vpack.c.bf16 %v1899, %v1711
        %v4612 = vpack.c.bf16 %v1415, %v1414
        %v4613 = vpack.c.bf16 %v4586, %v1891
        %v4614 = vpack.c.bf16 %v1903, %v1901
        %v4615 = vpack.c.bf16 %v1417, %v1416
        %v4616 = vpack.c.bf16 %v4590, %v4588
        %v4617 = vpack.c.bf16 %v4600, %v4598
        %v4618 = vpack.c.bf16 %v1418, %v1418
        %v4619 = vpack.c.bf16 %v4589, %v4589
        %v4620 = vpack.c.bf16 %v4602, %v4602
        %s4621 = scalar_lea.vmem [#allocation7], 384
        %v4622 = vld [vmem:[%s4621] sm:$0xf]
        %v4623 = vld [vmem:[%s4621 + $0x4] sm:$0xf]
        %v4624 = vld [vmem:[%s4621 + $0x8] sm:$0xf]
        %v4625 = vld [vmem:[%s4621 + $0xc] sm:$0xf]
        %v4626 = vld [vmem:[%s4621 + $0x10] sm:$0xf]
        %v4627 = vld [vmem:[%s4621 + $0x14] sm:$0xf]
        %v4628 = vld [vmem:[%s4621 + $0x18] sm:$0xf]
        %v4629 = vld [vmem:[%s4621 + $0x1c] sm:$0xf]
        %v4630 = vld [vmem:[%s4621 + $0x20] sm:$0xf]
        %v4631 = vld [vmem:[%s4621 + $0x24] sm:$0xf]
        %v4632 = vld [vmem:[%s4621 + $0x28] sm:$0xf]
        %v4633 = vld [vmem:[%s4621 + $0x2c] sm:$0xf]
        %v4634 = vld [vmem:[%s4621 + $0x30] sm:$0xf]
        %v4635 = vld [vmem:[%s4621 + $0x34] sm:$0xf]
        %v4636 = vld [vmem:[%s4621 + $0x38] sm:$0xf]
        %v4637 = vld [vmem:[%s4621 + $0x3c] sm:$0xf]
        %v4638 = vld [vmem:[%s4621 + $0x40] sm:$0xf]
        %v4639 = vld [vmem:[%s4621 + $0x44] sm:$0xf]
        %v4640 = vld [vmem:[%s4621 + $0x48] sm:$0xf]
        %v4641 = vld [vmem:[%s4621 + $0x4c] sm:$0xf]
        %v4642 = vld [vmem:[%s4621 + $0x50] sm:$0xf]
        %v4643 = vld [vmem:[%s4621 + $0x54] sm:$0xf]
        %v4644 = vld [vmem:[%s4621 + $0x58] sm:$0xf]
        %v4645 = vld [vmem:[%s4621 + $0x5c] sm:$0xf]
        %v4646 = vld [vmem:[%s4621 + $0x60] sm:$0xf]
        %v4647 = vld [vmem:[%s4621 + $0x64] sm:$0xf]
        %v4648 = vld [vmem:[%s4621 + $0x68] sm:$0xf]
        %v4649 = vld [vmem:[%s4621 + $0x6c] sm:$0xf]
        %v4650 = vld [vmem:[%s4621 + $0x70] sm:$0xf]
        %v4651 = vld [vmem:[%s4621 + $0x74] sm:$0xf]
        %v4652 = vld [vmem:[%s4621 + $0x78] sm:$0xf]
        %v4653 = vld [vmem:[%s4621 + $0x7c] sm:$0xf]
        %v4654 = vld [vmem:[%s4621 + $0x80] sm:$0xf]
        %v4655 = vld [vmem:[%s4621 + $0x84] sm:$0xf]
        %v4656 = vld [vmem:[%s4621 + $0x88] sm:$0xf]
        %v4657 = vld [vmem:[%s4621 + $0x8c] sm:$0xf]
        %v4658 = vld [vmem:[%s4621 + $0x90] sm:$0xf]
        %v4659 = vld [vmem:[%s4621 + $0x94] sm:$0xf]
        %v4660 = vld [vmem:[%s4621 + $0x98] sm:$0xf]
        %v4661 = vld [vmem:[%s4621 + $0x9c] sm:$0xf]
        %v4662 = vld [vmem:[%s4621 + $0xa0] sm:$0xf]
        %v4663 = vld [vmem:[%s4621 + $0xa4] sm:$0xf]
        %v4664 = vld [vmem:[%s4621 + $0xa8] sm:$0xf]
        %v4665 = vld [vmem:[%s4621 + $0xac] sm:$0xf]
        %v4666 = vld [vmem:[%s4621 + $0xb0] sm:$0xf]
        %v4667 = vld [vmem:[%s4621 + $0xb4] sm:$0xf]
        %v4668 = vld [vmem:[%s4621 + $0xb8] sm:$0xf]
        %v4669 = vld [vmem:[%s4621 + $0xbc] sm:$0xf]
        %v4671 = vshrl.u32 %v4607, 16
        %v4673 = vrot.slane %v4671, 3
        %v4674 = vshll.u32 %v4607, 16
        %v4676 = vrot.slane %v4674, 4
        %v4677 = vor.u32 %v4673, %v4676
        %v4678 = vsel %vm2032, %v4677, %v3429
        %v4680 = vshrl.u32 %v4608, 16
        %v4682 = vrot.slane %v4680, 3
        %v4683 = vshll.u32 %v4608, 16
        %v4685 = vrot.slane %v4683, 4
        %v4686 = vor.u32 %v4682, %v4685
        %v4687 = vsel %vm2032, %v4686, %v3438
        %v4689 = vshrl.u32 %v4609, 16
        %v4691 = vrot.slane %v4689, 3
        %v4692 = vshll.u32 %v4609, 16
        %v4694 = vrot.slane %v4692, 4
        %v4695 = vor.u32 %v4691, %v4694
        %v4696 = vsel %vm2032, %v3933, %v4695
        %v4698 = vshrl.u32 %v4610, 16
        %v4700 = vrot.slane %v4698, 3
        %v4701 = vshll.u32 %v4610, 16
        %v4703 = vrot.slane %v4701, 4
        %v4704 = vor.u32 %v4700, %v4703
        %v4705 = vsel %vm2032, %v3942, %v4704
        %v4707 = vshrl.u32 %v4611, 16
        %v4709 = vrot.slane %v4707, 3
        %v4710 = vshll.u32 %v4611, 16
        %v4712 = vrot.slane %v4710, 4
        %v4713 = vor.u32 %v4709, %v4712
        %v4714 = vsel %vm2032, %v3951, %v4713
        %v4716 = vshrl.u32 %v4612, 16
        %v4718 = vrot.slane %v4716, 3
        %v4719 = vshll.u32 %v4612, 16
        %v4721 = vrot.slane %v4719, 4
        %v4722 = vor.u32 %v4718, %v4721
        %v4723 = vsel %vm2032, %v4695, %v4722
        %v4725 = vshrl.u32 %v4613, 16
        %v4727 = vrot.slane %v4725, 3
        %v4728 = vshll.u32 %v4613, 16
        %v4730 = vrot.slane %v4728, 4
        %v4731 = vor.u32 %v4727, %v4730
        %v4732 = vsel %vm2032, %v4704, %v4731
        %v4734 = vshrl.u32 %v4614, 16
        %v4736 = vrot.slane %v4734, 3
        %v4737 = vshll.u32 %v4614, 16
        %v4739 = vrot.slane %v4737, 4
        %v4740 = vor.u32 %v4736, %v4739
        %v4741 = vsel %vm2032, %v4713, %v4740
        %v4743 = vshrl.u32 %v4615, 16
        %v4745 = vrot.slane %v4743, 3
        %v4746 = vshll.u32 %v4615, 16
        %v4748 = vrot.slane %v4746, 4
        %v4749 = vor.u32 %v4745, %v4748
        %v4750 = vsel %vm2032, %v4722, %v4749
        %v4752 = vshrl.u32 %v4616, 16
        %v4754 = vrot.slane %v4752, 3
        %v4755 = vshll.u32 %v4616, 16
        %v4757 = vrot.slane %v4755, 4
        %v4758 = vor.u32 %v4754, %v4757
        %v4759 = vsel %vm2032, %v4731, %v4758
        %v4761 = vshrl.u32 %v4617, 16
        %v4763 = vrot.slane %v4761, 3
        %v4764 = vshll.u32 %v4617, 16
        %v4766 = vrot.slane %v4764, 4
        %v4767 = vor.u32 %v4763, %v4766
        %v4768 = vsel %vm2032, %v4740, %v4767
        %v4770 = vshrl.u32 %v4618, 16
        %v4772 = vrot.slane %v4770, 3
        %v4773 = vshll.u32 %v4618, 16
        %v4775 = vrot.slane %v4773, 4
        %v4776 = vor.u32 %v4772, %v4775
        %v4777 = vsel %vm2032, %v4749, %v4776
        %v4779 = vshrl.u32 %v4619, 16
        %v4781 = vrot.slane %v4779, 3
        %v4782 = vshll.u32 %v4619, 16
        %v4784 = vrot.slane %v4782, 4
        %v4785 = vor.u32 %v4781, %v4784
        %v4786 = vsel %vm2032, %v4758, %v4785
        %v4788 = vshrl.u32 %v4620, 16
        %v4790 = vrot.slane %v4788, 3
        %v4791 = vshll.u32 %v4620, 16
        %v4793 = vrot.slane %v4791, 4
        %v4794 = vor.u32 %v4790, %v4793
        %v4795 = vsel %vm2032, %v4767, %v4794
        %v4858 = vunpack.c.l.b16 %v4622
        %v4859 = vunpack.c.l.b16 %v4623
        %v4860 = vunpack.c.l.b16 %v4624
        %v4861 = vunpack.c.l.b16 %v4625
        %v4862 = vunpack.c.l.b16 %v4626
        %v4863 = vunpack.c.l.b16 %v4627
        %v4864 = vunpack.c.l.b16 %v4628
        %v4865 = vunpack.c.l.b16 %v4629
        %v4866 = vunpack.c.l.b16 %v4630
        %v4867 = vunpack.c.l.b16 %v4631
        %v4868 = vunpack.c.l.b16 %v4632
        %v4869 = vunpack.c.l.b16 %v4633
        %v4870 = vunpack.c.l.b16 %v4634
        %v4871 = vunpack.c.l.b16 %v4635
        %v4872 = vunpack.c.l.b16 %v4636
        %v4873 = vunpack.c.l.b16 %v4637
        %v4874 = vunpack.c.l.b16 %v4638
        %v4875 = vunpack.c.l.b16 %v4639
        %v4876 = vunpack.c.l.b16 %v4640
        %v4877 = vunpack.c.l.b16 %v4641
        %v4878 = vunpack.c.l.b16 %v4642
        %v4879 = vunpack.c.l.b16 %v4643
        %v4880 = vunpack.c.l.b16 %v4644
        %v4881 = vunpack.c.l.b16 %v4645
        %v4882 = vunpack.c.l.b16 %v4646
        %v4883 = vunpack.c.l.b16 %v4647
        %v4884 = vunpack.c.l.b16 %v4648
        %v4885 = vunpack.c.l.b16 %v4649
        %v4886 = vunpack.c.l.b16 %v4650
        %v4887 = vunpack.c.l.b16 %v4651
        %v4888 = vunpack.c.l.b16 %v4652
        %v4889 = vunpack.c.l.b16 %v4653
        %v4890 = vunpack.c.l.b16 %v4654
        %v4891 = vunpack.c.l.b16 %v4655
        %v4892 = vunpack.c.l.b16 %v4656
        %v4893 = vunpack.c.l.b16 %v4657
        %v4894 = vunpack.c.l.b16 %v4658
        %v4895 = vunpack.c.l.b16 %v4659
        %v4896 = vunpack.c.l.b16 %v4660
        %v4897 = vunpack.c.l.b16 %v4661
        %v4898 = vunpack.c.l.b16 %v4662
        %v4899 = vunpack.c.l.b16 %v4663
        %v4900 = vunpack.c.l.b16 %v4664
        %v4901 = vunpack.c.l.b16 %v4665
        %v4902 = vunpack.c.l.b16 %v4666
        %v4903 = vunpack.c.l.b16 %v4667
        %v4904 = vunpack.c.l.b16 %v4668
        %v4905 = vunpack.c.l.b16 %v4669
        %v4906 = vpack.c.b16 %v4859, %v4858
        %v4907 = vpack.c.b16 %v4861, %v4860
        %v4908 = vpack.c.b16 %v4863, %v4862
        %v4909 = vpack.c.b16 %v4865, %v4864
        %v4910 = vpack.c.b16 %v4867, %v4866
        %v4911 = vpack.c.b16 %v4869, %v4868
        %v4912 = vpack.c.b16 %v4871, %v4870
        %v4913 = vpack.c.b16 %v4873, %v4872
        %v4914 = vpack.c.b16 %v4875, %v4874
        %v4915 = vpack.c.b16 %v4877, %v4876
        %v4916 = vpack.c.b16 %v4879, %v4878
        %v4917 = vpack.c.b16 %v4881, %v4880
        %v4918 = vpack.c.b16 %v4883, %v4882
        %v4919 = vpack.c.b16 %v4885, %v4884
        %v4920 = vpack.c.b16 %v4887, %v4886
        %v4921 = vpack.c.b16 %v4889, %v4888
        %v4922 = vpack.c.b16 %v4891, %v4890
        %v4923 = vpack.c.b16 %v4893, %v4892
        %v4924 = vpack.c.b16 %v4895, %v4894
        %v4925 = vpack.c.b16 %v4897, %v4896
        %v4926 = vpack.c.b16 %v4899, %v4898
        %v4927 = vpack.c.b16 %v4901, %v4900
        %v4928 = vpack.c.b16 %v4903, %v4902
        %v4929 = vpack.c.b16 %v4905, %v4904
        %4954 = vmatpush.bf16.msra.mxu0 %v4913
        %4955 = vmatpush.bf16.msra.mxu0 %v4912
        %4956 = vmatpush.bf16.msra.mxu0 %v4911
        %4957 = vmatpush.bf16.msra.mxu0 %v4910
        %4958 = vmatpush.bf16.msra.mxu0 %v4909
        %4959 = vmatpush.bf16.msra.mxu0 %v4908
        %4960 = vmatpush.bf16.msra.mxu0 %v4907
        %4961 = vmatpush.bf16.msra.mxu0 %v4906
        %4962 = vmatmul.bf16.gmra.mxu0 %v3421
        %v4963 = vpop.f32.mrf.mxu0
        %v4964 = vadd.f32 0.0, %v4963
        %v4965 = vpop.f32.mrf.mxu0
        %v4966 = vadd.f32 0.0, %v4965
        %4967 = vmatmul.bf16.gmra.mxu0 %v3448
        %v4968 = vpop.f32.mrf.mxu0
        %v4969 = vadd.f32 0.0, %v4968
        %v4970 = vpop.f32.mrf.mxu0
        %v4971 = vadd.f32 0.0, %v4970
        %4972 = vmatmul.bf16.gmra.mxu0 %v3475
        %v4973 = vpop.f32.mrf.mxu0
        %v4974 = vadd.f32 0.0, %v4973
        %v4975 = vpop.f32.mrf.mxu0
        %v4976 = vadd.f32 0.0, %v4975
        %4977 = vmatmul.bf16.gmra.mxu0 %v3502
        %v4978 = vpop.f32.mrf.mxu0
        %v4979 = vadd.f32 0.0, %v4978
        %v4980 = vpop.f32.mrf.mxu0
        %v4981 = vadd.f32 0.0, %v4980
        %4982 = vmatmul.bf16.gmra.mxu0 %v3529
        %v4983 = vpop.f32.mrf.mxu0
        %v4984 = vadd.f32 0.0, %v4983
        %v4985 = vpop.f32.mrf.mxu0
        %v4986 = vadd.f32 0.0, %v4985
        %4987 = vmatmul.bf16.gmra.mxu0 %v3556
        %v4988 = vpop.f32.mrf.mxu0
        %v4989 = vadd.f32 0.0, %v4988
        %v4990 = vpop.f32.mrf.mxu0
        %v4991 = vadd.f32 0.0, %v4990
        %4992 = vmatmul.bf16.gmra.mxu0 %v3583
        %v4993 = vpop.f32.mrf.mxu0
        %v4994 = vadd.f32 0.0, %v4993
        %v4995 = vpop.f32.mrf.mxu0
        %v4996 = vadd.f32 0.0, %v4995
        %4997 = vmatmul.bf16.gmra.mxu0 %v3610
        %v4998 = vpop.f32.mrf.mxu0
        %v4999 = vadd.f32 0.0, %v4998
        %v5000 = vpop.f32.mrf.mxu0
        %v5001 = vadd.f32 0.0, %v5000
        %5002 = vmatmul.bf16.gmra.mxu0 %v3637
        %v5003 = vpop.f32.mrf.mxu0
        %v5004 = vadd.f32 0.0, %v5003
        %v5005 = vpop.f32.mrf.mxu0
        %v5006 = vadd.f32 0.0, %v5005
        %5007 = vmatmul.bf16.gmra.mxu0 %v3664
        %v5008 = vpop.f32.mrf.mxu0
        %v5009 = vadd.f32 0.0, %v5008
        %v5010 = vpop.f32.mrf.mxu0
        %v5011 = vadd.f32 0.0, %v5010
        %5012 = vmatmul.bf16.gmra.mxu0 %v3691
        %v5013 = vpop.f32.mrf.mxu0
        %v5014 = vadd.f32 0.0, %v5013
        %v5015 = vpop.f32.mrf.mxu0
        %v5016 = vadd.f32 0.0, %v5015
        %5017 = vmatmul.bf16.gmra.mxu0 %v3718
        %v5018 = vpop.f32.mrf.mxu0
        %v5019 = vadd.f32 0.0, %v5018
        %v5020 = vpop.f32.mrf.mxu0
        %v5021 = vadd.f32 0.0, %v5020
        %5022 = vmatmul.bf16.gmra.mxu0 %v3745
        %v5023 = vpop.f32.mrf.mxu0
        %v5024 = vadd.f32 0.0, %v5023
        %v5025 = vpop.f32.mrf.mxu0
        %v5026 = vadd.f32 0.0, %v5025
        %5027 = vmatmul.bf16.gmra.mxu0 %v3772
        %v5028 = vpop.f32.mrf.mxu0
        %v5029 = vadd.f32 0.0, %v5028
        %v5030 = vpop.f32.mrf.mxu0
        %v5031 = vadd.f32 0.0, %v5030
        %5032 = vmatmul.bf16.gmra.mxu0 %v3799
        %v5033 = vpop.f32.mrf.mxu0
        %v5034 = vadd.f32 0.0, %v5033
        %v5035 = vpop.f32.mrf.mxu0
        %v5036 = vadd.f32 0.0, %v5035
        %5037 = vmatmul.bf16.gmra.mxu0 %v3826
        %v5038 = vpop.f32.mrf.mxu0
        %v5039 = vadd.f32 0.0, %v5038
        %v5040 = vpop.f32.mrf.mxu0
        %v5041 = vadd.f32 0.0, %v5040
        %5042 = vmatmul.bf16.gmra.mxu0 %v3853
        %v5043 = vpop.f32.mrf.mxu0
        %v5044 = vadd.f32 0.0, %v5043
        %v5045 = vpop.f32.mrf.mxu0
        %v5046 = vadd.f32 0.0, %v5045
        %5047 = vmatmul.bf16.gmra.mxu0 %v3880
        %v5048 = vpop.f32.mrf.mxu0
        %v5049 = vadd.f32 0.0, %v5048
        %v5050 = vpop.f32.mrf.mxu0
        %v5051 = vadd.f32 0.0, %v5050
        %5052 = vmatmul.bf16.gmra.mxu0 %v3907
        %v5053 = vpop.f32.mrf.mxu0
        %v5054 = vadd.f32 0.0, %v5053
        %v5055 = vpop.f32.mrf.mxu0
        %v5056 = vadd.f32 0.0, %v5055
        %5057 = vmatmul.bf16.gmra.mxu0 %v3934
        %v5058 = vpop.f32.mrf.mxu0
        %v5059 = vadd.f32 0.0, %v5058
        %v5060 = vpop.f32.mrf.mxu0
        %v5061 = vadd.f32 0.0, %v5060
        %5062 = vmatmul.bf16.gmra.mxu0 %v4696
        %v5063 = vpop.f32.mrf.mxu0
        %v5064 = vadd.f32 0.0, %v5063
        %v5065 = vpop.f32.mrf.mxu0
        %v5066 = vadd.f32 0.0, %v5065
        %5067 = vmatmul.bf16.gmra.mxu0 %v4723
        %v5068 = vpop.f32.mrf.mxu0
        %v5069 = vadd.f32 0.0, %v5068
        %v5070 = vpop.f32.mrf.mxu0
        %v5071 = vadd.f32 0.0, %v5070
        %5072 = vmatmul.bf16.gmra.mxu0 %v4750
        %v5073 = vpop.f32.mrf.mxu0
        %v5074 = vadd.f32 0.0, %v5073
        %v5075 = vpop.f32.mrf.mxu0
        %v5076 = vadd.f32 0.0, %v5075
        %5077 = vmatmul.bf16.gmra.mxu0 %v4777
        %v5078 = vpop.f32.mrf.mxu0
        %v5079 = vadd.f32 0.0, %v5078
        %v5080 = vpop.f32.mrf.mxu0
        %v5081 = vadd.f32 0.0, %v5080
        %5082 = vdwg.mxu0
        %5083 = vmatpush.bf16.msra.mxu0 %v4921
        %5084 = vmatpush.bf16.msra.mxu0 %v4920
        %5085 = vmatpush.bf16.msra.mxu0 %v4919
        %5086 = vmatpush.bf16.msra.mxu0 %v4918
        %5087 = vmatpush.bf16.msra.mxu0 %v4917
        %5088 = vmatpush.bf16.msra.mxu0 %v4916
        %5089 = vmatpush.bf16.msra.mxu0 %v4915
        %5090 = vmatpush.bf16.msra.mxu0 %v4914
        %5091 = vmatmul.bf16.gmra.mxu0 %v4678
        %v5092 = vpop.f32.mrf.mxu0
        %v5093 = vadd.f32 %v4964, %v5092
        %v5094 = vpop.f32.mrf.mxu0
        %v5095 = vadd.f32 %v4966, %v5094
        %5096 = vmatmul.bf16.gmra.mxu0 %v3457
        %v5097 = vpop.f32.mrf.mxu0
        %v5098 = vadd.f32 %v4969, %v5097
        %v5099 = vpop.f32.mrf.mxu0
        %v5100 = vadd.f32 %v4971, %v5099
        %5101 = vmatmul.bf16.gmra.mxu0 %v3484
        %v5102 = vpop.f32.mrf.mxu0
        %v5103 = vadd.f32 %v4974, %v5102
        %v5104 = vpop.f32.mrf.mxu0
        %v5105 = vadd.f32 %v4976, %v5104
        %5106 = vmatmul.bf16.gmra.mxu0 %v3511
        %v5107 = vpop.f32.mrf.mxu0
        %v5108 = vadd.f32 %v4979, %v5107
        %v5109 = vpop.f32.mrf.mxu0
        %v5110 = vadd.f32 %v4981, %v5109
        %5111 = vmatmul.bf16.gmra.mxu0 %v3538
        %v5112 = vpop.f32.mrf.mxu0
        %v5113 = vadd.f32 %v4984, %v5112
        %v5114 = vpop.f32.mrf.mxu0
        %v5115 = vadd.f32 %v4986, %v5114
        %5116 = vmatmul.bf16.gmra.mxu0 %v3565
        %v5117 = vpop.f32.mrf.mxu0
        %v5118 = vadd.f32 %v4989, %v5117
        %v5119 = vpop.f32.mrf.mxu0
        %v5120 = vadd.f32 %v4991, %v5119
        %5121 = vmatmul.bf16.gmra.mxu0 %v3592
        %v5122 = vpop.f32.mrf.mxu0
        %v5123 = vadd.f32 %v4994, %v5122
        %v5124 = vpop.f32.mrf.mxu0
        %v5125 = vadd.f32 %v4996, %v5124
        %5126 = vmatmul.bf16.gmra.mxu0 %v3619
        %v5127 = vpop.f32.mrf.mxu0
        %v5128 = vadd.f32 %v4999, %v5127
        %v5129 = vpop.f32.mrf.mxu0
        %v5130 = vadd.f32 %v5001, %v5129
        %5131 = vmatmul.bf16.gmra.mxu0 %v3646
        %v5132 = vpop.f32.mrf.mxu0
        %v5133 = vadd.f32 %v5004, %v5132
        %v5134 = vpop.f32.mrf.mxu0
        %v5135 = vadd.f32 %v5006, %v5134
        %5136 = vmatmul.bf16.gmra.mxu0 %v3673
        %v5137 = vpop.f32.mrf.mxu0
        %v5138 = vadd.f32 %v5009, %v5137
        %v5139 = vpop.f32.mrf.mxu0
        %v5140 = vadd.f32 %v5011, %v5139
        %5141 = vmatmul.bf16.gmra.mxu0 %v3700
        %v5142 = vpop.f32.mrf.mxu0
        %v5143 = vadd.f32 %v5014, %v5142
        %v5144 = vpop.f32.mrf.mxu0
        %v5145 = vadd.f32 %v5016, %v5144
        %5146 = vmatmul.bf16.gmra.mxu0 %v3727
        %v5147 = vpop.f32.mrf.mxu0
        %v5148 = vadd.f32 %v5019, %v5147
        %v5149 = vpop.f32.mrf.mxu0
        %v5150 = vadd.f32 %v5021, %v5149
        %5151 = vmatmul.bf16.gmra.mxu0 %v3754
        %v5152 = vpop.f32.mrf.mxu0
        %v5153 = vadd.f32 %v5024, %v5152
        %v5154 = vpop.f32.mrf.mxu0
        %v5155 = vadd.f32 %v5026, %v5154
        %5156 = vmatmul.bf16.gmra.mxu0 %v3781
        %v5157 = vpop.f32.mrf.mxu0
        %v5158 = vadd.f32 %v5029, %v5157
        %v5159 = vpop.f32.mrf.mxu0
        %v5160 = vadd.f32 %v5031, %v5159
        %5161 = vmatmul.bf16.gmra.mxu0 %v3808
        %v5162 = vpop.f32.mrf.mxu0
        %v5163 = vadd.f32 %v5034, %v5162
        %v5164 = vpop.f32.mrf.mxu0
        %v5165 = vadd.f32 %v5036, %v5164
        %5166 = vmatmul.bf16.gmra.mxu0 %v3835
        %v5167 = vpop.f32.mrf.mxu0
        %v5168 = vadd.f32 %v5039, %v5167
        %v5169 = vpop.f32.mrf.mxu0
        %v5170 = vadd.f32 %v5041, %v5169
        %5171 = vmatmul.bf16.gmra.mxu0 %v3862
        %v5172 = vpop.f32.mrf.mxu0
        %v5173 = vadd.f32 %v5044, %v5172
        %v5174 = vpop.f32.mrf.mxu0
        %v5175 = vadd.f32 %v5046, %v5174
        %5176 = vmatmul.bf16.gmra.mxu0 %v3889
        %v5177 = vpop.f32.mrf.mxu0
        %v5178 = vadd.f32 %v5049, %v5177
        %v5179 = vpop.f32.mrf.mxu0
        %v5180 = vadd.f32 %v5051, %v5179
        %5181 = vmatmul.bf16.gmra.mxu0 %v3916
        %v5182 = vpop.f32.mrf.mxu0
        %v5183 = vadd.f32 %v5054, %v5182
        %v5184 = vpop.f32.mrf.mxu0
        %v5185 = vadd.f32 %v5056, %v5184
        %5186 = vmatmul.bf16.gmra.mxu0 %v3943
        %v5187 = vpop.f32.mrf.mxu0
        %v5188 = vadd.f32 %v5059, %v5187
        %v5189 = vpop.f32.mrf.mxu0
        %v5190 = vadd.f32 %v5061, %v5189
        %5191 = vmatmul.bf16.gmra.mxu0 %v4705
        %v5192 = vpop.f32.mrf.mxu0
        %v5193 = vadd.f32 %v5064, %v5192
        %v5194 = vpop.f32.mrf.mxu0
        %v5195 = vadd.f32 %v5066, %v5194
        %5196 = vmatmul.bf16.gmra.mxu0 %v4732
        %v5197 = vpop.f32.mrf.mxu0
        %v5198 = vadd.f32 %v5069, %v5197
        %v5199 = vpop.f32.mrf.mxu0
        %v5200 = vadd.f32 %v5071, %v5199
        %5201 = vmatmul.bf16.gmra.mxu0 %v4759
        %v5202 = vpop.f32.mrf.mxu0
        %v5203 = vadd.f32 %v5074, %v5202
        %v5204 = vpop.f32.mrf.mxu0
        %v5205 = vadd.f32 %v5076, %v5204
        %5206 = vmatmul.bf16.gmra.mxu0 %v4786
        %v5207 = vpop.f32.mrf.mxu0
        %v5208 = vadd.f32 %v5079, %v5207
        %v5209 = vpop.f32.mrf.mxu0
        %v5210 = vadd.f32 %v5081, %v5209
        %5211 = vdwg.mxu0
        %5212 = vmatpush.bf16.msra.mxu0 %v4929
        %5213 = vmatpush.bf16.msra.mxu0 %v4928
        %5214 = vmatpush.bf16.msra.mxu0 %v4927
        %5215 = vmatpush.bf16.msra.mxu0 %v4926
        %5216 = vmatpush.bf16.msra.mxu0 %v4925
        %5217 = vmatpush.bf16.msra.mxu0 %v4924
        %5218 = vmatpush.bf16.msra.mxu0 %v4923
        %5219 = vmatpush.bf16.msra.mxu0 %v4922
        %5220 = vmatmul.bf16.gmra.mxu0 %v4687
        %v5221 = vpop.f32.mrf.mxu0
        %v5222 = vadd.f32 %v5093, %v5221
        %v5223 = vpop.f32.mrf.mxu0
        %v5224 = vadd.f32 %v5095, %v5223
        %5225 = vmatmul.bf16.gmra.mxu0 %v3466
        %v5226 = vpop.f32.mrf.mxu0
        %v5227 = vadd.f32 %v5098, %v5226
        %v5228 = vpop.f32.mrf.mxu0
        %v5229 = vadd.f32 %v5100, %v5228
        %5230 = vmatmul.bf16.gmra.mxu0 %v3493
        %v5231 = vpop.f32.mrf.mxu0
        %v5232 = vadd.f32 %v5103, %v5231
        %v5233 = vpop.f32.mrf.mxu0
        %v5234 = vadd.f32 %v5105, %v5233
        %5235 = vmatmul.bf16.gmra.mxu0 %v3520
        %v5236 = vpop.f32.mrf.mxu0
        %v5237 = vadd.f32 %v5108, %v5236
        %v5238 = vpop.f32.mrf.mxu0
        %v5239 = vadd.f32 %v5110, %v5238
        %5240 = vmatmul.bf16.gmra.mxu0 %v3547
        %v5241 = vpop.f32.mrf.mxu0
        %v5242 = vadd.f32 %v5113, %v5241
        %v5243 = vpop.f32.mrf.mxu0
        %v5244 = vadd.f32 %v5115, %v5243
        %5245 = vmatmul.bf16.gmra.mxu0 %v3574
        %v5246 = vpop.f32.mrf.mxu0
        %v5247 = vadd.f32 %v5118, %v5246
        %v5248 = vpop.f32.mrf.mxu0
        %v5249 = vadd.f32 %v5120, %v5248
        %5250 = vmatmul.bf16.gmra.mxu0 %v3601
        %v5251 = vpop.f32.mrf.mxu0
        %v5252 = vadd.f32 %v5123, %v5251
        %v5253 = vpop.f32.mrf.mxu0
        %v5254 = vadd.f32 %v5125, %v5253
        %5255 = vmatmul.bf16.gmra.mxu0 %v3628
        %v5256 = vpop.f32.mrf.mxu0
        %v5257 = vadd.f32 %v5128, %v5256
        %v5258 = vpop.f32.mrf.mxu0
        %v5259 = vadd.f32 %v5130, %v5258
        %5260 = vmatmul.bf16.gmra.mxu0 %v3655
        %v5261 = vpop.f32.mrf.mxu0
        %v5262 = vadd.f32 %v5133, %v5261
        %v5263 = vpop.f32.mrf.mxu0
        %v5264 = vadd.f32 %v5135, %v5263
        %5265 = vmatmul.bf16.gmra.mxu0 %v3682
        %v5266 = vpop.f32.mrf.mxu0
        %v5267 = vadd.f32 %v5138, %v5266
        %v5268 = vpop.f32.mrf.mxu0
        %v5269 = vadd.f32 %v5140, %v5268
        %5270 = vmatmul.bf16.gmra.mxu0 %v3709
        %v5271 = vpop.f32.mrf.mxu0
        %v5272 = vadd.f32 %v5143, %v5271
        %v5273 = vpop.f32.mrf.mxu0
        %v5274 = vadd.f32 %v5145, %v5273
        %5275 = vmatmul.bf16.gmra.mxu0 %v3736
        %v5276 = vpop.f32.mrf.mxu0
        %v5277 = vadd.f32 %v5148, %v5276
        %v5278 = vpop.f32.mrf.mxu0
        %v5279 = vadd.f32 %v5150, %v5278
        %5280 = vmatmul.bf16.gmra.mxu0 %v3763
        %v5281 = vpop.f32.mrf.mxu0
        %v5282 = vadd.f32 %v5153, %v5281
        %v5283 = vpop.f32.mrf.mxu0
        %v5284 = vadd.f32 %v5155, %v5283
        %5285 = vmatmul.bf16.gmra.mxu0 %v3790
        %v5286 = vpop.f32.mrf.mxu0
        %v5287 = vadd.f32 %v5158, %v5286
        %v5288 = vpop.f32.mrf.mxu0
        %v5289 = vadd.f32 %v5160, %v5288
        %5290 = vmatmul.bf16.gmra.mxu0 %v3817
        %v5291 = vpop.f32.mrf.mxu0
        %v5292 = vadd.f32 %v5163, %v5291
        %v5293 = vpop.f32.mrf.mxu0
        %v5294 = vadd.f32 %v5165, %v5293
        %5295 = vmatmul.bf16.gmra.mxu0 %v3844
        %v5296 = vpop.f32.mrf.mxu0
        %v5297 = vadd.f32 %v5168, %v5296
        %v5298 = vpop.f32.mrf.mxu0
        %v5299 = vadd.f32 %v5170, %v5298
        %5300 = vmatmul.bf16.gmra.mxu0 %v3871
        %v5301 = vpop.f32.mrf.mxu0
        %v5302 = vadd.f32 %v5173, %v5301
        %v5303 = vpop.f32.mrf.mxu0
        %v5304 = vadd.f32 %v5175, %v5303
        %5305 = vmatmul.bf16.gmra.mxu0 %v3898
        %v5306 = vpop.f32.mrf.mxu0
        %v5307 = vadd.f32 %v5178, %v5306
        %v5308 = vpop.f32.mrf.mxu0
        %v5309 = vadd.f32 %v5180, %v5308
        %5310 = vmatmul.bf16.gmra.mxu0 %v3925
        %v5311 = vpop.f32.mrf.mxu0
        %v5312 = vadd.f32 %v5183, %v5311
        %v5313 = vpop.f32.mrf.mxu0
        %v5314 = vadd.f32 %v5185, %v5313
        %5315 = vmatmul.bf16.gmra.mxu0 %v3952
        %v5316 = vpop.f32.mrf.mxu0
        %v5317 = vadd.f32 %v5188, %v5316
        %v5318 = vpop.f32.mrf.mxu0
        %v5319 = vadd.f32 %v5190, %v5318
        %5320 = vmatmul.bf16.gmra.mxu0 %v4714
        %v5321 = vpop.f32.mrf.mxu0
        %v5322 = vadd.f32 %v5193, %v5321
        %v5323 = vpop.f32.mrf.mxu0
        %v5324 = vadd.f32 %v5195, %v5323
        %5325 = vmatmul.bf16.gmra.mxu0 %v4741
        %v5326 = vpop.f32.mrf.mxu0
        %v5327 = vadd.f32 %v5198, %v5326
        %v5328 = vpop.f32.mrf.mxu0
        %v5329 = vadd.f32 %v5200, %v5328
        %5330 = vmatmul.bf16.gmra.mxu0 %v4768
        %v5331 = vpop.f32.mrf.mxu0
        %v5332 = vadd.f32 %v5203, %v5331
        %v5333 = vpop.f32.mrf.mxu0
        %v5334 = vadd.f32 %v5205, %v5333
        %5335 = vmatmul.bf16.gmra.mxu0 %v4795
        %v5336 = vpop.f32.mrf.mxu0
        %v5337 = vadd.f32 %v5208, %v5336
        %v5338 = vpop.f32.mrf.mxu0
        %v5339 = vadd.f32 %v5210, %v5338
        %5340 = vdwg.mxu0
        %v5341 = vadd.f32 %v4464, %v5222
        %v5342 = vadd.f32 %v4466, %v5224
        %v5343 = vadd.f32 %v4469, %v5227
        %v5344 = vadd.f32 %v4471, %v5229
        %v5345 = vadd.f32 %v4474, %v5232
        %v5346 = vadd.f32 %v4476, %v5234
        %v5347 = vadd.f32 %v4479, %v5237
        %v5348 = vadd.f32 %v4481, %v5239
        %v5349 = vadd.f32 %v4484, %v5242
        %v5350 = vadd.f32 %v4486, %v5244
        %v5351 = vadd.f32 %v4489, %v5247
        %v5352 = vadd.f32 %v4491, %v5249
        %v5353 = vadd.f32 %v4494, %v5252
        %v5354 = vadd.f32 %v4496, %v5254
        %v5355 = vadd.f32 %v4499, %v5257
        %v5356 = vadd.f32 %v4501, %v5259
        %v5357 = vadd.f32 %v4504, %v5262
        %v5358 = vadd.f32 %v4506, %v5264
        %v5359 = vadd.f32 %v4509, %v5267
        %v5360 = vadd.f32 %v4511, %v5269
        %v5361 = vadd.f32 %v4514, %v5272
        %v5362 = vadd.f32 %v4516, %v5274
        %v5363 = vadd.f32 %v4519, %v5277
        %v5364 = vadd.f32 %v4521, %v5279
        %v5365 = vadd.f32 %v4524, %v5282
        %v5366 = vadd.f32 %v4526, %v5284
        %v5367 = vadd.f32 %v4529, %v5287
        %v5368 = vadd.f32 %v4531, %v5289
        %v5369 = vadd.f32 %v4534, %v5292
        %v5370 = vadd.f32 %v4536, %v5294
        %v5371 = vadd.f32 %v4539, %v5297
        %v5372 = vadd.f32 %v4541, %v5299
        %v5373 = vadd.f32 %v4544, %v5302
        %v5374 = vadd.f32 %v4546, %v5304
        %v5375 = vadd.f32 %v4549, %v5307
        %v5376 = vadd.f32 %v4551, %v5309
        %v5377 = vadd.f32 %v4554, %v5312
        %v5378 = vadd.f32 %v4556, %v5314
        %v5379 = vadd.f32 %v4559, %v5317
        %v5380 = vadd.f32 %v4561, %v5319
        %v5381 = vadd.f32 %v4564, %v5322
        %v5382 = vadd.f32 %v4566, %v5324
        %v5383 = vadd.f32 %v4569, %v5327
        %v5384 = vadd.f32 %v4571, %v5329
        %v5385 = vadd.f32 %v4574, %v5332
        %v5386 = vadd.f32 %v4576, %v5334
        %v5387 = vadd.f32 %v4579, %v5337
        %v5388 = vadd.f32 %v4581, %v5339
        %v5389 = vld [vmem:[%s4] sm:$0x1]
        %v5391 = vperm.slane %v5389, 0
        %v5393 = vadd.f32 %v5341, %v5391
        %v5394 = vadd.f32 %v5342, %v5391
        %v5395 = vadd.f32 %v5343, %v5391
        %v5396 = vadd.f32 %v5344, %v5391
        %v5397 = vadd.f32 %v5345, %v5391
        %v5398 = vadd.f32 %v5346, %v5391
        %v5399 = vadd.f32 %v5347, %v5391
        %v5400 = vadd.f32 %v5348, %v5391
        %v5401 = vadd.f32 %v5349, %v5391
        %v5402 = vadd.f32 %v5350, %v5391
        %v5403 = vadd.f32 %v5351, %v5391
        %v5404 = vadd.f32 %v5352, %v5391
        %v5405 = vadd.f32 %v5353, %v5391
        %v5406 = vadd.f32 %v5354, %v5391
        %v5407 = vadd.f32 %v5355, %v5391
        %v5408 = vadd.f32 %v5356, %v5391
        %v5409 = vadd.f32 %v5357, %v5391
        %v5410 = vadd.f32 %v5358, %v5391
        %v5411 = vadd.f32 %v5359, %v5391
        %v5412 = vadd.f32 %v5360, %v5391
        %v5413 = vadd.f32 %v5361, %v5391
        %v5414 = vadd.f32 %v5362, %v5391
        %v5415 = vadd.f32 %v5363, %v5391
        %v5416 = vadd.f32 %v5364, %v5391
        %v5417 = vadd.f32 %v5365, %v5391
        %v5418 = vadd.f32 %v5366, %v5391
        %v5419 = vadd.f32 %v5367, %v5391
        %v5420 = vadd.f32 %v5368, %v5391
        %v5421 = vadd.f32 %v5369, %v5391
        %v5422 = vadd.f32 %v5370, %v5391
        %v5423 = vadd.f32 %v5371, %v5391
        %v5424 = vadd.f32 %v5372, %v5391
        %v5425 = vadd.f32 %v5373, %v5391
        %v5426 = vadd.f32 %v5374, %v5391
        %v5427 = vadd.f32 %v5375, %v5391
        %v5428 = vadd.f32 %v5376, %v5391
        %v5429 = vadd.f32 %v5377, %v5391
        %v5430 = vadd.f32 %v5378, %v5391
        %v5431 = vadd.f32 %v5379, %v5391
        %v5432 = vadd.f32 %v5380, %v5391
        %v5433 = vadd.f32 %v5381, %v5391
        %v5434 = vadd.f32 %v5382, %v5391
        %v5435 = vadd.f32 %v5383, %v5391
        %v5436 = vadd.f32 %v5384, %v5391
        %v5437 = vadd.f32 %v5385, %v5391
        %v5438 = vadd.f32 %v5386, %v5391
        %v5439 = vadd.f32 %v5387, %v5391
        %v5440 = vadd.f32 %v5388, %v5391
        %vm5441 = vcmp.ge.f32.partialorder %v5393, 1.0
        %vm5442 = vcmp.ge.f32.partialorder %v5394, 1.0
        %vm5443 = vcmp.ge.f32.partialorder %v5395, 1.0
        %vm5444 = vcmp.ge.f32.partialorder %v5396, 1.0
        %vm5445 = vcmp.ge.f32.partialorder %v5397, 1.0
        %vm5446 = vcmp.ge.f32.partialorder %v5398, 1.0
        %vm5447 = vcmp.ge.f32.partialorder %v5399, 1.0
        %vm5448 = vcmp.ge.f32.partialorder %v5400, 1.0
        %vm5449 = vcmp.ge.f32.partialorder %v5401, 1.0
        %vm5450 = vcmp.ge.f32.partialorder %v5402, 1.0
        %vm5451 = vcmp.ge.f32.partialorder %v5403, 1.0
        %vm5452 = vcmp.ge.f32.partialorder %v5404, 1.0
        %vm5453 = vcmp.ge.f32.partialorder %v5405, 1.0
        %vm5454 = vcmp.ge.f32.partialorder %v5406, 1.0
        %vm5455 = vcmp.ge.f32.partialorder %v5407, 1.0
        %vm5456 = vcmp.ge.f32.partialorder %v5408, 1.0
        %vm5457 = vcmp.ge.f32.partialorder %v5409, 1.0
        %vm5458 = vcmp.ge.f32.partialorder %v5410, 1.0
        %vm5459 = vcmp.ge.f32.partialorder %v5411, 1.0
        %vm5460 = vcmp.ge.f32.partialorder %v5412, 1.0
        %vm5461 = vcmp.ge.f32.partialorder %v5413, 1.0
        %vm5462 = vcmp.ge.f32.partialorder %v5414, 1.0
        %vm5463 = vcmp.ge.f32.partialorder %v5415, 1.0
        %vm5464 = vcmp.ge.f32.partialorder %v5416, 1.0
        %vm5465 = vcmp.ge.f32.partialorder %v5417, 1.0
        %vm5466 = vcmp.ge.f32.partialorder %v5418, 1.0
        %vm5467 = vcmp.ge.f32.partialorder %v5419, 1.0
        %vm5468 = vcmp.ge.f32.partialorder %v5420, 1.0
        %vm5469 = vcmp.ge.f32.partialorder %v5421, 1.0
        %vm5470 = vcmp.ge.f32.partialorder %v5422, 1.0
        %vm5471 = vcmp.ge.f32.partialorder %v5423, 1.0
        %vm5472 = vcmp.ge.f32.partialorder %v5424, 1.0
        %vm5473 = vcmp.ge.f32.partialorder %v5425, 1.0
        %vm5474 = vcmp.ge.f32.partialorder %v5426, 1.0
        %vm5475 = vcmp.ge.f32.partialorder %v5427, 1.0
        %vm5476 = vcmp.ge.f32.partialorder %v5428, 1.0
        %vm5477 = vcmp.ge.f32.partialorder %v5429, 1.0
        %vm5478 = vcmp.ge.f32.partialorder %v5430, 1.0
        %vm5479 = vcmp.ge.f32.partialorder %v5431, 1.0
        %vm5480 = vcmp.ge.f32.partialorder %v5432, 1.0
        %vm5481 = vcmp.ge.f32.partialorder %v5433, 1.0
        %vm5482 = vcmp.ge.f32.partialorder %v5434, 1.0
        %vm5483 = vcmp.ge.f32.partialorder %v5435, 1.0
        %vm5484 = vcmp.ge.f32.partialorder %v5436, 1.0
        %vm5485 = vcmp.ge.f32.partialorder %v5437, 1.0
        %vm5486 = vcmp.ge.f32.partialorder %v5438, 1.0
        %vm5487 = vcmp.ge.f32.partialorder %v5439, 1.0
        %vm5488 = vcmp.ge.f32.partialorder %v5440, 1.0
        %v5489 = vsel %vm5441, 1, 0
        %v5490 = vsel %vm5442, 1, 0
        %v5491 = vsel %vm5443, 1, 0
        %v5492 = vsel %vm5444, 1, 0
        %v5493 = vsel %vm5445, 1, 0
        %v5494 = vsel %vm5446, 1, 0
        %v5495 = vsel %vm5447, 1, 0
        %v5496 = vsel %vm5448, 1, 0
        %v5497 = vsel %vm5449, 1, 0
        %v5498 = vsel %vm5450, 1, 0
        %v5499 = vsel %vm5451, 1, 0
        %v5500 = vsel %vm5452, 1, 0
        %v5501 = vsel %vm5453, 1, 0
        %v5502 = vsel %vm5454, 1, 0
        %v5503 = vsel %vm5455, 1, 0
        %v5504 = vsel %vm5456, 1, 0
        %v5505 = vsel %vm5457, 1, 0
        %v5506 = vsel %vm5458, 1, 0
        %v5507 = vsel %vm5459, 1, 0
        %v5508 = vsel %vm5460, 1, 0
        %v5509 = vsel %vm5461, 1, 0
        %v5510 = vsel %vm5462, 1, 0
        %v5511 = vsel %vm5463, 1, 0
        %v5512 = vsel %vm5464, 1, 0
        %v5513 = vsel %vm5465, 1, 0
        %v5514 = vsel %vm5466, 1, 0
        %v5515 = vsel %vm5467, 1, 0
        %v5516 = vsel %vm5468, 1, 0
        %v5517 = vsel %vm5469, 1, 0
        %v5518 = vsel %vm5470, 1, 0
        %v5519 = vsel %vm5471, 1, 0
        %v5520 = vsel %vm5472, 1, 0
        %v5521 = vsel %vm5473, 1, 0
        %v5522 = vsel %vm5474, 1, 0
        %v5523 = vsel %vm5475, 1, 0
        %v5524 = vsel %vm5476, 1, 0
        %v5525 = vsel %vm5477, 1, 0
        %v5526 = vsel %vm5478, 1, 0
        %v5527 = vsel %vm5479, 1, 0
        %v5528 = vsel %vm5480, 1, 0
        %v5529 = vsel %vm5481, 1, 0
        %v5530 = vsel %vm5482, 1, 0
        %v5531 = vsel %vm5483, 1, 0
        %v5532 = vsel %vm5484, 1, 0
        %v5533 = vsel %vm5485, 1, 0
        %v5534 = vsel %vm5486, 1, 0
        %v5535 = vsel %vm5487, 1, 0
        %v5536 = vsel %vm5488, 1, 0
        %v5537 = vcvt.s32.f32 %v5489
        %v5538 = vcvt.s32.f32 %v5490
        %v5539 = vcvt.s32.f32 %v5491
        %v5540 = vcvt.s32.f32 %v5492
        %v5541 = vcvt.s32.f32 %v5493
        %v5542 = vcvt.s32.f32 %v5494
        %v5543 = vcvt.s32.f32 %v5495
        %v5544 = vcvt.s32.f32 %v5496
        %v5545 = vcvt.s32.f32 %v5497
        %v5546 = vcvt.s32.f32 %v5498
        %v5547 = vcvt.s32.f32 %v5499
        %v5548 = vcvt.s32.f32 %v5500
        %v5549 = vcvt.s32.f32 %v5501
        %v5550 = vcvt.s32.f32 %v5502
        %v5551 = vcvt.s32.f32 %v5503
        %v5552 = vcvt.s32.f32 %v5504
        %v5553 = vcvt.s32.f32 %v5505
        %v5554 = vcvt.s32.f32 %v5506
        %v5555 = vcvt.s32.f32 %v5507
        %v5556 = vcvt.s32.f32 %v5508
        %v5557 = vcvt.s32.f32 %v5509
        %v5558 = vcvt.s32.f32 %v5510
        %v5559 = vcvt.s32.f32 %v5511
        %v5560 = vcvt.s32.f32 %v5512
        %v5561 = vcvt.s32.f32 %v5513
        %v5562 = vcvt.s32.f32 %v5514
        %v5563 = vcvt.s32.f32 %v5515
        %v5564 = vcvt.s32.f32 %v5516
        %v5565 = vcvt.s32.f32 %v5517
        %v5566 = vcvt.s32.f32 %v5518
        %v5567 = vcvt.s32.f32 %v5519
        %v5568 = vcvt.s32.f32 %v5520
        %v5569 = vcvt.s32.f32 %v5521
        %v5570 = vcvt.s32.f32 %v5522
        %v5571 = vcvt.s32.f32 %v5523
        %v5572 = vcvt.s32.f32 %v5524
        %v5573 = vcvt.s32.f32 %v5525
        %v5574 = vcvt.s32.f32 %v5526
        %v5575 = vcvt.s32.f32 %v5527
        %v5576 = vcvt.s32.f32 %v5528
        %v5577 = vcvt.s32.f32 %v5529
        %v5578 = vcvt.s32.f32 %v5530
        %v5579 = vcvt.s32.f32 %v5531
        %v5580 = vcvt.s32.f32 %v5532
        %v5581 = vcvt.s32.f32 %v5533
        %v5582 = vcvt.s32.f32 %v5534
        %v5583 = vcvt.s32.f32 %v5535
        %v5584 = vcvt.s32.f32 %v5536
        %v5585 = vpack.c.bf16 %v5538, %v5537
        %v5586 = vpack.c.bf16 %v5540, %v5539
        %v5587 = vpack.c.bf16 %v5542, %v5541
        %v5588 = vpack.c.bf16 %v5544, %v5543
        %v5589 = vpack.c.bf16 %v5546, %v5545
        %v5590 = vpack.c.bf16 %v5548, %v5547
        %v5591 = vpack.c.bf16 %v5550, %v5549
        %v5592 = vpack.c.bf16 %v5552, %v5551
        %v5593 = vpack.c.bf16 %v5554, %v5553
        %v5594 = vpack.c.bf16 %v5556, %v5555
        %v5595 = vpack.c.bf16 %v5558, %v5557
        %v5596 = vpack.c.bf16 %v5560, %v5559
        %v5597 = vpack.c.bf16 %v5562, %v5561
        %v5598 = vpack.c.bf16 %v5564, %v5563
        %v5599 = vpack.c.bf16 %v5566, %v5565
        %v5600 = vpack.c.bf16 %v5568, %v5567
        %v5601 = vpack.c.bf16 %v5570, %v5569
        %v5602 = vpack.c.bf16 %v5572, %v5571
        %v5603 = vpack.c.bf16 %v5574, %v5573
        %v5604 = vpack.c.bf16 %v5576, %v5575
        %v5605 = vpack.c.bf16 %v5578, %v5577
        %v5606 = vpack.c.bf16 %v5580, %v5579
        %v5607 = vpack.c.bf16 %v5582, %v5581
        %v5608 = vpack.c.bf16 %v5584, %v5583
        %v5609 = vld [vmem:[#allocation8] sm:$0xf]
        %v5610 = vld [vmem:[#allocation8 + $0x4] sm:$0xf]
        %v5611 = vld [vmem:[#allocation8 + $0x8] sm:$0xf]
        %v5612 = vld [vmem:[#allocation8 + $0xc] sm:$0xf]
        %v5613 = vld [vmem:[#allocation8 + $0x10] sm:$0xf]
        %v5614 = vld [vmem:[#allocation8 + $0x14] sm:$0xf]
        %v5615 = vld [vmem:[#allocation8 + $0x18] sm:$0xf]
        %v5616 = vld [vmem:[#allocation8 + $0x1c] sm:$0xf]
        %v5617 = vld [vmem:[#allocation8 + $0x20] sm:$0xf]
        %v5618 = vld [vmem:[#allocation8 + $0x24] sm:$0xf]
        %v5619 = vld [vmem:[#allocation8 + $0x28] sm:$0xf]
        %v5620 = vld [vmem:[#allocation8 + $0x2c] sm:$0xf]
        %v5621 = vld [vmem:[#allocation8 + $0x30] sm:$0xf]
        %v5622 = vld [vmem:[#allocation8 + $0x34] sm:$0xf]
        %v5623 = vld [vmem:[#allocation8 + $0x38] sm:$0xf]
        %v5624 = vld [vmem:[#allocation8 + $0x3c] sm:$0xf]
        %v5625 = vld [vmem:[%s6] sm:$0x1]
        %v5627 = vperm.slane %v5625, 0
        %v5645 = vunpack.c.l.b16 %v5609
        %v5646 = vunpack.c.l.b16 %v5610
        %v5647 = vunpack.c.l.b16 %v5611
        %v5648 = vunpack.c.l.b16 %v5612
        %v5649 = vunpack.c.l.b16 %v5613
        %v5650 = vunpack.c.l.b16 %v5614
        %v5651 = vunpack.c.l.b16 %v5615
        %v5652 = vunpack.c.l.b16 %v5616
        %v5653 = vunpack.c.l.b16 %v5617
        %v5654 = vunpack.c.l.b16 %v5618
        %v5655 = vunpack.c.l.b16 %v5619
        %v5656 = vunpack.c.l.b16 %v5620
        %v5657 = vunpack.c.l.b16 %v5621
        %v5658 = vunpack.c.l.b16 %v5622
        %v5659 = vunpack.c.l.b16 %v5623
        %v5660 = vunpack.c.l.b16 %v5624
        %v5661 = vpack.c.b16 %v5646, %v5645
        %v5662 = vpack.c.b16 %v5648, %v5647
        %v5663 = vpack.c.b16 %v5650, %v5649
        %v5664 = vpack.c.b16 %v5652, %v5651
        %v5665 = vpack.c.b16 %v5654, %v5653
        %v5666 = vpack.c.b16 %v5656, %v5655
        %v5667 = vpack.c.b16 %v5658, %v5657
        %v5668 = vpack.c.b16 %v5660, %v5659
        %5677 = vmatpush.bf16.msra.mxu0 %v5668
        %5678 = vmatpush.bf16.msra.mxu0 %v5667
        %5679 = vmatpush.bf16.msra.mxu0 %v5666
        %5680 = vmatpush.bf16.msra.mxu0 %v5665
        %5681 = vmatpush.bf16.msra.mxu0 %v5664
        %5682 = vmatpush.bf16.msra.mxu0 %v5663
        %5683 = vmatpush.bf16.msra.mxu0 %v5662
        %5684 = vmatpush.bf16.msra.mxu0 %v5661
        %5685 = vmatmul.bf16.gmra.mxu0 %v5585
        %v5686 = vpop.f32.mrf.mxu0
        %v5687 = vadd.f32 %v5627, %v5686
        %v5688 = vpop.f32.mrf.mxu0
        %v5689 = vadd.f32 %v5627, %v5688
        %5690 = vmatmul.bf16.gmra.mxu0 %v5586
        %v5691 = vpop.f32.mrf.mxu0
        %v5692 = vadd.f32 %v5627, %v5691
        %v5693 = vpop.f32.mrf.mxu0
        %v5694 = vadd.f32 %v5627, %v5693
        %5695 = vmatmul.bf16.gmra.mxu0 %v5587
        %v5696 = vpop.f32.mrf.mxu0
        %v5697 = vadd.f32 %v5627, %v5696
        %v5698 = vpop.f32.mrf.mxu0
        %v5699 = vadd.f32 %v5627, %v5698
        %5700 = vmatmul.bf16.gmra.mxu0 %v5588
        %v5701 = vpop.f32.mrf.mxu0
        %v5702 = vadd.f32 %v5627, %v5701
        %v5703 = vpop.f32.mrf.mxu0
        %v5704 = vadd.f32 %v5627, %v5703
        %5705 = vmatmul.bf16.gmra.mxu0 %v5589
        %v5706 = vpop.f32.mrf.mxu0
        %v5707 = vadd.f32 %v5627, %v5706
        %v5708 = vpop.f32.mrf.mxu0
        %v5709 = vadd.f32 %v5627, %v5708
        %5710 = vmatmul.bf16.gmra.mxu0 %v5590
        %v5711 = vpop.f32.mrf.mxu0
        %v5712 = vadd.f32 %v5627, %v5711
        %v5713 = vpop.f32.mrf.mxu0
        %v5714 = vadd.f32 %v5627, %v5713
        %5715 = vmatmul.bf16.gmra.mxu0 %v5591
        %v5716 = vpop.f32.mrf.mxu0
        %v5717 = vadd.f32 %v5627, %v5716
        %v5718 = vpop.f32.mrf.mxu0
        %v5719 = vadd.f32 %v5627, %v5718
        %5720 = vmatmul.bf16.gmra.mxu0 %v5592
        %v5721 = vpop.f32.mrf.mxu0
        %v5722 = vadd.f32 %v5627, %v5721
        %v5723 = vpop.f32.mrf.mxu0
        %v5724 = vadd.f32 %v5627, %v5723
        %5725 = vmatmul.bf16.gmra.mxu0 %v5593
        %v5726 = vpop.f32.mrf.mxu0
        %v5727 = vadd.f32 %v5627, %v5726
        %v5728 = vpop.f32.mrf.mxu0
        %v5729 = vadd.f32 %v5627, %v5728
        %5730 = vmatmul.bf16.gmra.mxu0 %v5594
        %v5731 = vpop.f32.mrf.mxu0
        %v5732 = vadd.f32 %v5627, %v5731
        %v5733 = vpop.f32.mrf.mxu0
        %v5734 = vadd.f32 %v5627, %v5733
        %5735 = vmatmul.bf16.gmra.mxu0 %v5595
        %v5736 = vpop.f32.mrf.mxu0
        %v5737 = vadd.f32 %v5627, %v5736
        %v5738 = vpop.f32.mrf.mxu0
        %v5739 = vadd.f32 %v5627, %v5738
        %5740 = vmatmul.bf16.gmra.mxu0 %v5596
        %v5741 = vpop.f32.mrf.mxu0
        %v5742 = vadd.f32 %v5627, %v5741
        %v5743 = vpop.f32.mrf.mxu0
        %v5744 = vadd.f32 %v5627, %v5743
        %5745 = vmatmul.bf16.gmra.mxu0 %v5597
        %v5746 = vpop.f32.mrf.mxu0
        %v5747 = vadd.f32 %v5627, %v5746
        %v5748 = vpop.f32.mrf.mxu0
        %v5749 = vadd.f32 %v5627, %v5748
        %5750 = vmatmul.bf16.gmra.mxu0 %v5598
        %v5751 = vpop.f32.mrf.mxu0
        %v5752 = vadd.f32 %v5627, %v5751
        %v5753 = vpop.f32.mrf.mxu0
        %v5754 = vadd.f32 %v5627, %v5753
        %5755 = vmatmul.bf16.gmra.mxu0 %v5599
        %v5756 = vpop.f32.mrf.mxu0
        %v5757 = vadd.f32 %v5627, %v5756
        %v5758 = vpop.f32.mrf.mxu0
        %v5759 = vadd.f32 %v5627, %v5758
        %5760 = vmatmul.bf16.gmra.mxu0 %v5600
        %v5761 = vpop.f32.mrf.mxu0
        %v5762 = vadd.f32 %v5627, %v5761
        %v5763 = vpop.f32.mrf.mxu0
        %v5764 = vadd.f32 %v5627, %v5763
        %5765 = vmatmul.bf16.gmra.mxu0 %v5601
        %v5766 = vpop.f32.mrf.mxu0
        %v5767 = vadd.f32 %v5627, %v5766
        %v5768 = vpop.f32.mrf.mxu0
        %v5769 = vadd.f32 %v5627, %v5768
        %5770 = vmatmul.bf16.gmra.mxu0 %v5602
        %v5771 = vpop.f32.mrf.mxu0
        %v5772 = vadd.f32 %v5627, %v5771
        %v5773 = vpop.f32.mrf.mxu0
        %v5774 = vadd.f32 %v5627, %v5773
        %5775 = vmatmul.bf16.gmra.mxu0 %v5603
        %v5776 = vpop.f32.mrf.mxu0
        %v5777 = vadd.f32 %v5627, %v5776
        %v5778 = vpop.f32.mrf.mxu0
        %v5779 = vadd.f32 %v5627, %v5778
        %5780 = vmatmul.bf16.gmra.mxu0 %v5604
        %v5781 = vpop.f32.mrf.mxu0
        %v5782 = vadd.f32 %v5627, %v5781
        %v5783 = vpop.f32.mrf.mxu0
        %v5784 = vadd.f32 %v5627, %v5783
        %5785 = vmatmul.bf16.gmra.mxu0 %v5605
        %v5786 = vpop.f32.mrf.mxu0
        %v5787 = vadd.f32 %v5627, %v5786
        %v5788 = vpop.f32.mrf.mxu0
        %v5789 = vadd.f32 %v5627, %v5788
        %5790 = vmatmul.bf16.gmra.mxu0 %v5606
        %v5791 = vpop.f32.mrf.mxu0
        %v5792 = vadd.f32 %v5627, %v5791
        %v5793 = vpop.f32.mrf.mxu0
        %v5794 = vadd.f32 %v5627, %v5793
        %5795 = vmatmul.bf16.gmra.mxu0 %v5607
        %v5796 = vpop.f32.mrf.mxu0
        %v5797 = vadd.f32 %v5627, %v5796
        %v5798 = vpop.f32.mrf.mxu0
        %v5799 = vadd.f32 %v5627, %v5798
        %5800 = vmatmul.bf16.gmra.mxu0 %v5608
        %v5801 = vpop.f32.mrf.mxu0
        %v5802 = vadd.f32 %v5627, %v5801
        %v5803 = vpop.f32.mrf.mxu0
        %v5804 = vadd.f32 %v5627, %v5803
        %5805 = vdwg.mxu0
        %vm5806 = vcmp.ge.f32.partialorder %v5687, 1.0
        %vm5807 = vcmp.ge.f32.partialorder %v5689, 1.0
        %vm5808 = vcmp.ge.f32.partialorder %v5692, 1.0
        %vm5809 = vcmp.ge.f32.partialorder %v5694, 1.0
        %vm5810 = vcmp.ge.f32.partialorder %v5697, 1.0
        %vm5811 = vcmp.ge.f32.partialorder %v5699, 1.0
        %vm5812 = vcmp.ge.f32.partialorder %v5702, 1.0
        %vm5813 = vcmp.ge.f32.partialorder %v5704, 1.0
        %vm5814 = vcmp.ge.f32.partialorder %v5707, 1.0
        %vm5815 = vcmp.ge.f32.partialorder %v5709, 1.0
        %vm5816 = vcmp.ge.f32.partialorder %v5712, 1.0
        %vm5817 = vcmp.ge.f32.partialorder %v5714, 1.0
        %vm5818 = vcmp.ge.f32.partialorder %v5717, 1.0
        %vm5819 = vcmp.ge.f32.partialorder %v5719, 1.0
        %vm5820 = vcmp.ge.f32.partialorder %v5722, 1.0
        %vm5821 = vcmp.ge.f32.partialorder %v5724, 1.0
        %vm5822 = vcmp.ge.f32.partialorder %v5727, 1.0
        %vm5823 = vcmp.ge.f32.partialorder %v5729, 1.0
        %vm5824 = vcmp.ge.f32.partialorder %v5732, 1.0
        %vm5825 = vcmp.ge.f32.partialorder %v5734, 1.0
        %vm5826 = vcmp.ge.f32.partialorder %v5737, 1.0
        %vm5827 = vcmp.ge.f32.partialorder %v5739, 1.0
        %vm5828 = vcmp.ge.f32.partialorder %v5742, 1.0
        %vm5829 = vcmp.ge.f32.partialorder %v5744, 1.0
        %vm5830 = vcmp.ge.f32.partialorder %v5747, 1.0
        %vm5831 = vcmp.ge.f32.partialorder %v5749, 1.0
        %vm5832 = vcmp.ge.f32.partialorder %v5752, 1.0
        %vm5833 = vcmp.ge.f32.partialorder %v5754, 1.0
        %vm5834 = vcmp.ge.f32.partialorder %v5757, 1.0
        %vm5835 = vcmp.ge.f32.partialorder %v5759, 1.0
        %vm5836 = vcmp.ge.f32.partialorder %v5762, 1.0
        %vm5837 = vcmp.ge.f32.partialorder %v5764, 1.0
        %vm5838 = vcmp.ge.f32.partialorder %v5767, 1.0
        %vm5839 = vcmp.ge.f32.partialorder %v5769, 1.0
        %vm5840 = vcmp.ge.f32.partialorder %v5772, 1.0
        %vm5841 = vcmp.ge.f32.partialorder %v5774, 1.0
        %vm5842 = vcmp.ge.f32.partialorder %v5777, 1.0
        %vm5843 = vcmp.ge.f32.partialorder %v5779, 1.0
        %vm5844 = vcmp.ge.f32.partialorder %v5782, 1.0
        %vm5845 = vcmp.ge.f32.partialorder %v5784, 1.0
        %vm5846 = vcmp.ge.f32.partialorder %v5787, 1.0
        %vm5847 = vcmp.ge.f32.partialorder %v5789, 1.0
        %vm5848 = vcmp.ge.f32.partialorder %v5792, 1.0
        %vm5849 = vcmp.ge.f32.partialorder %v5794, 1.0
        %vm5850 = vcmp.ge.f32.partialorder %v5797, 1.0
        %vm5851 = vcmp.ge.f32.partialorder %v5799, 1.0
        %vm5852 = vcmp.ge.f32.partialorder %v5802, 1.0
        %vm5853 = vcmp.ge.f32.partialorder %v5804, 1.0
        %v5854 = vsel %vm5806, 1, 0
        %v5855 = vsel %vm5807, 1, 0
        %v5856 = vsel %vm5808, 1, 0
        %v5857 = vsel %vm5809, 1, 0
        %v5858 = vsel %vm5810, 1, 0
        %v5859 = vsel %vm5811, 1, 0
        %v5860 = vsel %vm5812, 1, 0
        %v5861 = vsel %vm5813, 1, 0
        %v5862 = vsel %vm5814, 1, 0
        %v5863 = vsel %vm5815, 1, 0
        %v5864 = vsel %vm5816, 1, 0
        %v5865 = vsel %vm5817, 1, 0
        %v5866 = vsel %vm5818, 1, 0
        %v5867 = vsel %vm5819, 1, 0
        %v5868 = vsel %vm5820, 1, 0
        %v5869 = vsel %vm5821, 1, 0
        %v5870 = vsel %vm5822, 1, 0
        %v5871 = vsel %vm5823, 1, 0
        %v5872 = vsel %vm5824, 1, 0
        %v5873 = vsel %vm5825, 1, 0
        %v5874 = vsel %vm5826, 1, 0
        %v5875 = vsel %vm5827, 1, 0
        %v5876 = vsel %vm5828, 1, 0
        %v5877 = vsel %vm5829, 1, 0
        %v5878 = vsel %vm5830, 1, 0
        %v5879 = vsel %vm5831, 1, 0
        %v5880 = vsel %vm5832, 1, 0
        %v5881 = vsel %vm5833, 1, 0
        %v5882 = vsel %vm5834, 1, 0
        %v5883 = vsel %vm5835, 1, 0
        %v5884 = vsel %vm5836, 1, 0
        %v5885 = vsel %vm5837, 1, 0
        %v5886 = vsel %vm5838, 1, 0
        %v5887 = vsel %vm5839, 1, 0
        %v5888 = vsel %vm5840, 1, 0
        %v5889 = vsel %vm5841, 1, 0
        %v5890 = vsel %vm5842, 1, 0
        %v5891 = vsel %vm5843, 1, 0
        %v5892 = vsel %vm5844, 1, 0
        %v5893 = vsel %vm5845, 1, 0
        %v5894 = vsel %vm5846, 1, 0
        %v5895 = vsel %vm5847, 1, 0
        %v5896 = vsel %vm5848, 1, 0
        %v5897 = vsel %vm5849, 1, 0
        %v5898 = vsel %vm5850, 1, 0
        %v5899 = vsel %vm5851, 1, 0
        %v5900 = vsel %vm5852, 1, 0
        %v5901 = vsel %vm5853, 1, 0
        %v5902 = vcvt.s32.f32 %v5854
        %v5903 = vcvt.s32.f32 %v5855
        %v5904 = vcvt.s32.f32 %v5856
        %v5905 = vcvt.s32.f32 %v5857
        %v5906 = vcvt.s32.f32 %v5858
        %v5907 = vcvt.s32.f32 %v5859
        %v5908 = vcvt.s32.f32 %v5860
        %v5909 = vcvt.s32.f32 %v5861
        %v5910 = vcvt.s32.f32 %v5862
        %v5911 = vcvt.s32.f32 %v5863
        %v5912 = vcvt.s32.f32 %v5864
        %v5913 = vcvt.s32.f32 %v5865
        %v5914 = vcvt.s32.f32 %v5866
        %v5915 = vcvt.s32.f32 %v5867
        %v5916 = vcvt.s32.f32 %v5868
        %v5917 = vcvt.s32.f32 %v5869
        %v5918 = vcvt.s32.f32 %v5870
        %v5919 = vcvt.s32.f32 %v5871
        %v5920 = vcvt.s32.f32 %v5872
        %v5921 = vcvt.s32.f32 %v5873
        %v5922 = vcvt.s32.f32 %v5874
        %v5923 = vcvt.s32.f32 %v5875
        %v5924 = vcvt.s32.f32 %v5876
        %v5925 = vcvt.s32.f32 %v5877
        %v5926 = vcvt.s32.f32 %v5878
        %v5927 = vcvt.s32.f32 %v5879
        %v5928 = vcvt.s32.f32 %v5880
        %v5929 = vcvt.s32.f32 %v5881
        %v5930 = vcvt.s32.f32 %v5882
        %v5931 = vcvt.s32.f32 %v5883
        %v5932 = vcvt.s32.f32 %v5884
        %v5933 = vcvt.s32.f32 %v5885
        %v5934 = vcvt.s32.f32 %v5886
        %v5935 = vcvt.s32.f32 %v5887
        %v5936 = vcvt.s32.f32 %v5888
        %v5937 = vcvt.s32.f32 %v5889
        %v5938 = vcvt.s32.f32 %v5890
        %v5939 = vcvt.s32.f32 %v5891
        %v5940 = vcvt.s32.f32 %v5892
        %v5941 = vcvt.s32.f32 %v5893
        %v5942 = vcvt.s32.f32 %v5894
        %v5943 = vcvt.s32.f32 %v5895
        %v5944 = vcvt.s32.f32 %v5896
        %v5945 = vcvt.s32.f32 %v5897
        %v5946 = vcvt.s32.f32 %v5898
        %v5947 = vcvt.s32.f32 %v5899
        %v5948 = vcvt.s32.f32 %v5900
        %v5949 = vcvt.s32.f32 %v5901
        %v5950 = vld [vmem:[#allocation10] sm:$0xf]
        %v5951 = vld [vmem:[#allocation10 + $0x4] sm:$0xf]
        %v5952 = vld [vmem:[#allocation10 + $0x8] sm:$0xf]
        %v5953 = vld [vmem:[#allocation10 + $0xc] sm:$0xf]
        %v5954 = vld [vmem:[#allocation10 + $0x10] sm:$0xf]
        %v5955 = vld [vmem:[#allocation10 + $0x14] sm:$0xf]
        %v5956 = vld [vmem:[#allocation10 + $0x18] sm:$0xf]
        %v5957 = vld [vmem:[#allocation10 + $0x1c] sm:$0xf]
        %v5958 = vld [vmem:[#allocation10 + $0x20] sm:$0xf]
        %v5959 = vld [vmem:[#allocation10 + $0x24] sm:$0xf]
        %v5960 = vld [vmem:[#allocation10 + $0x28] sm:$0xf]
        %v5961 = vld [vmem:[#allocation10 + $0x2c] sm:$0xf]
        %v5962 = vld [vmem:[#allocation10 + $0x30] sm:$0xf]
        %v5963 = vld [vmem:[#allocation10 + $0x34] sm:$0xf]
        %v5964 = vld [vmem:[#allocation10 + $0x38] sm:$0xf]
        %v5965 = vld [vmem:[#allocation10 + $0x3c] sm:$0xf]
        %v5966 = vld [vmem:[%s8] sm:$0x1]
        %v5968 = vperm.slane %v5966, 0
        %v5986 = vunpack.c.l.b16 %v5950
        %v5987 = vunpack.c.l.b16 %v5951
        %v5988 = vunpack.c.l.b16 %v5952
        %v5989 = vunpack.c.l.b16 %v5953
        %v5990 = vunpack.c.l.b16 %v5954
        %v5991 = vunpack.c.l.b16 %v5955
        %v5992 = vunpack.c.l.b16 %v5956
        %v5993 = vunpack.c.l.b16 %v5957
        %v5994 = vunpack.c.l.b16 %v5958
        %v5995 = vunpack.c.l.b16 %v5959
        %v5996 = vunpack.c.l.b16 %v5960
        %v5997 = vunpack.c.l.b16 %v5961
        %v5998 = vunpack.c.l.b16 %v5962
        %v5999 = vunpack.c.l.b16 %v5963
        %v6000 = vunpack.c.l.b16 %v5964
        %v6001 = vunpack.c.l.b16 %v5965
        %v6002 = vpack.c.b16 %v5987, %v5986
        %v6003 = vpack.c.b16 %v5989, %v5988
        %v6004 = vpack.c.b16 %v5991, %v5990
        %v6005 = vpack.c.b16 %v5993, %v5992
        %v6006 = vpack.c.b16 %v5995, %v5994
        %v6007 = vpack.c.b16 %v5997, %v5996
        %v6008 = vpack.c.b16 %v5999, %v5998
        %v6009 = vpack.c.b16 %v6001, %v6000
        %6018 = vmatpush.bf16.msra.mxu0 %v6009
        %6019 = vmatpush.bf16.msra.mxu0 %v6008
        %6020 = vmatpush.bf16.msra.mxu0 %v6007
        %6021 = vmatpush.bf16.msra.mxu0 %v6006
        %6022 = vmatpush.bf16.msra.mxu0 %v6005
        %6023 = vmatpush.bf16.msra.mxu0 %v6004
        %6024 = vmatpush.bf16.msra.mxu0 %v6003
        %6025 = vmatpush.bf16.msra.mxu0 %v6002
        %6026 = vmatmul.bf16.gmra.mxu0 %v665
        %v6027 = vpop.f32.mrf.mxu0
        %v6028 = vadd.f32 %v5968, %v6027
        %v6029 = vpop.f32.mrf.mxu0
        %v6030 = vadd.f32 %v5968, %v6029
        %6031 = vmatmul.bf16.gmra.mxu0 %v666
        %v6032 = vpop.f32.mrf.mxu0
        %v6033 = vadd.f32 %v5968, %v6032
        %v6034 = vpop.f32.mrf.mxu0
        %v6035 = vadd.f32 %v5968, %v6034
        %6036 = vmatmul.bf16.gmra.mxu0 %v667
        %v6037 = vpop.f32.mrf.mxu0
        %v6038 = vadd.f32 %v5968, %v6037
        %v6039 = vpop.f32.mrf.mxu0
        %v6040 = vadd.f32 %v5968, %v6039
        %6041 = vmatmul.bf16.gmra.mxu0 %v668
        %v6042 = vpop.f32.mrf.mxu0
        %v6043 = vadd.f32 %v5968, %v6042
        %v6044 = vpop.f32.mrf.mxu0
        %v6045 = vadd.f32 %v5968, %v6044
        %6046 = vmatmul.bf16.gmra.mxu0 %v669
        %v6047 = vpop.f32.mrf.mxu0
        %v6048 = vadd.f32 %v5968, %v6047
        %v6049 = vpop.f32.mrf.mxu0
        %v6050 = vadd.f32 %v5968, %v6049
        %6051 = vmatmul.bf16.gmra.mxu0 %v670
        %v6052 = vpop.f32.mrf.mxu0
        %v6053 = vadd.f32 %v5968, %v6052
        %v6054 = vpop.f32.mrf.mxu0
        %v6055 = vadd.f32 %v5968, %v6054
        %6056 = vmatmul.bf16.gmra.mxu0 %v671
        %v6057 = vpop.f32.mrf.mxu0
        %v6058 = vadd.f32 %v5968, %v6057
        %v6059 = vpop.f32.mrf.mxu0
        %v6060 = vadd.f32 %v5968, %v6059
        %6061 = vmatmul.bf16.gmra.mxu0 %v672
        %v6062 = vpop.f32.mrf.mxu0
        %v6063 = vadd.f32 %v5968, %v6062
        %v6064 = vpop.f32.mrf.mxu0
        %v6065 = vadd.f32 %v5968, %v6064
        %6066 = vmatmul.bf16.gmra.mxu0 %v673
        %v6067 = vpop.f32.mrf.mxu0
        %v6068 = vadd.f32 %v5968, %v6067
        %v6069 = vpop.f32.mrf.mxu0
        %v6070 = vadd.f32 %v5968, %v6069
        %6071 = vmatmul.bf16.gmra.mxu0 %v674
        %v6072 = vpop.f32.mrf.mxu0
        %v6073 = vadd.f32 %v5968, %v6072
        %v6074 = vpop.f32.mrf.mxu0
        %v6075 = vadd.f32 %v5968, %v6074
        %6076 = vmatmul.bf16.gmra.mxu0 %v675
        %v6077 = vpop.f32.mrf.mxu0
        %v6078 = vadd.f32 %v5968, %v6077
        %v6079 = vpop.f32.mrf.mxu0
        %v6080 = vadd.f32 %v5968, %v6079
        %6081 = vmatmul.bf16.gmra.mxu0 %v676
        %v6082 = vpop.f32.mrf.mxu0
        %v6083 = vadd.f32 %v5968, %v6082
        %v6084 = vpop.f32.mrf.mxu0
        %v6085 = vadd.f32 %v5968, %v6084
        %6086 = vmatmul.bf16.gmra.mxu0 %v677
        %v6087 = vpop.f32.mrf.mxu0
        %v6088 = vadd.f32 %v5968, %v6087
        %v6089 = vpop.f32.mrf.mxu0
        %v6090 = vadd.f32 %v5968, %v6089
        %6091 = vmatmul.bf16.gmra.mxu0 %v678
        %v6092 = vpop.f32.mrf.mxu0
        %v6093 = vadd.f32 %v5968, %v6092
        %v6094 = vpop.f32.mrf.mxu0
        %v6095 = vadd.f32 %v5968, %v6094
        %6096 = vmatmul.bf16.gmra.mxu0 %v679
        %v6097 = vpop.f32.mrf.mxu0
        %v6098 = vadd.f32 %v5968, %v6097
        %v6099 = vpop.f32.mrf.mxu0
        %v6100 = vadd.f32 %v5968, %v6099
        %6101 = vmatmul.bf16.gmra.mxu0 %v680
        %v6102 = vpop.f32.mrf.mxu0
        %v6103 = vadd.f32 %v5968, %v6102
        %v6104 = vpop.f32.mrf.mxu0
        %v6105 = vadd.f32 %v5968, %v6104
        %6106 = vmatmul.bf16.gmra.mxu0 %v681
        %v6107 = vpop.f32.mrf.mxu0
        %v6108 = vadd.f32 %v5968, %v6107
        %v6109 = vpop.f32.mrf.mxu0
        %v6110 = vadd.f32 %v5968, %v6109
        %6111 = vmatmul.bf16.gmra.mxu0 %v682
        %v6112 = vpop.f32.mrf.mxu0
        %v6113 = vadd.f32 %v5968, %v6112
        %v6114 = vpop.f32.mrf.mxu0
        %v6115 = vadd.f32 %v5968, %v6114
        %6116 = vmatmul.bf16.gmra.mxu0 %v683
        %v6117 = vpop.f32.mrf.mxu0
        %v6118 = vadd.f32 %v5968, %v6117
        %v6119 = vpop.f32.mrf.mxu0
        %v6120 = vadd.f32 %v5968, %v6119
        %6121 = vmatmul.bf16.gmra.mxu0 %v684
        %v6122 = vpop.f32.mrf.mxu0
        %v6123 = vadd.f32 %v5968, %v6122
        %v6124 = vpop.f32.mrf.mxu0
        %v6125 = vadd.f32 %v5968, %v6124
        %6126 = vmatmul.bf16.gmra.mxu0 %v685
        %v6127 = vpop.f32.mrf.mxu0
        %v6128 = vadd.f32 %v5968, %v6127
        %v6129 = vpop.f32.mrf.mxu0
        %v6130 = vadd.f32 %v5968, %v6129
        %6131 = vmatmul.bf16.gmra.mxu0 %v686
        %v6132 = vpop.f32.mrf.mxu0
        %v6133 = vadd.f32 %v5968, %v6132
        %v6134 = vpop.f32.mrf.mxu0
        %v6135 = vadd.f32 %v5968, %v6134
        %6136 = vmatmul.bf16.gmra.mxu0 %v687
        %v6137 = vpop.f32.mrf.mxu0
        %v6138 = vadd.f32 %v5968, %v6137
        %v6139 = vpop.f32.mrf.mxu0
        %v6140 = vadd.f32 %v5968, %v6139
        %6141 = vmatmul.bf16.gmra.mxu0 %v688
        %v6142 = vpop.f32.mrf.mxu0
        %v6143 = vadd.f32 %v5968, %v6142
        %v6144 = vpop.f32.mrf.mxu0
        %v6145 = vadd.f32 %v5968, %v6144
        %6146 = vdwg.mxu0
        %vm6147 = vcmp.ge.f32.partialorder %v6028, 1.0
        %vm6148 = vcmp.ge.f32.partialorder %v6030, 1.0
        %vm6149 = vcmp.ge.f32.partialorder %v6033, 1.0
        %vm6150 = vcmp.ge.f32.partialorder %v6035, 1.0
        %vm6151 = vcmp.ge.f32.partialorder %v6038, 1.0
        %vm6152 = vcmp.ge.f32.partialorder %v6040, 1.0
        %vm6153 = vcmp.ge.f32.partialorder %v6043, 1.0
        %vm6154 = vcmp.ge.f32.partialorder %v6045, 1.0
        %vm6155 = vcmp.ge.f32.partialorder %v6048, 1.0
        %vm6156 = vcmp.ge.f32.partialorder %v6050, 1.0
        %vm6157 = vcmp.ge.f32.partialorder %v6053, 1.0
        %vm6158 = vcmp.ge.f32.partialorder %v6055, 1.0
        %vm6159 = vcmp.ge.f32.partialorder %v6058, 1.0
        %vm6160 = vcmp.ge.f32.partialorder %v6060, 1.0
        %vm6161 = vcmp.ge.f32.partialorder %v6063, 1.0
        %vm6162 = vcmp.ge.f32.partialorder %v6065, 1.0
        %vm6163 = vcmp.ge.f32.partialorder %v6068, 1.0
        %vm6164 = vcmp.ge.f32.partialorder %v6070, 1.0
        %vm6165 = vcmp.ge.f32.partialorder %v6073, 1.0
        %vm6166 = vcmp.ge.f32.partialorder %v6075, 1.0
        %vm6167 = vcmp.ge.f32.partialorder %v6078, 1.0
        %vm6168 = vcmp.ge.f32.partialorder %v6080, 1.0
        %vm6169 = vcmp.ge.f32.partialorder %v6083, 1.0
        %vm6170 = vcmp.ge.f32.partialorder %v6085, 1.0
        %vm6171 = vcmp.ge.f32.partialorder %v6088, 1.0
        %vm6172 = vcmp.ge.f32.partialorder %v6090, 1.0
        %vm6173 = vcmp.ge.f32.partialorder %v6093, 1.0
        %vm6174 = vcmp.ge.f32.partialorder %v6095, 1.0
        %vm6175 = vcmp.ge.f32.partialorder %v6098, 1.0
        %vm6176 = vcmp.ge.f32.partialorder %v6100, 1.0
        %vm6177 = vcmp.ge.f32.partialorder %v6103, 1.0
        %vm6178 = vcmp.ge.f32.partialorder %v6105, 1.0
        %vm6179 = vcmp.ge.f32.partialorder %v6108, 1.0
        %vm6180 = vcmp.ge.f32.partialorder %v6110, 1.0
        %vm6181 = vcmp.ge.f32.partialorder %v6113, 1.0
        %vm6182 = vcmp.ge.f32.partialorder %v6115, 1.0
        %vm6183 = vcmp.ge.f32.partialorder %v6118, 1.0
        %vm6184 = vcmp.ge.f32.partialorder %v6120, 1.0
        %vm6185 = vcmp.ge.f32.partialorder %v6123, 1.0
        %vm6186 = vcmp.ge.f32.partialorder %v6125, 1.0
        %vm6187 = vcmp.ge.f32.partialorder %v6128, 1.0
        %vm6188 = vcmp.ge.f32.partialorder %v6130, 1.0
        %vm6189 = vcmp.ge.f32.partialorder %v6133, 1.0
        %vm6190 = vcmp.ge.f32.partialorder %v6135, 1.0
        %vm6191 = vcmp.ge.f32.partialorder %v6138, 1.0
        %vm6192 = vcmp.ge.f32.partialorder %v6140, 1.0
        %vm6193 = vcmp.ge.f32.partialorder %v6143, 1.0
        %vm6194 = vcmp.ge.f32.partialorder %v6145, 1.0
        %v6195 = vsel %vm6147, 1, 0
        %v6196 = vsel %vm6148, 1, 0
        %v6197 = vsel %vm6149, 1, 0
        %v6198 = vsel %vm6150, 1, 0
        %v6199 = vsel %vm6151, 1, 0
        %v6200 = vsel %vm6152, 1, 0
        %v6201 = vsel %vm6153, 1, 0
        %v6202 = vsel %vm6154, 1, 0
        %v6203 = vsel %vm6155, 1, 0
        %v6204 = vsel %vm6156, 1, 0
        %v6205 = vsel %vm6157, 1, 0
        %v6206 = vsel %vm6158, 1, 0
        %v6207 = vsel %vm6159, 1, 0
        %v6208 = vsel %vm6160, 1, 0
        %v6209 = vsel %vm6161, 1, 0
        %v6210 = vsel %vm6162, 1, 0
        %v6211 = vsel %vm6163, 1, 0
        %v6212 = vsel %vm6164, 1, 0
        %v6213 = vsel %vm6165, 1, 0
        %v6214 = vsel %vm6166, 1, 0
        %v6215 = vsel %vm6167, 1, 0
        %v6216 = vsel %vm6168, 1, 0
        %v6217 = vsel %vm6169, 1, 0
        %v6218 = vsel %vm6170, 1, 0
        %v6219 = vsel %vm6171, 1, 0
        %v6220 = vsel %vm6172, 1, 0
        %v6221 = vsel %vm6173, 1, 0
        %v6222 = vsel %vm6174, 1, 0
        %v6223 = vsel %vm6175, 1, 0
        %v6224 = vsel %vm6176, 1, 0
        %v6225 = vsel %vm6177, 1, 0
        %v6226 = vsel %vm6178, 1, 0
        %v6227 = vsel %vm6179, 1, 0
        %v6228 = vsel %vm6180, 1, 0
        %v6229 = vsel %vm6181, 1, 0
        %v6230 = vsel %vm6182, 1, 0
        %v6231 = vsel %vm6183, 1, 0
        %v6232 = vsel %vm6184, 1, 0
        %v6233 = vsel %vm6185, 1, 0
        %v6234 = vsel %vm6186, 1, 0
        %v6235 = vsel %vm6187, 1, 0
        %v6236 = vsel %vm6188, 1, 0
        %v6237 = vsel %vm6189, 1, 0
        %v6238 = vsel %vm6190, 1, 0
        %v6239 = vsel %vm6191, 1, 0
        %v6240 = vsel %vm6192, 1, 0
        %v6241 = vsel %vm6193, 1, 0
        %v6242 = vsel %vm6194, 1, 0
        %v6243 = vcvt.s32.f32 %v6195
        %v6244 = vcvt.s32.f32 %v6196
        %v6245 = vcvt.s32.f32 %v6197
        %v6246 = vcvt.s32.f32 %v6198
        %v6247 = vcvt.s32.f32 %v6199
        %v6248 = vcvt.s32.f32 %v6200
        %v6249 = vcvt.s32.f32 %v6201
        %v6250 = vcvt.s32.f32 %v6202
        %v6251 = vcvt.s32.f32 %v6203
        %v6252 = vcvt.s32.f32 %v6204
        %v6253 = vcvt.s32.f32 %v6205
        %v6254 = vcvt.s32.f32 %v6206
        %v6255 = vcvt.s32.f32 %v6207
        %v6256 = vcvt.s32.f32 %v6208
        %v6257 = vcvt.s32.f32 %v6209
        %v6258 = vcvt.s32.f32 %v6210
        %v6259 = vcvt.s32.f32 %v6211
        %v6260 = vcvt.s32.f32 %v6212
        %v6261 = vcvt.s32.f32 %v6213
        %v6262 = vcvt.s32.f32 %v6214
        %v6263 = vcvt.s32.f32 %v6215
        %v6264 = vcvt.s32.f32 %v6216
        %v6265 = vcvt.s32.f32 %v6217
        %v6266 = vcvt.s32.f32 %v6218
        %v6267 = vcvt.s32.f32 %v6219
        %v6268 = vcvt.s32.f32 %v6220
        %v6269 = vcvt.s32.f32 %v6221
        %v6270 = vcvt.s32.f32 %v6222
        %v6271 = vcvt.s32.f32 %v6223
        %v6272 = vcvt.s32.f32 %v6224
        %v6273 = vcvt.s32.f32 %v6225
        %v6274 = vcvt.s32.f32 %v6226
        %v6275 = vcvt.s32.f32 %v6227
        %v6276 = vcvt.s32.f32 %v6228
        %v6277 = vcvt.s32.f32 %v6229
        %v6278 = vcvt.s32.f32 %v6230
        %v6279 = vcvt.s32.f32 %v6231
        %v6280 = vcvt.s32.f32 %v6232
        %v6281 = vcvt.s32.f32 %v6233
        %v6282 = vcvt.s32.f32 %v6234
        %v6283 = vcvt.s32.f32 %v6235
        %v6284 = vcvt.s32.f32 %v6236
        %v6285 = vcvt.s32.f32 %v6237
        %v6286 = vcvt.s32.f32 %v6238
        %v6287 = vcvt.s32.f32 %v6239
        %v6288 = vcvt.s32.f32 %v6240
        %v6289 = vcvt.s32.f32 %v6241
        %v6290 = vcvt.s32.f32 %v6242
        %v6291 = vadd.f32 %v5902, %v6243
        %v6292 = vadd.f32 %v5903, %v6244
        %v6293 = vadd.f32 %v5904, %v6245
        %v6294 = vadd.f32 %v5905, %v6246
        %v6295 = vadd.f32 %v5906, %v6247
        %v6296 = vadd.f32 %v5907, %v6248
        %v6297 = vadd.f32 %v5908, %v6249
        %v6298 = vadd.f32 %v5909, %v6250
        %v6299 = vadd.f32 %v5910, %v6251
        %v6300 = vadd.f32 %v5911, %v6252
        %v6301 = vadd.f32 %v5912, %v6253
        %v6302 = vadd.f32 %v5913, %v6254
        %v6303 = vadd.f32 %v5914, %v6255
        %v6304 = vadd.f32 %v5915, %v6256
        %v6305 = vadd.f32 %v5916, %v6257
        %v6306 = vadd.f32 %v5917, %v6258
        %v6307 = vadd.f32 %v5918, %v6259
        %v6308 = vadd.f32 %v5919, %v6260
        %v6309 = vadd.f32 %v5920, %v6261
        %v6310 = vadd.f32 %v5921, %v6262
        %v6311 = vadd.f32 %v5922, %v6263
        %v6312 = vadd.f32 %v5923, %v6264
        %v6313 = vadd.f32 %v5924, %v6265
        %v6314 = vadd.f32 %v5925, %v6266
        %v6315 = vadd.f32 %v5926, %v6267
        %v6316 = vadd.f32 %v5927, %v6268
        %v6317 = vadd.f32 %v5928, %v6269
        %v6318 = vadd.f32 %v5929, %v6270
        %v6319 = vadd.f32 %v5930, %v6271
        %v6320 = vadd.f32 %v5931, %v6272
        %v6321 = vadd.f32 %v5932, %v6273
        %v6322 = vadd.f32 %v5933, %v6274
        %v6323 = vadd.f32 %v5934, %v6275
        %v6324 = vadd.f32 %v5935, %v6276
        %v6325 = vadd.f32 %v5936, %v6277
        %v6326 = vadd.f32 %v5937, %v6278
        %v6327 = vadd.f32 %v5938, %v6279
        %v6328 = vadd.f32 %v5939, %v6280
        %v6329 = vadd.f32 %v5940, %v6281
        %v6330 = vadd.f32 %v5941, %v6282
        %v6331 = vadd.f32 %v5942, %v6283
        %v6332 = vadd.f32 %v5943, %v6284
        %v6333 = vadd.f32 %v5944, %v6285
        %v6334 = vadd.f32 %v5945, %v6286
        %v6335 = vadd.f32 %v5946, %v6287
        %v6336 = vadd.f32 %v5947, %v6288
        %v6337 = vadd.f32 %v5948, %v6289
        %v6338 = vadd.f32 %v5949, %v6290
        %6339 = vst [vmem:[%s418] sm:$0xff] %v6291
        %6340 = vst [vmem:[%s418 + $0x8] sm:$0xff] %v6292
        %6341 = vst [vmem:[%s418 + $0x10] sm:$0xff] %v6293
        %6342 = vst [vmem:[%s418 + $0x18] sm:$0xff] %v6294
        %6343 = vst [vmem:[%s418 + $0x20] sm:$0xff] %v6295
        %6344 = vst [vmem:[%s418 + $0x28] sm:$0xff] %v6296
        %6345 = vst [vmem:[%s418 + $0x30] sm:$0xff] %v6297
        %6346 = vst [vmem:[%s418 + $0x38] sm:$0xff] %v6298
        %6347 = vst [vmem:[%s418 + $0x40] sm:$0xff] %v6299
        %6348 = vst [vmem:[%s418 + $0x48] sm:$0xff] %v6300
        %6349 = vst [vmem:[%s418 + $0x50] sm:$0xff] %v6301
        %6350 = vst [vmem:[%s418 + $0x58] sm:$0xff] %v6302
        %6351 = vst [vmem:[%s418 + $0x60] sm:$0xff] %v6303
        %6352 = vst [vmem:[%s418 + $0x68] sm:$0xff] %v6304
        %6353 = vst [vmem:[%s418 + $0x70] sm:$0xff] %v6305
        %6354 = vst [vmem:[%s418 + $0x78] sm:$0xff] %v6306
        %6355 = vst [vmem:[%s418 + $0x80] sm:$0xff] %v6307
        %6356 = vst [vmem:[%s418 + $0x88] sm:$0xff] %v6308
        %6357 = vst [vmem:[%s418 + $0x90] sm:$0xff] %v6309
        %6358 = vst [vmem:[%s418 + $0x98] sm:$0xff] %v6310
        %6359 = vst [vmem:[%s418 + $0xa0] sm:$0xff] %v6311
        %6360 = vst [vmem:[%s418 + $0xa8] sm:$0xff] %v6312
        %6361 = vst [vmem:[%s418 + $0xb0] sm:$0xff] %v6313
        %6362 = vst [vmem:[%s418 + $0xb8] sm:$0xff] %v6314
        %6363 = vst [vmem:[%s418 + $0xc0] sm:$0xff] %v6315
        %6364 = vst [vmem:[%s418 + $0xc8] sm:$0xff] %v6316
        %6365 = vst [vmem:[%s418 + $0xd0] sm:$0xff] %v6317
        %6366 = vst [vmem:[%s418 + $0xd8] sm:$0xff] %v6318
        %6367 = vst [vmem:[%s418 + $0xe0] sm:$0xff] %v6319
        %6368 = vst [vmem:[%s418 + $0xe8] sm:$0xff] %v6320
        %6369 = vst [vmem:[%s418 + $0xf0] sm:$0xff] %v6321
        %6370 = vst [vmem:[%s418 + $0xf8] sm:$0xff] %v6322
        %6371 = vst [vmem:[%s418 + $0x100] sm:$0xff] %v6323
        %6372 = vst [vmem:[%s418 + $0x108] sm:$0xff] %v6324
        %6373 = vst [vmem:[%s418 + $0x110] sm:$0xff] %v6325
        %6374 = vst [vmem:[%s418 + $0x118] sm:$0xff] %v6326
        %6375 = vst [vmem:[%s418 + $0x120] sm:$0xff] %v6327
        %6376 = vst [vmem:[%s418 + $0x128] sm:$0xff] %v6328
        %6377 = vst [vmem:[%s418 + $0x130] sm:$0xff] %v6329
        %6378 = vst [vmem:[%s418 + $0x138] sm:$0xff] %v6330
        %6379 = vst [vmem:[%s418 + $0x140] sm:$0xff] %v6331
        %6380 = vst [vmem:[%s418 + $0x148] sm:$0xff] %v6332
        %6381 = vst [vmem:[%s418 + $0x150] sm:$0xff] %v6333
        %6382 = vst [vmem:[%s418 + $0x158] sm:$0xff] %v6334
        %6383 = vst [vmem:[%s418 + $0x160] sm:$0xff] %v6335
        %6384 = vst [vmem:[%s418 + $0x168] sm:$0xff] %v6336
        %6385 = vst [vmem:[%s418 + $0x170] sm:$0xff] %v6337
        %6386 = vst [vmem:[%s418 + $0x178] sm:$0xff] %v6338
        %s6387 = sand.u32 %s230, 1
        %s6388 = scalar_lea.sflag [#allocation4], %s6387
        %s6389 = sand.u32 %s230, 1
        %s6390 = smul.addr %s6389, 384
        %s6391 = scalar_lea.vmem [#allocation11], %s6390
        // Predicated region
        $region77: #{tpu_custom_call.1} parent=55 // pred_check
          %p6392 = pneg %p240
        $region78: #{tpu_custom_call.1} parent=55 // pred_check_branch
          %6394 = sbr.rel (%p6392) target = $region80
        $region79: #{tpu_custom_call.1} parent=55 // pred_region
          %6396 = vsyncadd %s6388, 0
          %s6397 = smul.addr %s28, 48
          %s6398 = smul.addr %s6397, 8
          %s6399 = scalar_lea.hbm %s9, %s6398
          %s6400 = sshll.u32 %s6391, 4
          %s6401 = int_to_ptr.vmem [resolvable:$true] %s6400
          %s6402 = sshll.u32 %s6399, 4
          %s6403 = int_to_ptr.hbm [resolvable:$true] %s6402
          %6408 = dma.vmem_to_hbm [thread:$0]  %s6401, 6144, %s6403, %s6388, 128, 128, 8
        $region80: #{tpu_custom_call.1} parent=55 // pred_fallthru
          _
      $region56: #{tpu_custom_call.1} parent=5 // pred_fallthru
        _
      %p6409 = scmp.le.s32.totalorder 2, %s23
      // Predicated region
      $region81: #{tpu_custom_call.1} parent=5 // pred_check
        %p6410 = pneg %p6409
      $region82: #{tpu_custom_call.1} parent=5 // pred_check_branch
        %6412 = sbr.rel (%p6410) target = $region84
      $region83: #{tpu_custom_call.1} parent=5 // pred_region
        %s6413 = ssub.s32 %s23, 2
        // Predicated region
        $region85: #{tpu_custom_call.1} parent=83 // pred_check
          %p6414 = pneg %p246
        $region86: #{tpu_custom_call.1} parent=83 // pred_check_branch
          %6416 = sbr.rel (%p6414) target = $region88
        $region87: #{tpu_custom_call.1} parent=83 // pred_region
          %s6417 = sand.u32 %s231, 1
          %s6418 = scalar_lea.sflag [#allocation4], %s6417
          %s6419 = sand.u32 %s231, 1
          %s6420 = smul.addr %s6419, 384
          %s6421 = scalar_lea.vmem [#allocation11], %s6420
          %6423 = dma.done %s6418, 6144
        $region88: #{tpu_custom_call.1} parent=83 // pred_fallthru
          _
      $region84: #{tpu_custom_call.1} parent=5 // pred_fallthru
        _
    $region6: #{tpu_custom_call.1} parent=1 // loop_footer
      %s27 = sadd.s32 1, %s23
    $region7: #{tpu_custom_call.1} parent=1 // loop_footer_branch
      %22 = sbr.rel target = $region3
    $region8: #{tpu_custom_call.1} parent=1 // loop_exit
      _
    %6424 = vsyncpa [#allocation3], 1
    %s6425 = scalar_lea.sflag [#allocation3], 1
    %6426 = vsyncpa %s6425, 1
    %6427 = vsyncpa [#allocation6], 1
    %6428 = vsyncpa [#allocation9], 1
    %6429 = vsyncpa [#allocation4], 1
    %s6430 = scalar_lea.sflag [#allocation4], 1
    %6431 = vsyncpa %s6430, 1

</llo_original>
